<compile_context>
chip_gen: v5e
topology: v5e:2x2
jax: 0.10.0
libtpu: 0.0.40
codegen_flags: <defaults>
</compile_context>

<pallas_src>
import functools

import jax
import jax.numpy as jnp
from jax.experimental import pallas as pl
from jax.experimental.pallas import tpu as pltpu


# ------------------------------- kernels -----------------------------------


def _feature_transform_kernel(dinv_ref, x_ref, w_ref, z_ref):
    """z = dinv * (x @ w) -- source-side half of Ahat @ (x @ w).

    Only used for large graphs; small graphs fuse this into the first layer.
    """
    xw = jnp.dot(x_ref[...], w_ref[...], preferred_element_type=jnp.float32)
    z_ref[...] = (dinv_ref[...] * xw).astype(z_ref.dtype)


def _gcn_layer_kernel(*refs, tk, hid_p, fuse_xform, has_s_in, has_znext,
                      z_resident):
    """One GCN layer whose output is consumed in place.

    Accumulates acc = A[i, :] @ Z over the src ("arbitrary") grid axis; on the
    last src tile finalizes
        h     = relu(dinv * acc + b)             (layer output, f32, VMEM-only)
        znext = dinv * (h @ Wnext)               (input slab of the next layer)
        s_out = s_in + h @ Wm                    (JK 'cat' + mlp, reassociated)
    with Wnext|Wm fused into a single resident weight so the epilogue is one
    MXU dot. h never leaves VMEM.
    """
    it = iter(refs)
    a_ref = next(it)
    src_ref = next(it)
    if fuse_xform:
        w1_ref = next(it)
        dinv_src_ref = next(it)
    dinv_dst_ref = next(it)
    b_ref = next(it)
    wcat_ref = next(it)
    s_in_ref = next(it) if has_s_in else None
    znext_ref = next(it) if has_znext else None
    s_out_ref = next(it)
    acc_ref = next(it)

    compute_dtype = wcat_ref.dtype
    k = pl.program_id(1)

    @pl.when(k == 0)
    def _():
        acc_ref[...] = jnp.zeros_like(acc_ref)

    # A is shipped as int8 on the bf16 path (0/1 exact); cast on the VPU so the
    # dominant HBM stream is half-width.  Two-step cast via f32 for safe
    # lowering; it is a no-op on the f32 verification path.
    a = a_ref[...].astype(jnp.float32).astype(compute_dtype)

    if fuse_xform:
        # z_k = dinv_src * (X_k @ W1), recomputed per row tile.  Only used when
        # n_row is small, where the recompute is cheaper than an extra kernel
        # launch plus a z1 HBM round trip.
        xw = jnp.dot(src_ref[...], w1_ref[...],
                     preferred_element_type=jnp.float32)
        zk = (dinv_src_ref[...] * xw).astype(compute_dtype)
    elif z_resident:
        # Whole Z slab resident in VMEM (constant index_map): slice the src
        # tile in-kernel instead of re-DMAing it per row tile.
        off = pl.multiple_of(k * tk, tk)
        zk = src_ref[pl.ds(off, tk), :]
    else:
        zk = src_ref[...]

    acc_ref[...] += jnp.dot(a, zk, preferred_element_type=jnp.float32)

    @pl.when(k == pl.num_programs(1) - 1)
    def _():
        dinv = dinv_dst_ref[...]                                  # [TM, 1] f32
        # NOTE: padded dst rows (>= N) get h = relu(b) != 0 here. That is
        # harmless because (a) dinv == 0 zeroes their z_next contribution and
        # (b) A's padded *columns* are zero, so they never reach out[:N].
        # Do not remove either of these guards.
        h = jnp.maximum(acc_ref[...] * dinv + b_ref[...], 0.0)
        res = jnp.dot(h.astype(compute_dtype), wcat_ref[...],
                      preferred_element_type=jnp.float32)
        if has_znext:
            # Fused epilogue weight: lanes [0:HID_P) = W_next, lanes
            # [HID_P:) = Wm.  The split is at a 128-lane tile boundary.
            znext_ref[...] = (dinv * res[:, :hid_p]).astype(znext_ref.dtype)
            contrib = res[:, hid_p:]
        else:
            contrib = res                      # last layer: Wm only, no W_next
        if has_s_in:
            s_out_ref[...] = (s_in_ref[...].astype(jnp.float32)
                              + contrib).astype(s_out_ref.dtype)
        else:
            s_out_ref[...] = contrib.astype(s_out_ref.dtype)


def _final_agg_kernel(a_ref, s_ref, bm_ref, out_ref, acc_ref, *, tk,
                      s_resident):
    """out = A @ s + bmlp  (single reassociated JK-tail aggregation)."""
    k = pl.program_id(1)

    @pl.when(k == 0)
    def _():
        acc_ref[...] = jnp.zeros_like(acc_ref)

    if s_resident:
        off = pl.multiple_of(k * tk, tk)
        sk = s_ref[pl.ds(off, tk), :]
    else:
        sk = s_ref[...]
    a = a_ref[...].astype(jnp.float32).astype(sk.dtype)
    acc_ref[...] += jnp.dot(a, sk, preferred_element_type=jnp.float32)

    @pl.when(k == pl.num_programs(1) - 1)
    def _():
        out_ref[...] = acc_ref[...] + bm_ref[...]


# ------------------------------- wrapper ------------------------------------


def _round_up(x, m):
    return ((x + m - 1) // m) * m


def _pad2(x, rows, cols, dtype=None):
    x = jnp.pad(x, ((0, rows - x.shape[0]), (0, cols - x.shape[1])))
    return x if dtype is None else x.astype(dtype)


def _vmem_limit_bytes():
    """Generation-aware scoped-VMEM request.

    v5e/v6e have 128 MiB physical VMEM -> 96 MiB budget; v7x has 64 MiB ->
    48 MiB; default conservatively for unknown chips.
    """
    try:
        kind = jax.devices()[0].device_kind.lower()
    except Exception:
        kind = ""
    if "v7" in kind:
        return 48 * 1024 * 1024
    if "v5" in kind or "v6" in kind:
        return 96 * 1024 * 1024
    return 48 * 1024 * 1024


def jknet_forward(A, X, params, out_feats, *, mxu_dtype=jnp.bfloat16,
                  a_dtype=None):
    """JKNet forward. A: [N,N] dense 0/1 adjacency (dst x src), X: [N,F].

    a_dtype: storage dtype of the adjacency stream.  Defaults to int8 on the
    bf16 path (0/1 values are exact; A is streamed 4x and dominates HBM
    traffic) and to mxu_dtype otherwise.  Pass an explicit float dtype if A
    carries non-binary edge weights.
    """
    N, in_feats = X.shape
    W1, b1, W2, b2, W3, b3, Wmlp, bmlp = params
    hid = W1.shape[1]
    if a_dtype is None:
        a_dtype = jnp.int8 if mxu_dtype == jnp.bfloat16 else mxu_dtype

    # GCN symmetric normalization vector (norm='both'); zero-degree -> 0.
    deg = jnp.sum(A.astype(jnp.float32), axis=1)
    dinv = jnp.where(deg > 0, jax.lax.rsqrt(deg), 0.0).astype(jnp.float32)

    # ---- tiling: bigger tiles amortize the ~0.35us/step overhead, but keep
    # n_row >= 2 so the "parallel" row axis shards across v7x's two cores. ----
    if N <= 128:
        TM = _round_up(N, 32)        # 32-row sublane tile keeps int8 A legal
        Np = TM
    else:
        if N >= 1024:
            TM = 512
        elif N >= 512:
            TM = 256
        else:
            TM = 128
        Np = _round_up(N, TM)
    TK = TM
    for cand in (512, 256):          # widen the src ("arbitrary") axis freely
        if cand > TK and Np % cand == 0:
            TK = cand
            break
    n_row = Np // TM
    n_col = Np // TK

    HID_P = _round_up(hid, 128)          # lane-dense hidden width
    OUT_P = _round_up(out_feats, 128)    # lane-dense output width
    a_isz = jnp.dtype(a_dtype).itemsize
    isz = jnp.dtype(mxu_dtype).itemsize

    vmem_limit = _vmem_limit_bytes()
    resident_budget = vmem_limit // 3
    # Make Z / s resident (constant index_map, one DMA per layer) when the
    # whole slab (double-buffered) fits the VMEM budget.
    z_resident = 2 * Np * HID_P * isz <= resident_budget
    s_resident = 2 * Np * OUT_P * isz <= resident_budget
    # Fuse X @ W1 into layer 1 when the graph is launch/step-overhead bound;
    # keep the separate transform kernel for large N (avoids n_row x recompute).
    fuse_xform = n_row <= 4

    # ---- padded, lane-dense operands ----------------------------------------
    A_p = _pad2(A, Np, Np).astype(a_dtype)
    X_p = _pad2(X, Np, in_feats).astype(mxu_dtype)
    dinv_p = jnp.pad(dinv, (0, Np - N)).reshape(Np, 1)

    W1_p = _pad2(W1, in_feats, HID_P).astype(mxu_dtype)
    b1_p = _pad2(b1, 1, HID_P)
    b2_p = _pad2(b2, 1, HID_P)
    b3_p = _pad2(b3, 1, HID_P)
    # Split the final Linear per JK branch:
    #   (A @ [h1|h2|h3]) @ Wmlp == A @ (h1@Wm1 + h2@Wm2 + h3@Wm3)
    Wm1, Wm2, Wm3 = Wmlp[:hid], Wmlp[hid:2 * hid], Wmlp[2 * hid:]

    def cat_w(wnext, wm):
        # One epilogue weight [HID_P, HID_P+OUT_P]: lanes [0:HID_P) -> W_next,
        # lanes [HID_P:) -> Wm, so the finalize issues a single MXU dot.
        w = jnp.zeros((HID_P, HID_P + OUT_P), jnp.float32)
        w = w.at[:wnext.shape[0], :wnext.shape[1]].set(wnext)
        w = w.at[:wm.shape[0], HID_P:HID_P + wm.shape[1]].set(wm)
        return w.astype(mxu_dtype)

    Wcat1 = cat_w(W2, Wm1)
    Wcat2 = cat_w(W3, Wm2)
    Wlast = _pad2(Wm3, HID_P, OUT_P).astype(mxu_dtype)  # layer 3: no dead Wnext
    bm_p = _pad2(bmlp, 1, OUT_P)

    cparams = pltpu.CompilerParams(
        dimension_semantics=("parallel", "arbitrary"),
        vmem_limit_bytes=vmem_limit)

    # ---- (large N only) z1 = dinv * (X @ W1) --------------------------------
    if not fuse_xform:
        z1 = pl.pallas_call(
            _feature_transform_kernel,
            grid=(n_row,),
            in_specs=[pl.BlockSpec((TM, 1), lambda i: (i, 0)),
                      pl.BlockSpec((TM, in_feats), lambda i: (i, 0)),
                      pl.BlockSpec((in_feats, HID_P), lambda i: (0, 0))],
            out_specs=pl.BlockSpec((TM, HID_P), lambda i: (i, 0)),
            out_shape=jax.ShapeDtypeStruct((Np, HID_P), mxu_dtype),
            compiler_params=pltpu.CompilerParams(
                dimension_semantics=("parallel",),
                vmem_limit_bytes=vmem_limit),
            cost_estimate=pl.CostEstimate(
                flops=2 * Np * in_feats * HID_P, transcendentals=0,
                bytes_accessed=Np * in_feats * isz + Np * HID_P * isz),
        )(dinv_p, X_p, W1_p)

    # ---- GCN layers: tiled A aggregation + fused epilogue --------------------
    def gcn_layer(src, wcat, b_p, s_in, *, fuse, has_znext):
        has_s_in = s_in is not None
        z_res = (not fuse) and z_resident
        kern = functools.partial(
            _gcn_layer_kernel, tk=TK, hid_p=HID_P, fuse_xform=fuse,
            has_s_in=has_s_in, has_znext=has_znext, z_resident=z_res)

        in_specs = [pl.BlockSpec((TM, TK), lambda i, k: (i, k))]        # A
        inputs = [A_p]
        if fuse:
            in_specs += [pl.BlockSpec((TK, in_feats), lambda i, k: (k, 0)),
                         pl.BlockSpec((in_feats, HID_P), lambda i, k: (0, 0)),
                         pl.BlockSpec((TK, 1), lambda i, k: (k, 0))]
            inputs += [src, W1_p, dinv_p]
        elif z_res:
            in_specs += [pl.BlockSpec((Np, HID_P), lambda i, k: (0, 0))]
            inputs += [src]
        else:
            in_specs += [pl.BlockSpec((TK, HID_P), lambda i, k: (k, 0))]
            inputs += [src]
        in_specs += [pl.BlockSpec((TM, 1), lambda i, k: (i, 0)),        # dinv
                     pl.BlockSpec((1, HID_P), lambda i, k: (0, 0)),     # bias
                     pl.BlockSpec(wcat.shape, lambda i, k: (0, 0))]     # Wcat
        inputs += [dinv_p, b_p, wcat]
        if has_s_in:
            in_specs += [pl.BlockSpec((TM, OUT_P), lambda i, k: (i, 0))]
            inputs += [s_in]

        out_specs, out_shapes = [], []
        if has_znext:
            out_specs.append(pl.BlockSpec((TM, HID_P), lambda i, k: (i, 0)))
            out_shapes.append(jax.ShapeDtypeStruct((Np, HID_P), mxu_dtype))
        out_specs.append(pl.BlockSpec((TM, OUT_P), lambda i, k: (i, 0)))
        out_shapes.append(jax.ShapeDtypeStruct((Np, OUT_P), mxu_dtype))

        # Accumulate s in place: avoids fresh Np x OUT_P allocations and the
        # zero-init read (layer 1 simply has no s_in at all).
        io_alias = ({len(inputs) - 1: len(out_shapes) - 1} if has_s_in else {})

        flops = 2 * Np * Np * HID_P + 2 * Np * HID_P * wcat.shape[1]
        if fuse:
            flops += 2 * n_row * Np * in_feats * HID_P
            z_bytes = n_row * Np * in_feats * isz
        else:
            z_bytes = Np * HID_P * isz * (1 if z_res else n_row)
        layer_bytes = (Np * Np * a_isz + z_bytes
                       + (Np * HID_P * isz if has_znext else 0)
                       + (2 if has_s_in else 1) * Np * OUT_P * isz)

        res = pl.pallas_call(
            kern,
            grid=(n_row, n_col),
            in_specs=in_specs,
            out_specs=out_specs,
            out_shape=out_shapes,
            scratch_shapes=[pltpu.VMEM((TM, HID_P), jnp.float32)],
            input_output_aliases=io_alias,
            compiler_params=cparams,
            cost_estimate=pl.CostEstimate(
                flops=flops, transcendentals=0, bytes_accessed=layer_bytes),
        )(*inputs)
        if has_znext:
            return res[0], res[1]
        return None, res[0]

    if fuse_xform:
        z2, s = gcn_layer(X_p, Wcat1, b1_p, None, fuse=True, has_znext=True)
    else:
        z2, s = gcn_layer(z1, Wcat1, b1_p, None, fuse=False, has_znext=True)
    z3, s = gcn_layer(z2, Wcat2, b2_p, s, fuse=False, has_znext=True)
    _, s = gcn_layer(z3, Wlast, b3_p, s, fuse=False, has_znext=False)

    # ---- out = A @ s + bmlp  (single reassociated JK-tail aggregation) ------
    out = pl.pallas_call(
        functools.partial(_final_agg_kernel, tk=TK, s_resident=s_resident),
        grid=(n_row, n_col),
        in_specs=[
            pl.BlockSpec((TM, TK), lambda i, k: (i, k)),
            (pl.BlockSpec((Np, OUT_P), lambda i, k: (0, 0)) if s_resident
             else pl.BlockSpec((TK, OUT_P), lambda i, k: (k, 0))),
            pl.BlockSpec((1, OUT_P), lambda i, k: (0, 0)),
        ],
        out_specs=pl.BlockSpec((TM, OUT_P), lambda i, k: (i, 0)),
        out_shape=jax.ShapeDtypeStruct((Np, OUT_P), jnp.float32),
        scratch_shapes=[pltpu.VMEM((TM, OUT_P), jnp.float32)],
        compiler_params=cparams,
        cost_estimate=pl.CostEstimate(
            flops=2 * Np * Np * OUT_P, transcendentals=0,
            bytes_accessed=(Np * Np * a_isz
                            + Np * OUT_P * isz * (1 if s_resident else n_row)
                            + Np * OUT_P * 4)),
    )(A_p, s, bm_p)

    return out[:N, :out_feats]


# ------------------------------- reference ----------------------------------


def jknet_reference(A, X, params):
    """Pure-JAX f32 reference (matches the PyTorch module's forward)."""
    W1, b1, W2, b2, W3, b3, Wmlp, bmlp = params
    deg = jnp.sum(A, axis=1)
    dinv = jnp.where(deg > 0, jax.lax.rsqrt(deg), 0.0)
    Ahat = A * dinv[:, None] * dinv[None, :]

    h = X
    feats = []
    for W, b in ((W1, b1), (W2, b2), (W3, b3)):
        h = jnp.maximum(Ahat @ (h @ W) + b, 0.0)
        feats.append(h)
    H = jnp.concatenate(feats, axis=-1)
    return (A @ H) @ Wmlp + bmlp


def init_params(key, in_feats, hid, out_feats):
    """Deterministic glorot-style init (synthetic, not a checkpoint)."""
    ks = jax.random.split(key, 8)

    def glorot(k, fan_in, fan_out):
        scale = jnp.sqrt(6.0 / (fan_in + fan_out))
        return jax.random.uniform(k, (fan_in, fan_out), jnp.float32, -scale, scale)

    W1 = glorot(ks[0], in_feats, hid)
    W2 = glorot(ks[1], hid, hid)
    W3 = glorot(ks[2], hid, hid)
    Wmlp = glorot(ks[3], 3 * hid, out_feats)
    b1 = jax.random.uniform(ks[4], (1, hid), jnp.float32, -0.1, 0.1)
    b2 = jax.random.uniform(ks[5], (1, hid), jnp.float32, -0.1, 0.1)
    b3 = jax.random.uniform(ks[6], (1, hid), jnp.float32, -0.1, 0.1)
    bmlp = jax.random.uniform(ks[7], (1, out_feats), jnp.float32, -0.1, 0.1)
    return (W1, b1, W2, b2, W3, b3, Wmlp, bmlp)


if __name__ == "__main__":
    N = 256          # number of graph nodes
    in_feats = 32
    hid = 16         # hids=[16]*3, acts=['relu']*3
    out_feats = 8

    key = jax.random.PRNGKey(0)
    k_adj, k_x, k_w = jax.random.split(key, 3)

    # Deterministic random undirected graph (dense adjacency, no self loops).
    A = jax.random.bernoulli(k_adj, p=0.05, shape=(N, N)).astype(jnp.float32)
    A = jnp.maximum(A, A.T)
    A = A * (1.0 - jnp.eye(N, dtype=jnp.float32))

    X = jax.random.normal(k_x, (N, in_feats), jnp.float32)
    params = init_params(k_w, in_feats, hid, out_feats)

    ref = jknet_reference(A, X, params)

    # Exact-semantics check: f32 MXU path (f32 adjacency) must match tightly.
    fwd_f32 = jax.jit(functools.partial(
        jknet_forward, out_feats=out_feats, mxu_dtype=jnp.float32))
    out_f32 = jax.block_until_ready(fwd_f32(A, X, params))
    assert out_f32.shape == (N, out_feats)
    assert jnp.allclose(out_f32, ref, atol=1e-3, rtol=1e-3)

    # Performance path: int8 adjacency stream + bf16 MXU operands, f32 accum.
    fwd_bf16 = jax.jit(functools.partial(
        jknet_forward, out_feats=out_feats, mxu_dtype=jnp.bfloat16))
    out_bf16 = jax.block_until_ready(fwd_bf16(A, X, params))
    assert out_bf16.shape == (N, out_feats)
    scale = jnp.maximum(jnp.max(jnp.abs(ref)), 1.0)
    assert jnp.max(jnp.abs(out_bf16 - ref)) <= 0.1 * scale

    print("KERNEL_OK")
</pallas_src>

<mosaic_0001>
module attributes {stable_mosaic.version = 11 : i64} {
  func.func @_gcn_layer_kernel(%arg0: i32, %arg1: i32, %arg2: memref<128x256xf32, #tpu.memory_space<vmem>>, %arg3: memref<256x32xf32, #tpu.memory_space<vmem>>, %arg4: memref<32x128xf32, #tpu.memory_space<vmem>>, %arg5: memref<256x1xf32, #tpu.memory_space<vmem>>, %arg6: memref<128x1xf32, #tpu.memory_space<vmem>>, %arg7: memref<1x128xf32, #tpu.memory_space<vmem>>, %arg8: memref<128x256xf32, #tpu.memory_space<vmem>>, %arg9: memref<128x128xf32, #tpu.memory_space<vmem>>, %arg10: memref<128x128xf32, #tpu.memory_space<vmem>>, %arg11: memref<128x128xf32, #tpu.memory_space<vmem>>) attributes {dimension_semantics = [#tpu.dimension_semantics<parallel>, #tpu.dimension_semantics<arbitrary>], iteration_bounds = array<i64: 2, 1>, scalar_prefetch = 0 : i64, scratch_operands = 1 : i64, tpu.core_type = #tpu.core_type<tc>, window_params = [{transform_indices = @transform_0, window_bounds = array<i64: 128, 256>}, {transform_indices = @transform_1, window_bounds = array<i64: 256, 32>}, {pipeline_mode = #tpu.pipeline_mode<synchronous>, transform_indices = @transform_2, window_bounds = array<i64: 32, 128>}, {transform_indices = @transform_3, window_bounds = array<i64: 256, 1>}, {transform_indices = @transform_4, window_bounds = array<i64: 128, 1>}, {pipeline_mode = #tpu.pipeline_mode<synchronous>, transform_indices = @transform_5, window_bounds = array<i64: 1, 128>}, {pipeline_mode = #tpu.pipeline_mode<synchronous>, transform_indices = @transform_6, window_bounds = array<i64: 128, 256>}, {transform_indices = @transform_7, window_bounds = array<i64: 128, 128>}, {transform_indices = @transform_8, window_bounds = array<i64: 128, 128>}]} {
    %c0_i32 = arith.constant 0 : i32
    %0 = arith.cmpi eq, %arg1, %c0_i32 : i32
    %1 = arith.extui %0 : i1 to i32
    %c0_i32_0 = arith.constant 0 : i32
    %2 = arith.cmpi ne, %1, %c0_i32_0 : i32
    scf.if %2 {
      %cst_15 = arith.constant 0.000000e+00 : f32
      %17 = vector.broadcast %cst_15 : f32 to vector<128x128xf32>
      %c0_16 = arith.constant 0 : index
      %c0_17 = arith.constant 0 : index
      %18 = vector.load %arg11[%c0_16, %c0_17] : memref<128x128xf32, #tpu.memory_space<vmem>>, vector<128x128xf32>
      tpu.vector_store %arg11[%c0_16, %c0_17], %17 {strides = array<i32>} : memref<128x128xf32, #tpu.memory_space<vmem>>, vector<128x128xf32>,
    } else {
    }
    %c0 = arith.constant 0 : index
    %c0_1 = arith.constant 0 : index
    %3 = vector.load %arg2[%c0, %c0_1] : memref<128x256xf32, #tpu.memory_space<vmem>>, vector<128x256xf32>
    %c0_2 = arith.constant 0 : index
    %c0_3 = arith.constant 0 : index
    %4 = vector.load %arg3[%c0_2, %c0_3] : memref<256x32xf32, #tpu.memory_space<vmem>>, vector<256x32xf32>
    %c0_4 = arith.constant 0 : index
    %c0_5 = arith.constant 0 : index
    %5 = vector.load %arg4[%c0_4, %c0_5] : memref<32x128xf32, #tpu.memory_space<vmem>>, vector<32x128xf32>
    %cst = arith.constant dense<0.000000e+00> : vector<256x128xf32>
    %6 = tpu.matmul %4, %5, %cst {dimension_numbers = #tpu.dot_dimension_numbers<[1], [0], [0], [1], [0, 0, 1, 1], [], []>} : vector<256x32xf32>, vector<32x128xf32>, vector<256x128xf32> -> vector<256x128xf32>
    %c0_6 = arith.constant 0 : index
    %c0_7 = arith.constant 0 : index
    %7 = vector.load %arg5[%c0_6, %c0_7] : memref<256x1xf32, #tpu.memory_space<vmem>>, vector<256x1xf32>
    %8 = vector.broadcast %7 : vector<256x1xf32> to vector<256x128xf32>
    %9 = arith.mulf %8, %6 : vector<256x128xf32>
    %c0_8 = arith.constant 0 : index
    %c0_9 = arith.constant 0 : index
    %10 = vector.load %arg11[%c0_8, %c0_9] : memref<128x128xf32, #tpu.memory_space<vmem>>, vector<128x128xf32>
    %cst_10 = arith.constant dense<0.000000e+00> : vector<128x128xf32>
    %11 = tpu.matmul %3, %9, %cst_10 {dimension_numbers = #tpu.dot_dimension_numbers<[1], [0], [0], [1], [0, 0, 1, 1], [], []>} : vector<128x256xf32>, vector<256x128xf32>, vector<128x128xf32> -> vector<128x128xf32>
    %12 = arith.addf %10, %11 : vector<128x128xf32>
    %c0_11 = arith.constant 0 : index
    %c0_12 = arith.constant 0 : index
    %13 = vector.load %arg11[%c0_11, %c0_12] : memref<128x128xf32, #tpu.memory_space<vmem>>, vector<128x128xf32>
    tpu.vector_store %arg11[%c0_11, %c0_12], %12 {strides = array<i32>} : memref<128x128xf32, #tpu.memory_space<vmem>>, vector<128x128xf32>,
    %c0_i32_13 = arith.constant 0 : i32
    %14 = arith.cmpi eq, %arg1, %c0_i32_13 : i32
    %15 = arith.extui %14 : i1 to i32
    %c0_i32_14 = arith.constant 0 : i32
    %16 = arith.cmpi ne, %15, %c0_i32_14 : i32
    scf.if %16 {
      %c0_15 = arith.constant 0 : index
      %c0_16 = arith.constant 0 : index
      %17 = vector.load %arg6[%c0_15, %c0_16] : memref<128x1xf32, #tpu.memory_space<vmem>>, vector<128x1xf32>
      %c0_17 = arith.constant 0 : index
      %c0_18 = arith.constant 0 : index
      %18 = vector.load %arg11[%c0_17, %c0_18] : memref<128x128xf32, #tpu.memory_space<vmem>>, vector<128x128xf32>
      %19 = vector.broadcast %17 : vector<128x1xf32> to vector<128x128xf32>
      %20 = arith.mulf %18, %19 : vector<128x128xf32>
      %c0_19 = arith.constant 0 : index
      %c0_20 = arith.constant 0 : index
      %21 = vector.load %arg7[%c0_19, %c0_20] : memref<1x128xf32, #tpu.memory_space<vmem>>, vector<1x128xf32>
      %22 = vector.broadcast %21 : vector<1x128xf32> to vector<128x128xf32>
      %23 = arith.addf %20, %22 : vector<128x128xf32>
      %cst_21 = arith.constant 0.000000e+00 : f32
      %24 = vector.broadcast %cst_21 : f32 to vector<128x128xf32>
      %25 = arith.maximumf %23, %24 : vector<128x128xf32>
      %c0_22 = arith.constant 0 : index
      %c0_23 = arith.constant 0 : index
      %26 = vector.load %arg8[%c0_22, %c0_23] : memref<128x256xf32, #tpu.memory_space<vmem>>, vector<128x256xf32>
      %cst_24 = arith.constant dense<0.000000e+00> : vector<128x256xf32>
      %27 = tpu.matmul %25, %26, %cst_24 {dimension_numbers = #tpu.dot_dimension_numbers<[1], [0], [0], [1], [0, 0, 1, 1], [], []>} : vector<128x128xf32>, vector<128x256xf32>, vector<128x256xf32> -> vector<128x256xf32>
      %28 = vector.extract_strided_slice %27 {offsets = [0, 0], sizes = [128, 128], strides = [1, 1]} : vector<128x256xf32> to vector<128x128xf32>
      %29 = vector.broadcast %17 : vector<128x1xf32> to vector<128x128xf32>
      %30 = arith.mulf %29, %28 : vector<128x128xf32>
      %c0_25 = arith.constant 0 : index
      %c0_26 = arith.constant 0 : index
      %31 = vector.load %arg9[%c0_25, %c0_26] : memref<128x128xf32, #tpu.memory_space<vmem>>, vector<128x128xf32>
      tpu.vector_store %arg9[%c0_25, %c0_26], %30 {strides = array<i32>} : memref<128x128xf32, #tpu.memory_space<vmem>>, vector<128x128xf32>,
      %32 = vector.extract_strided_slice %27 {offsets = [0, 128], sizes = [128, 128], strides = [1, 1]} : vector<128x256xf32> to vector<128x128xf32>
      %c0_27 = arith.constant 0 : index
      %c0_28 = arith.constant 0 : index
      %33 = vector.load %arg10[%c0_27, %c0_28] : memref<128x128xf32, #tpu.memory_space<vmem>>, vector<128x128xf32>
      tpu.vector_store %arg10[%c0_27, %c0_28], %32 {strides = array<i32>} : memref<128x128xf32, #tpu.memory_space<vmem>>, vector<128x128xf32>,
    } else {
    }
    return
  }
  func.func @transform_0(%arg0: i32, %arg1: i32) -> (i32, i32) {
    %c0_i32 = arith.constant 0 : i32
    return %arg0, %arg1 : i32, i32
  }
  func.func @transform_1(%arg0: i32, %arg1: i32) -> (i32, i32) {
    %c0_i32 = arith.constant 0 : i32
    %c0_i32_0 = arith.constant 0 : i32
    return %arg1, %c0_i32 : i32, i32
  }
  func.func @transform_2(%arg0: i32, %arg1: i32) -> (i32, i32) {
    %c0_i32 = arith.constant 0 : i32
    %c0_i32_0 = arith.constant 0 : i32
    %c0_i32_1 = arith.constant 0 : i32
    return %c0_i32, %c0_i32_0 : i32, i32
  }
  func.func @transform_3(%arg0: i32, %arg1: i32) -> (i32, i32) {
    %c0_i32 = arith.constant 0 : i32
    %c0_i32_0 = arith.constant 0 : i32
    return %arg1, %c0_i32 : i32, i32
  }
  func.func @transform_4(%arg0: i32, %arg1: i32) -> (i32, i32) {
    %c0_i32 = arith.constant 0 : i32
    %c0_i32_0 = arith.constant 0 : i32
    return %arg0, %c0_i32 : i32, i32
  }
  func.func @transform_5(%arg0: i32, %arg1: i32) -> (i32, i32) {
    %c0_i32 = arith.constant 0 : i32
    %c0_i32_0 = arith.constant 0 : i32
    %c0_i32_1 = arith.constant 0 : i32
    return %c0_i32, %c0_i32_0 : i32, i32
  }
  func.func @transform_6(%arg0: i32, %arg1: i32) -> (i32, i32) {
    %c0_i32 = arith.constant 0 : i32
    %c0_i32_0 = arith.constant 0 : i32
    %c0_i32_1 = arith.constant 0 : i32
    return %c0_i32, %c0_i32_0 : i32, i32
  }
  func.func @transform_7(%arg0: i32, %arg1: i32) -> (i32, i32) {
    %c0_i32 = arith.constant 0 : i32
    %c0_i32_0 = arith.constant 0 : i32
    return %arg0, %c0_i32 : i32, i32
  }
  func.func @transform_8(%arg0: i32, %arg1: i32) -> (i32, i32) {
    %c0_i32 = arith.constant 0 : i32
    %c0_i32_0 = arith.constant 0 : i32
    return %arg0, %c0_i32 : i32, i32
  }
}

module attributes {stable_mosaic.version = 11 : i64} {
  func.func @_gcn_layer_kernel(%arg0: i32, %arg1: i32, %arg2: memref<128x256xf32, #tpu.memory_space<vmem>>, %arg3: memref<256x128xf32, #tpu.memory_space<vmem>>, %arg4: memref<128x1xf32, #tpu.memory_space<vmem>>, %arg5: memref<1x128xf32, #tpu.memory_space<vmem>>, %arg6: memref<128x256xf32, #tpu.memory_space<vmem>>, %arg7: memref<128x128xf32, #tpu.memory_space<vmem>>, %arg8: memref<128x128xf32, #tpu.memory_space<vmem>>, %arg9: memref<128x128xf32, #tpu.memory_space<vmem>>, %arg10: memref<128x128xf32, #tpu.memory_space<vmem>>) attributes {dimension_semantics = [#tpu.dimension_semantics<parallel>, #tpu.dimension_semantics<arbitrary>], iteration_bounds = array<i64: 2, 1>, scalar_prefetch = 0 : i64, scratch_operands = 1 : i64, tpu.core_type = #tpu.core_type<tc>, window_params = [{transform_indices = @transform_0, window_bounds = array<i64: 128, 256>}, {pipeline_mode = #tpu.pipeline_mode<synchronous>, transform_indices = @transform_1, window_bounds = array<i64: 256, 128>}, {transform_indices = @transform_2, window_bounds = array<i64: 128, 1>}, {pipeline_mode = #tpu.pipeline_mode<synchronous>, transform_indices = @transform_3, window_bounds = array<i64: 1, 128>}, {pipeline_mode = #tpu.pipeline_mode<synchronous>, transform_indices = @transform_4, window_bounds = array<i64: 128, 256>}, {transform_indices = @transform_5, window_bounds = array<i64: 128, 128>}, {transform_indices = @transform_6, window_bounds = array<i64: 128, 128>}, {transform_indices = @transform_7, window_bounds = array<i64: 128, 128>}]} {
    %c0_i32 = arith.constant 0 : i32
    %0 = arith.cmpi eq, %arg1, %c0_i32 : i32
    %1 = arith.extui %0 : i1 to i32
    %c0_i32_0 = arith.constant 0 : i32
    %2 = arith.cmpi ne, %1, %c0_i32_0 : i32
    scf.if %2 {
      %cst_9 = arith.constant 0.000000e+00 : f32
      %15 = vector.broadcast %cst_9 : f32 to vector<128x128xf32>
      %c0_10 = arith.constant 0 : index
      %c0_11 = arith.constant 0 : index
      %16 = vector.load %arg10[%c0_10, %c0_11] : memref<128x128xf32, #tpu.memory_space<vmem>>, vector<128x128xf32>
      tpu.vector_store %arg10[%c0_10, %c0_11], %15 {strides = array<i32>} : memref<128x128xf32, #tpu.memory_space<vmem>>, vector<128x128xf32>,
    } else {
    }
    %c0 = arith.constant 0 : index
    %c0_1 = arith.constant 0 : index
    %3 = vector.load %arg2[%c0, %c0_1] : memref<128x256xf32, #tpu.memory_space<vmem>>, vector<128x256xf32>
    %c256_i32 = arith.constant 256 : i32
    %4 = arith.muli %arg1, %c256_i32 : i32
    %5 = tpu.assume_multiple %4, 256 : i32
    %6 = arith.index_cast %5 : i32 to index
    %c0_2 = arith.constant 0 : index
    %7 = vector.load %arg3[%6, %c0_2] : memref<256x128xf32, #tpu.memory_space<vmem>>, vector<256x128xf32>
    %c0_3 = arith.constant 0 : index
    %c0_4 = arith.constant 0 : index
    %8 = vector.load %arg10[%c0_3, %c0_4] : memref<128x128xf32, #tpu.memory_space<vmem>>, vector<128x128xf32>
    %cst = arith.constant dense<0.000000e+00> : vector<128x128xf32>
    %9 = tpu.matmul %3, %7, %cst {dimension_numbers = #tpu.dot_dimension_numbers<[1], [0], [0], [1], [0, 0, 1, 1], [], []>} : vector<128x256xf32>, vector<256x128xf32>, vector<128x128xf32> -> vector<128x128xf32>
    %10 = arith.addf %8, %9 : vector<128x128xf32>
    %c0_5 = arith.constant 0 : index
    %c0_6 = arith.constant 0 : index
    %11 = vector.load %arg10[%c0_5, %c0_6] : memref<128x128xf32, #tpu.memory_space<vmem>>, vector<128x128xf32>
    tpu.vector_store %arg10[%c0_5, %c0_6], %10 {strides = array<i32>} : memref<128x128xf32, #tpu.memory_space<vmem>>, vector<128x128xf32>,
    %c0_i32_7 = arith.constant 0 : i32
    %12 = arith.cmpi eq, %arg1, %c0_i32_7 : i32
    %13 = arith.extui %12 : i1 to i32
    %c0_i32_8 = arith.constant 0 : i32
    %14 = arith.cmpi ne, %13, %c0_i32_8 : i32
    scf.if %14 {
      %c0_9 = arith.constant 0 : index
      %c0_10 = arith.constant 0 : index
      %15 = vector.load %arg4[%c0_9, %c0_10] : memref<128x1xf32, #tpu.memory_space<vmem>>, vector<128x1xf32>
      %c0_11 = arith.constant 0 : index
      %c0_12 = arith.constant 0 : index
      %16 = vector.load %arg10[%c0_11, %c0_12] : memref<128x128xf32, #tpu.memory_space<vmem>>, vector<128x128xf32>
      %17 = vector.broadcast %15 : vector<128x1xf32> to vector<128x128xf32>
      %18 = arith.mulf %16, %17 : vector<128x128xf32>
      %c0_13 = arith.constant 0 : index
      %c0_14 = arith.constant 0 : index
      %19 = vector.load %arg5[%c0_13, %c0_14] : memref<1x128xf32, #tpu.memory_space<vmem>>, vector<1x128xf32>
      %20 = vector.broadcast %19 : vector<1x128xf32> to vector<128x128xf32>
      %21 = arith.addf %18, %20 : vector<128x128xf32>
      %cst_15 = arith.constant 0.000000e+00 : f32
      %22 = vector.broadcast %cst_15 : f32 to vector<128x128xf32>
      %23 = arith.maximumf %21, %22 : vector<128x128xf32>
      %c0_16 = arith.constant 0 : index
      %c0_17 = arith.constant 0 : index
      %24 = vector.load %arg6[%c0_16, %c0_17] : memref<128x256xf32, #tpu.memory_space<vmem>>, vector<128x256xf32>
      %cst_18 = arith.constant dense<0.000000e+00> : vector<128x256xf32>
      %25 = tpu.matmul %23, %24, %cst_18 {dimension_numbers = #tpu.dot_dimension_numbers<[1], [0], [0], [1], [0, 0, 1, 1], [], []>} : vector<128x128xf32>, vector<128x256xf32>, vector<128x256xf32> -> vector<128x256xf32>
      %26 = vector.extract_strided_slice %25 {offsets = [0, 0], sizes = [128, 128], strides = [1, 1]} : vector<128x256xf32> to vector<128x128xf32>
      %27 = vector.broadcast %15 : vector<128x1xf32> to vector<128x128xf32>
      %28 = arith.mulf %27, %26 : vector<128x128xf32>
      %c0_19 = arith.constant 0 : index
      %c0_20 = arith.constant 0 : index
      %29 = vector.load %arg8[%c0_19, %c0_20] : memref<128x128xf32, #tpu.memory_space<vmem>>, vector<128x128xf32>
      tpu.vector_store %arg8[%c0_19, %c0_20], %28 {strides = array<i32>} : memref<128x128xf32, #tpu.memory_space<vmem>>, vector<128x128xf32>,
      %30 = vector.extract_strided_slice %25 {offsets = [0, 128], sizes = [128, 128], strides = [1, 1]} : vector<128x256xf32> to vector<128x128xf32>
      %c0_21 = arith.constant 0 : index
      %c0_22 = arith.constant 0 : index
      %31 = vector.load %arg7[%c0_21, %c0_22] : memref<128x128xf32, #tpu.memory_space<vmem>>, vector<128x128xf32>
      %32 = arith.addf %31, %30 : vector<128x128xf32>
      %c0_23 = arith.constant 0 : index
      %c0_24 = arith.constant 0 : index
      %33 = vector.load %arg9[%c0_23, %c0_24] : memref<128x128xf32, #tpu.memory_space<vmem>>, vector<128x128xf32>
      tpu.vector_store %arg9[%c0_23, %c0_24], %32 {strides = array<i32>} : memref<128x128xf32, #tpu.memory_space<vmem>>, vector<128x128xf32>,
    } else {
    }
    return
  }
  func.func @transform_0(%arg0: i32, %arg1: i32) -> (i32, i32) {
    %c0_i32 = arith.constant 0 : i32
    return %arg0, %arg1 : i32, i32
  }
  func.func @transform_1(%arg0: i32, %arg1: i32) -> (i32, i32) {
    %c0_i32 = arith.constant 0 : i32
    %c0_i32_0 = arith.constant 0 : i32
    %c0_i32_1 = arith.constant 0 : i32
    return %c0_i32, %c0_i32_0 : i32, i32
  }
  func.func @transform_2(%arg0: i32, %arg1: i32) -> (i32, i32) {
    %c0_i32 = arith.constant 0 : i32
    %c0_i32_0 = arith.constant 0 : i32
    return %arg0, %c0_i32 : i32, i32
  }
  func.func @transform_3(%arg0: i32, %arg1: i32) -> (i32, i32) {
    %c0_i32 = arith.constant 0 : i32
    %c0_i32_0 = arith.constant 0 : i32
    %c0_i32_1 = arith.constant 0 : i32
    return %c0_i32, %c0_i32_0 : i32, i32
  }
  func.func @transform_4(%arg0: i32, %arg1: i32) -> (i32, i32) {
    %c0_i32 = arith.constant 0 : i32
    %c0_i32_0 = arith.constant 0 : i32
    %c0_i32_1 = arith.constant 0 : i32
    return %c0_i32, %c0_i32_0 : i32, i32
  }
  func.func @transform_5(%arg0: i32, %arg1: i32) -> (i32, i32) {
    %c0_i32 = arith.constant 0 : i32
    %c0_i32_0 = arith.constant 0 : i32
    return %arg0, %c0_i32 : i32, i32
  }
  func.func @transform_6(%arg0: i32, %arg1: i32) -> (i32, i32) {
    %c0_i32 = arith.constant 0 : i32
    %c0_i32_0 = arith.constant 0 : i32
    return %arg0, %c0_i32 : i32, i32
  }
  func.func @transform_7(%arg0: i32, %arg1: i32) -> (i32, i32) {
    %c0_i32 = arith.constant 0 : i32
    %c0_i32_0 = arith.constant 0 : i32
    return %arg0, %c0_i32 : i32, i32
  }
}

module attributes {stable_mosaic.version = 11 : i64} {
  func.func @_gcn_layer_kernel(%arg0: i32, %arg1: i32, %arg2: memref<128x256xf32, #tpu.memory_space<vmem>>, %arg3: memref<256x128xf32, #tpu.memory_space<vmem>>, %arg4: memref<128x1xf32, #tpu.memory_space<vmem>>, %arg5: memref<1x128xf32, #tpu.memory_space<vmem>>, %arg6: memref<128x128xf32, #tpu.memory_space<vmem>>, %arg7: memref<128x128xf32, #tpu.memory_space<vmem>>, %arg8: memref<128x128xf32, #tpu.memory_space<vmem>>, %arg9: memref<128x128xf32, #tpu.memory_space<vmem>>) attributes {dimension_semantics = [#tpu.dimension_semantics<parallel>, #tpu.dimension_semantics<arbitrary>], iteration_bounds = array<i64: 2, 1>, scalar_prefetch = 0 : i64, scratch_operands = 1 : i64, tpu.core_type = #tpu.core_type<tc>, window_params = [{transform_indices = @transform_0, window_bounds = array<i64: 128, 256>}, {pipeline_mode = #tpu.pipeline_mode<synchronous>, transform_indices = @transform_1, window_bounds = array<i64: 256, 128>}, {transform_indices = @transform_2, window_bounds = array<i64: 128, 1>}, {pipeline_mode = #tpu.pipeline_mode<synchronous>, transform_indices = @transform_3, window_bounds = array<i64: 1, 128>}, {pipeline_mode = #tpu.pipeline_mode<synchronous>, transform_indices = @transform_4, window_bounds = array<i64: 128, 128>}, {transform_indices = @transform_5, window_bounds = array<i64: 128, 128>}, {transform_indices = @transform_6, window_bounds = array<i64: 128, 128>}]} {
    %c0_i32 = arith.constant 0 : i32
    %0 = arith.cmpi eq, %arg1, %c0_i32 : i32
    %1 = arith.extui %0 : i1 to i32
    %c0_i32_0 = arith.constant 0 : i32
    %2 = arith.cmpi ne, %1, %c0_i32_0 : i32
    scf.if %2 {
      %cst_9 = arith.constant 0.000000e+00 : f32
      %15 = vector.broadcast %cst_9 : f32 to vector<128x128xf32>
      %c0_10 = arith.constant 0 : index
      %c0_11 = arith.constant 0 : index
      %16 = vector.load %arg9[%c0_10, %c0_11] : memref<128x128xf32, #tpu.memory_space<vmem>>, vector<128x128xf32>
      tpu.vector_store %arg9[%c0_10, %c0_11], %15 {strides = array<i32>} : memref<128x128xf32, #tpu.memory_space<vmem>>, vector<128x128xf32>,
    } else {
    }
    %c0 = arith.constant 0 : index
    %c0_1 = arith.constant 0 : index
    %3 = vector.load %arg2[%c0, %c0_1] : memref<128x256xf32, #tpu.memory_space<vmem>>, vector<128x256xf32>
    %c256_i32 = arith.constant 256 : i32
    %4 = arith.muli %arg1, %c256_i32 : i32
    %5 = tpu.assume_multiple %4, 256 : i32
    %6 = arith.index_cast %5 : i32 to index
    %c0_2 = arith.constant 0 : index
    %7 = vector.load %arg3[%6, %c0_2] : memref<256x128xf32, #tpu.memory_space<vmem>>, vector<256x128xf32>
    %c0_3 = arith.constant 0 : index
    %c0_4 = arith.constant 0 : index
    %8 = vector.load %arg9[%c0_3, %c0_4] : memref<128x128xf32, #tpu.memory_space<vmem>>, vector<128x128xf32>
    %cst = arith.constant dense<0.000000e+00> : vector<128x128xf32>
    %9 = tpu.matmul %3, %7, %cst {dimension_numbers = #tpu.dot_dimension_numbers<[1], [0], [0], [1], [0, 0, 1, 1], [], []>} : vector<128x256xf32>, vector<256x128xf32>, vector<128x128xf32> -> vector<128x128xf32>
    %10 = arith.addf %8, %9 : vector<128x128xf32>
    %c0_5 = arith.constant 0 : index
    %c0_6 = arith.constant 0 : index
    %11 = vector.load %arg9[%c0_5, %c0_6] : memref<128x128xf32, #tpu.memory_space<vmem>>, vector<128x128xf32>
    tpu.vector_store %arg9[%c0_5, %c0_6], %10 {strides = array<i32>} : memref<128x128xf32, #tpu.memory_space<vmem>>, vector<128x128xf32>,
    %c0_i32_7 = arith.constant 0 : i32
    %12 = arith.cmpi eq, %arg1, %c0_i32_7 : i32
    %13 = arith.extui %12 : i1 to i32
    %c0_i32_8 = arith.constant 0 : i32
    %14 = arith.cmpi ne, %13, %c0_i32_8 : i32
    scf.if %14 {
      %c0_9 = arith.constant 0 : index
      %c0_10 = arith.constant 0 : index
      %15 = vector.load %arg4[%c0_9, %c0_10] : memref<128x1xf32, #tpu.memory_space<vmem>>, vector<128x1xf32>
      %c0_11 = arith.constant 0 : index
      %c0_12 = arith.constant 0 : index
      %16 = vector.load %arg9[%c0_11, %c0_12] : memref<128x128xf32, #tpu.memory_space<vmem>>, vector<128x128xf32>
      %17 = vector.broadcast %15 : vector<128x1xf32> to vector<128x128xf32>
      %18 = arith.mulf %16, %17 : vector<128x128xf32>
      %c0_13 = arith.constant 0 : index
      %c0_14 = arith.constant 0 : index
      %19 = vector.load %arg5[%c0_13, %c0_14] : memref<1x128xf32, #tpu.memory_space<vmem>>, vector<1x128xf32>
      %20 = vector.broadcast %19 : vector<1x128xf32> to vector<128x128xf32>
      %21 = arith.addf %18, %20 : vector<128x128xf32>
      %cst_15 = arith.constant 0.000000e+00 : f32
      %22 = vector.broadcast %cst_15 : f32 to vector<128x128xf32>
      %23 = arith.maximumf %21, %22 : vector<128x128xf32>
      %c0_16 = arith.constant 0 : index
      %c0_17 = arith.constant 0 : index
      %24 = vector.load %arg6[%c0_16, %c0_17] : memref<128x128xf32, #tpu.memory_space<vmem>>, vector<128x128xf32>
      %cst_18 = arith.constant dense<0.000000e+00> : vector<128x128xf32>
      %25 = tpu.matmul %23, %24, %cst_18 {dimension_numbers = #tpu.dot_dimension_numbers<[1], [0], [0], [1], [0, 0, 1, 1], [], []>} : vector<128x128xf32>, vector<128x128xf32>, vector<128x128xf32> -> vector<128x128xf32>
      %c0_19 = arith.constant 0 : index
      %c0_20 = arith.constant 0 : index
      %26 = vector.load %arg7[%c0_19, %c0_20] : memref<128x128xf32, #tpu.memory_space<vmem>>, vector<128x128xf32>
      %27 = arith.addf %26, %25 : vector<128x128xf32>
      %c0_21 = arith.constant 0 : index
      %c0_22 = arith.constant 0 : index
      %28 = vector.load %arg8[%c0_21, %c0_22] : memref<128x128xf32, #tpu.memory_space<vmem>>, vector<128x128xf32>
      tpu.vector_store %arg8[%c0_21, %c0_22], %27 {strides = array<i32>} : memref<128x128xf32, #tpu.memory_space<vmem>>, vector<128x128xf32>,
    } else {
    }
    return
  }
  func.func @transform_0(%arg0: i32, %arg1: i32) -> (i32, i32) {
    %c0_i32 = arith.constant 0 : i32
    return %arg0, %arg1 : i32, i32
  }
  func.func @transform_1(%arg0: i32, %arg1: i32) -> (i32, i32) {
    %c0_i32 = arith.constant 0 : i32
    %c0_i32_0 = arith.constant 0 : i32
    %c0_i32_1 = arith.constant 0 : i32
    return %c0_i32, %c0_i32_0 : i32, i32
  }
  func.func @transform_2(%arg0: i32, %arg1: i32) -> (i32, i32) {
    %c0_i32 = arith.constant 0 : i32
    %c0_i32_0 = arith.constant 0 : i32
    return %arg0, %c0_i32 : i32, i32
  }
  func.func @transform_3(%arg0: i32, %arg1: i32) -> (i32, i32) {
    %c0_i32 = arith.constant 0 : i32
    %c0_i32_0 = arith.constant 0 : i32
    %c0_i32_1 = arith.constant 0 : i32
    return %c0_i32, %c0_i32_0 : i32, i32
  }
  func.func @transform_4(%arg0: i32, %arg1: i32) -> (i32, i32) {
    %c0_i32 = arith.constant 0 : i32
    %c0_i32_0 = arith.constant 0 : i32
    %c0_i32_1 = arith.constant 0 : i32
    return %c0_i32, %c0_i32_0 : i32, i32
  }
  func.func @transform_5(%arg0: i32, %arg1: i32) -> (i32, i32) {
    %c0_i32 = arith.constant 0 : i32
    %c0_i32_0 = arith.constant 0 : i32
    return %arg0, %c0_i32 : i32, i32
  }
  func.func @transform_6(%arg0: i32, %arg1: i32) -> (i32, i32) {
    %c0_i32 = arith.constant 0 : i32
    %c0_i32_0 = arith.constant 0 : i32
    return %arg0, %c0_i32 : i32, i32
  }
}

module attributes {stable_mosaic.version = 11 : i64} {
  func.func @_final_agg_kernel(%arg0: i32, %arg1: i32, %arg2: memref<128x256xf32, #tpu.memory_space<vmem>>, %arg3: memref<256x128xf32, #tpu.memory_space<vmem>>, %arg4: memref<1x128xf32, #tpu.memory_space<vmem>>, %arg5: memref<128x128xf32, #tpu.memory_space<vmem>>, %arg6: memref<128x128xf32, #tpu.memory_space<vmem>>) attributes {dimension_semantics = [#tpu.dimension_semantics<parallel>, #tpu.dimension_semantics<arbitrary>], iteration_bounds = array<i64: 2, 1>, scalar_prefetch = 0 : i64, scratch_operands = 1 : i64, tpu.core_type = #tpu.core_type<tc>, window_params = [{transform_indices = @transform_0, window_bounds = array<i64: 128, 256>}, {pipeline_mode = #tpu.pipeline_mode<synchronous>, transform_indices = @transform_1, window_bounds = array<i64: 256, 128>}, {pipeline_mode = #tpu.pipeline_mode<synchronous>, transform_indices = @transform_2, window_bounds = array<i64: 1, 128>}, {transform_indices = @transform_3, window_bounds = array<i64: 128, 128>}]} {
    %c0_i32 = arith.constant 0 : i32
    %0 = arith.cmpi eq, %arg1, %c0_i32 : i32
    %1 = arith.extui %0 : i1 to i32
    %c0_i32_0 = arith.constant 0 : i32
    %2 = arith.cmpi ne, %1, %c0_i32_0 : i32
    scf.if %2 {
      %cst_9 = arith.constant 0.000000e+00 : f32
      %15 = vector.broadcast %cst_9 : f32 to vector<128x128xf32>
      %c0_10 = arith.constant 0 : index
      %c0_11 = arith.constant 0 : index
      %16 = vector.load %arg6[%c0_10, %c0_11] : memref<128x128xf32, #tpu.memory_space<vmem>>, vector<128x128xf32>
      tpu.vector_store %arg6[%c0_10, %c0_11], %15 {strides = array<i32>} : memref<128x128xf32, #tpu.memory_space<vmem>>, vector<128x128xf32>,
    } else {
    }
    %c256_i32 = arith.constant 256 : i32
    %3 = arith.muli %arg1, %c256_i32 : i32
    %4 = tpu.assume_multiple %3, 256 : i32
    %5 = arith.index_cast %4 : i32 to index
    %c0 = arith.constant 0 : index
    %6 = vector.load %arg3[%5, %c0] : memref<256x128xf32, #tpu.memory_space<vmem>>, vector<256x128xf32>
    %c0_1 = arith.constant 0 : index
    %c0_2 = arith.constant 0 : index
    %7 = vector.load %arg2[%c0_1, %c0_2] : memref<128x256xf32, #tpu.memory_space<vmem>>, vector<128x256xf32>
    %c0_3 = arith.constant 0 : index
    %c0_4 = arith.constant 0 : index
    %8 = vector.load %arg6[%c0_3, %c0_4] : memref<128x128xf32, #tpu.memory_space<vmem>>, vector<128x128xf32>
    %cst = arith.constant dense<0.000000e+00> : vector<128x128xf32>
    %9 = tpu.matmul %7, %6, %cst {dimension_numbers = #tpu.dot_dimension_numbers<[1], [0], [0], [1], [0, 0, 1, 1], [], []>} : vector<128x256xf32>, vector<256x128xf32>, vector<128x128xf32> -> vector<128x128xf32>
    %10 = arith.addf %8, %9 : vector<128x128xf32>
    %c0_5 = arith.constant 0 : index
    %c0_6 = arith.constant 0 : index
    %11 = vector.load %arg6[%c0_5, %c0_6] : memref<128x128xf32, #tpu.memory_space<vmem>>, vector<128x128xf32>
    tpu.vector_store %arg6[%c0_5, %c0_6], %10 {strides = array<i32>} : memref<128x128xf32, #tpu.memory_space<vmem>>, vector<128x128xf32>,
    %c0_i32_7 = arith.constant 0 : i32
    %12 = arith.cmpi eq, %arg1, %c0_i32_7 : i32
    %13 = arith.extui %12 : i1 to i32
    %c0_i32_8 = arith.constant 0 : i32
    %14 = arith.cmpi ne, %13, %c0_i32_8 : i32
    scf.if %14 {
      %c0_9 = arith.constant 0 : index
      %c0_10 = arith.constant 0 : index
      %15 = vector.load %arg6[%c0_9, %c0_10] : memref<128x128xf32, #tpu.memory_space<vmem>>, vector<128x128xf32>
      %c0_11 = arith.constant 0 : index
      %c0_12 = arith.constant 0 : index
      %16 = vector.load %arg4[%c0_11, %c0_12] : memref<1x128xf32, #tpu.memory_space<vmem>>, vector<1x128xf32>
      %17 = vector.broadcast %16 : vector<1x128xf32> to vector<128x128xf32>
      %18 = arith.addf %15, %17 : vector<128x128xf32>
      %c0_13 = arith.constant 0 : index
      %c0_14 = arith.constant 0 : index
      %19 = vector.load %arg5[%c0_13, %c0_14] : memref<128x128xf32, #tpu.memory_space<vmem>>, vector<128x128xf32>
      tpu.vector_store %arg5[%c0_13, %c0_14], %18 {strides = array<i32>} : memref<128x128xf32, #tpu.memory_space<vmem>>, vector<128x128xf32>,
    } else {
    }
    return
  }
  func.func @transform_0(%arg0: i32, %arg1: i32) -> (i32, i32) {
    %c0_i32 = arith.constant 0 : i32
    return %arg0, %arg1 : i32, i32
  }
  func.func @transform_1(%arg0: i32, %arg1: i32) -> (i32, i32) {
    %c0_i32 = arith.constant 0 : i32
    %c0_i32_0 = arith.constant 0 : i32
    %c0_i32_1 = arith.constant 0 : i32
    return %c0_i32, %c0_i32_0 : i32, i32
  }
  func.func @transform_2(%arg0: i32, %arg1: i32) -> (i32, i32) {
    %c0_i32 = arith.constant 0 : i32
    %c0_i32_0 = arith.constant 0 : i32
    %c0_i32_1 = arith.constant 0 : i32
    return %c0_i32, %c0_i32_0 : i32, i32
  }
  func.func @transform_3(%arg0: i32, %arg1: i32) -> (i32, i32) {
    %c0_i32 = arith.constant 0 : i32
    %c0_i32_0 = arith.constant 0 : i32
    return %arg0, %c0_i32 : i32, i32
  }
}

</mosaic_0001>

<llo_original>
// kernel: jknet_forward.6
$region0: #{jknet_forward.6}
  #allocation0 [shape = 'u32[]', space=smem, size = 0x4, offset = 0x4, fixed_abs, tag = 'smem constant byte address 0x4 - core index']
  #allocation1 [shape = 'u32[72,128]{1,0:T(1,128)}', space=vmem, size = 0x9000, scoped, tag = 'internal scratch']
  #allocation2 [shape = 'f32[128,128]{1,0:T(8,128)}', space=vmem, size = 0x10000, scoped, tag = 'scratch operand']
  %s0 = inlined_call_operand.vmem [shape: f32[256,256], index: 0, kind: input, shape index: {}]
  %s1 = inlined_call_operand.vmem [shape: f32[256,128], index: 1, kind: input, shape index: {}]
  %s2 = inlined_call_operand.vmem [shape: f32[256,1], index: 2, kind: input, shape index: {}]
  %s3 = inlined_call_operand.vmem [shape: f32[1,128], index: 3, kind: input, shape index: {}]
  %s4 = inlined_call_operand.vmem [shape: f32[128,128], index: 4, kind: input, shape index: {}]
  %s5 = inlined_call_operand.vmem [shape: f32[256,128], index: 5, kind: input, shape index: {}, may-alias: {5,6}]
  %s6 = inlined_call_operand.vmem [shape: f32[256,128], index: 6, kind: output, shape index: {}, may-alias: {5,6}]
  %s7 = sld [smem:[#allocation0]]
  $region65: #{jknet_forward.6} parent=0
    _
  %s9 = ssub.s32 1, %s7
  %s10 = scalar_select 0, %s9, %s7
  loop: start=0, step=1, limit=4
  $region2: #{jknet_forward.6} parent=0 // loop_pre_header
    _
  $region3: #{jknet_forward.6} parent=0 // loop_header
    %s12 = sphi 0, %s16
    %p13 = scmp.ge.s32.totalorder %s12, 4
    %s19 = sphi 0, %s31
    %s20 = sphi 0, %s27
    %s21 = sphi 0, %s19
    %s22 = sphi 0, %s20
    %s23 = sphi 0, %s21
    %s24 = sphi 0, %s22
    %s36 = sphi 0, %s38
    %s39 = sphi 0, %s36
    %s40 = sphi 0, %s39
    %s56 = sphi 0, %s40
    %s60 = sphi 0, %s60
    %s62 = sphi 0, %s60
    %s63 = sphi 0, %s62
    %s77 = sphi 0, %s63
    %s83 = sphi 0, %s85
    %s86 = sphi 0, %s83
    %s87 = sphi 0, %s86
    %s103 = sphi 0, %s87
    %s107 = sphi 0, %s107
    %s109 = sphi 0, %s107
    %s110 = sphi 0, %s109
    %s124 = sphi 0, %s110
    %s128 = sphi 0, %s128
    %s130 = sphi 0, %s128
    %s131 = sphi 0, %s130
    %s145 = sphi 0, %s131
    %s151 = sphi 0, %s153
    %s154 = sphi 0, %s151
    %s155 = sphi 0, %s154
    %s171 = sphi 0, %s155
    %s177 = sphi 0, %s179
    %s180 = sphi 0, %s177
    %s181 = sphi 0, %s180
    %s197 = sphi 0, %s181
  $region4: #{jknet_forward.6} parent=0 // loop_header_branch
    %15 = sbr.rel (%p13) target = $region8
  $region5: #{jknet_forward.6} parent=0 // loop_body
    %s17 = ssub.s32 %s12, 1
    %s18 = ssub.s32 %s12, 2
    %s25 = sadd.s32 1, %s20
    %p26 = scmp.ge.s32.totalorder %s25, 1
    %s27 = scalar_select %p26, 0, %s25
    %s28 = sadd.s32 1, %s19
    %s29 = scalar_select %p26, %s28, %s19
    %p30 = scmp.ge.s32.totalorder %s29, 2
    %s31 = scalar_select %p30, 0, %s29
    %s32 = ssub.s32 %s19, %s31
    %s33 = ssub.s32 %s20, %s27
    %s34 = sor.u32 %s32, %s33
    %p35 = scmp.eq.s32.totalorder %s34, 0
    %s37 = sadd.s32 %s36, 1
    %s38 = scalar_select %p35, %s36, %s37
    %p41 = pneg %p35
    %p42 = scmp.eq.s32.totalorder %s12, 1
    %p43 = por %p41, %p42
    %p44 = scmp.ne.s32.totalorder %s36, %s39
    %p45 = scmp.eq.s32.totalorder %s12, 0
    %p46 = por %p44, %p45
    %p47 = scmp.ne.s32.totalorder %s36, %s39
    %p48 = scmp.eq.s32.totalorder %s17, 1
    %p49 = por %p47, %p48
    %p50 = scmp.ne.s32.totalorder %s39, %s40
    %p51 = scmp.eq.s32.totalorder %s17, 0
    %p52 = por %p50, %p51
    %p53 = scmp.ne.s32.totalorder %s39, %s40
    %p54 = scmp.eq.s32.totalorder %s18, 1
    %p55 = por %p53, %p54
    %p57 = scmp.ne.s32.totalorder %s40, %s56
    %p58 = scmp.eq.s32.totalorder %s18, 0
    %p59 = por %p57, %p58
    %s61 = sadd.s32 %s60, 1
    %p64 = scmp.eq.s32.totalorder %s12, 1
    %p65 = scmp.ne.s32.totalorder %s60, %s62
    %p66 = scmp.eq.s32.totalorder %s12, 0
    %p67 = por %p65, %p66
    %p68 = scmp.ne.s32.totalorder %s60, %s62
    %p69 = scmp.eq.s32.totalorder %s17, 1
    %p70 = por %p68, %p69
    %p71 = scmp.ne.s32.totalorder %s62, %s63
    %p72 = scmp.eq.s32.totalorder %s17, 0
    %p73 = por %p71, %p72
    %p74 = scmp.ne.s32.totalorder %s62, %s63
    %p75 = scmp.eq.s32.totalorder %s18, 1
    %p76 = por %p74, %p75
    %p78 = scmp.ne.s32.totalorder %s63, %s77
    %p79 = scmp.eq.s32.totalorder %s18, 0
    %p80 = por %p78, %p79
    %s81 = ssub.s32 %s19, %s31
    %p82 = scmp.eq.s32.totalorder %s81, 0
    %s84 = sadd.s32 %s83, 1
    %s85 = scalar_select %p82, %s83, %s84
    %p88 = pneg %p82
    %p89 = scmp.eq.s32.totalorder %s12, 1
    %p90 = por %p88, %p89
    %p91 = scmp.ne.s32.totalorder %s83, %s86
    %p92 = scmp.eq.s32.totalorder %s12, 0
    %p93 = por %p91, %p92
    %p94 = scmp.ne.s32.totalorder %s83, %s86
    %p95 = scmp.eq.s32.totalorder %s17, 1
    %p96 = por %p94, %p95
    %p97 = scmp.ne.s32.totalorder %s86, %s87
    %p98 = scmp.eq.s32.totalorder %s17, 0
    %p99 = por %p97, %p98
    %p100 = scmp.ne.s32.totalorder %s86, %s87
    %p101 = scmp.eq.s32.totalorder %s18, 1
    %p102 = por %p100, %p101
    %p104 = scmp.ne.s32.totalorder %s87, %s103
    %p105 = scmp.eq.s32.totalorder %s18, 0
    %p106 = por %p104, %p105
    %s108 = sadd.s32 %s107, 1
    %p111 = scmp.eq.s32.totalorder %s12, 1
    %p112 = scmp.ne.s32.totalorder %s107, %s109
    %p113 = scmp.eq.s32.totalorder %s12, 0
    %p114 = por %p112, %p113
    %p115 = scmp.ne.s32.totalorder %s107, %s109
    %p116 = scmp.eq.s32.totalorder %s17, 1
    %p117 = por %p115, %p116
    %p118 = scmp.ne.s32.totalorder %s109, %s110
    %p119 = scmp.eq.s32.totalorder %s17, 0
    %p120 = por %p118, %p119
    %p121 = scmp.ne.s32.totalorder %s109, %s110
    %p122 = scmp.eq.s32.totalorder %s18, 1
    %p123 = por %p121, %p122
    %p125 = scmp.ne.s32.totalorder %s110, %s124
    %p126 = scmp.eq.s32.totalorder %s18, 0
    %p127 = por %p125, %p126
    %s129 = sadd.s32 %s128, 1
    %p132 = scmp.eq.s32.totalorder %s12, 1
    %p133 = scmp.ne.s32.totalorder %s128, %s130
    %p134 = scmp.eq.s32.totalorder %s12, 0
    %p135 = por %p133, %p134
    %p136 = scmp.ne.s32.totalorder %s128, %s130
    %p137 = scmp.eq.s32.totalorder %s17, 1
    %p138 = por %p136, %p137
    %p139 = scmp.ne.s32.totalorder %s130, %s131
    %p140 = scmp.eq.s32.totalorder %s17, 0
    %p141 = por %p139, %p140
    %p142 = scmp.ne.s32.totalorder %s130, %s131
    %p143 = scmp.eq.s32.totalorder %s18, 1
    %p144 = por %p142, %p143
    %p146 = scmp.ne.s32.totalorder %s131, %s145
    %p147 = scmp.eq.s32.totalorder %s18, 0
    %p148 = por %p146, %p147
    %s149 = ssub.s32 %s19, %s31
    %p150 = scmp.eq.s32.totalorder %s149, 0
    %s152 = sadd.s32 %s151, 1
    %s153 = scalar_select %p150, %s151, %s152
    %p156 = pneg %p150
    %p157 = scmp.eq.s32.totalorder %s12, 1
    %p158 = por %p156, %p157
    %p159 = scmp.ne.s32.totalorder %s151, %s154
    %p160 = scmp.eq.s32.totalorder %s12, 0
    %p161 = por %p159, %p160
    %p162 = scmp.ne.s32.totalorder %s151, %s154
    %p163 = scmp.eq.s32.totalorder %s17, 1
    %p164 = por %p162, %p163
    %p165 = scmp.ne.s32.totalorder %s154, %s155
    %p166 = scmp.eq.s32.totalorder %s17, 0
    %p167 = por %p165, %p166
    %p168 = scmp.ne.s32.totalorder %s154, %s155
    %p169 = scmp.eq.s32.totalorder %s18, 1
    %p170 = por %p168, %p169
    %p172 = scmp.ne.s32.totalorder %s155, %s171
    %p173 = scmp.eq.s32.totalorder %s18, 0
    %p174 = por %p172, %p173
    %s175 = ssub.s32 %s19, %s31
    %p176 = scmp.eq.s32.totalorder %s175, 0
    %s178 = sadd.s32 %s177, 1
    %s179 = scalar_select %p176, %s177, %s178
    %p182 = pneg %p176
    %p183 = scmp.eq.s32.totalorder %s12, 1
    %p184 = por %p182, %p183
    %p185 = scmp.ne.s32.totalorder %s177, %s180
    %p186 = scmp.eq.s32.totalorder %s12, 0
    %p187 = por %p185, %p186
    %p188 = scmp.ne.s32.totalorder %s177, %s180
    %p189 = scmp.eq.s32.totalorder %s17, 1
    %p190 = por %p188, %p189
    %p191 = scmp.ne.s32.totalorder %s180, %s181
    %p192 = scmp.eq.s32.totalorder %s17, 0
    %p193 = por %p191, %p192
    %p194 = scmp.ne.s32.totalorder %s180, %s181
    %p195 = scmp.eq.s32.totalorder %s18, 1
    %p196 = por %p194, %p195
    %p198 = scmp.ne.s32.totalorder %s181, %s197
    %p199 = scmp.eq.s32.totalorder %s18, 0
    %p200 = por %p198, %p199
    %p201 = scmp.le.s32.totalorder 1, %s12
    %p202 = scmp.lt.s32.totalorder %s12, 3
    %p203 = pnand %p201, %p202
    %p204 = pneg %p203
    // Predicated region
    $region9: #{jknet_forward.6} parent=5 // pred_check
      _
    $region10: #{jknet_forward.6} parent=5 // pred_check_branch
      %206 = sbr.rel (%p203) target = $region12
    $region11: #{jknet_forward.6} parent=5 // pred_region
      %s207 = ssub.s32 %s12, 1
      // Predicated region
      $region13: #{jknet_forward.6} parent=11 // pred_check
        %p208 = pneg %p73
      $region14: #{jknet_forward.6} parent=11 // pred_check_branch
        %210 = sbr.rel (%p208) target = $region16
      $region15: #{jknet_forward.6} parent=11 // pred_region
        _
      $region16: #{jknet_forward.6} parent=11 // pred_fallthru
        _
      // Predicated region
      $region17: #{jknet_forward.6} parent=11 // pred_check
        %p211 = pneg %p120
      $region18: #{jknet_forward.6} parent=11 // pred_check_branch
        %213 = sbr.rel (%p211) target = $region20
      $region19: #{jknet_forward.6} parent=11 // pred_region
        _
      $region20: #{jknet_forward.6} parent=11 // pred_fallthru
        _
      // Predicated region
      $region21: #{jknet_forward.6} parent=11 // pred_check
        %p214 = pneg %p141
      $region22: #{jknet_forward.6} parent=11 // pred_check_branch
        %216 = sbr.rel (%p214) target = $region24
      $region23: #{jknet_forward.6} parent=11 // pred_region
        _
      $region24: #{jknet_forward.6} parent=11 // pred_fallthru
        _
    $region12: #{jknet_forward.6} parent=5 // pred_fallthru
      _
    %p217 = scmp.lt.s32.totalorder %s12, 2
    // Predicated region
    $region25: #{jknet_forward.6} parent=5 // pred_check
      %p218 = pneg %p217
    $region26: #{jknet_forward.6} parent=5 // pred_check_branch
      %220 = sbr.rel (%p218) target = $region28
    $region27: #{jknet_forward.6} parent=5 // pred_region
      // Predicated region
      $region29: #{jknet_forward.6} parent=27 // pred_check
        %p221 = pneg %p46
      $region30: #{jknet_forward.6} parent=27 // pred_check_branch
        %223 = sbr.rel (%p221) target = $region32
      $region31: #{jknet_forward.6} parent=27 // pred_region
        %s224 = smul.u32 16, %s19
        %s225 = smul.u32 2, %s20
        %p226 = scmp.lt.s32.totalorder %s224, 31
        %s227 = scalar_select %p226, %s224, 31
        %p228 = scmp.lt.s32.totalorder %s225, 1
        %s229 = scalar_select %p228, %s225, 1
        %s230 = smul.addr %s227, 2
        %s231 = sadd.s32 %s229, %s230
        %s232 = smul.addr %s231, 8
        %s233 = scalar_lea.vmem %s0, %s232
        %s234 = smul.u32 16, %s19
        %s235 = smul.u32 2, %s20
      $region32: #{jknet_forward.6} parent=27 // pred_fallthru
        _
      // Predicated region
      $region33: #{jknet_forward.6} parent=27 // pred_check
        %p236 = pneg %p93
      $region34: #{jknet_forward.6} parent=27 // pred_check_branch
        %238 = sbr.rel (%p236) target = $region36
      $region35: #{jknet_forward.6} parent=27 // pred_region
        %s239 = smul.u32 16, %s19
        %p240 = scmp.lt.s32.totalorder %s239, 31
        %s241 = scalar_select %p240, %s239, 31
        %s242 = smul.addr %s241, 8
        %s243 = scalar_lea.vmem %s2, %s242
        %s244 = smul.u32 16, %s19
      $region36: #{jknet_forward.6} parent=27 // pred_fallthru
        _
      // Predicated region
      $region37: #{jknet_forward.6} parent=27 // pred_check
        %p245 = pneg %p161
      $region38: #{jknet_forward.6} parent=27 // pred_check_branch
        %247 = sbr.rel (%p245) target = $region40
      $region39: #{jknet_forward.6} parent=27 // pred_region
        %s248 = smul.u32 16, %s19
        %p249 = scmp.lt.s32.totalorder %s248, 31
        %s250 = scalar_select %p249, %s248, 31
        %s251 = smul.addr %s250, 8
        %s252 = scalar_lea.vmem %s5, %s251
        %s253 = smul.u32 16, %s19
      $region40: #{jknet_forward.6} parent=27 // pred_fallthru
        _
    $region28: #{jknet_forward.6} parent=5 // pred_fallthru
      _
    %p254 = scmp.le.s32.totalorder 1, %s12
    %p255 = scmp.lt.s32.totalorder %s12, 3
    %p256 = pnand %p254, %p255
    %p257 = pneg %p256
    // Predicated region
    $region41: #{jknet_forward.6} parent=5 // pred_check
      _
    $region42: #{jknet_forward.6} parent=5 // pred_check_branch
      %259 = sbr.rel (%p256) target = $region44
    $region43: #{jknet_forward.6} parent=5 // pred_region
      %s260 = ssub.s32 %s12, 1
      %s261 = smul.u32 16, %s21
      %s262 = smul.u32 2, %s22
      %p263 = scmp.lt.s32.totalorder %s261, 31
      %s264 = scalar_select %p263, %s261, 31
      %p265 = scmp.lt.s32.totalorder %s262, 1
      %s266 = scalar_select %p265, %s262, 1
      %s267 = smul.addr %s264, 2
      %s268 = sadd.s32 %s266, %s267
      %s269 = smul.addr %s268, 8
      %s270 = scalar_lea.vmem %s0, %s269
      %p271 = pneg %p52
      %p272 = pneg %p49
      %p273 = pneg %p73
      %p274 = pneg %p70
      %s275 = smul.u32 16, %s21
      %p276 = scmp.lt.s32.totalorder %s275, 31
      %s277 = scalar_select %p276, %s275, 31
      %s278 = smul.addr %s277, 8
      %s279 = scalar_lea.vmem %s2, %s278
      %p280 = pneg %p99
      %p281 = pneg %p96
      %p282 = pneg %p120
      %p283 = pneg %p117
      %p284 = pneg %p141
      %p285 = pneg %p138
      %s286 = smul.u32 16, %s21
      %p287 = scmp.lt.s32.totalorder %s286, 31
      %s288 = scalar_select %p287, %s286, 31
      %s289 = smul.addr %s288, 8
      %s290 = scalar_lea.vmem %s5, %s289
      %p291 = pneg %p167
      %p292 = pneg %p164
      %p293 = pneg %p193
      %p294 = pneg %p190
      %s295 = smul.u32 16, %s21
      %p296 = scmp.lt.s32.totalorder %s295, 31
      %s297 = scalar_select %p296, %s295, 31
      %s298 = smul.addr %s297, 8
      %s299 = scalar_lea.vmem %s6, %s298
      %s300 = smul.u32 16, %s21
      %s301 = smul.u32 2, %s22
      %p302 = scmp.lt.s32.totalorder %s300, 31
      %s303 = scalar_select %p302, %s300, 31
      %p304 = scmp.lt.s32.totalorder %s301, 1
      %s305 = scalar_select %p304, %s301, 1
      %s306 = smul.addr %s303, 2
      %s307 = sadd.s32 %s305, %s306
      %s308 = smul.addr %s307, 8
      %s309 = scalar_lea.vmem %s0, %s308
      %s310 = smul.u32 16, %s21
      %s311 = smul.u32 2, %s22
      %s312 = smul.u32 16, %s21
      %p313 = scmp.lt.s32.totalorder %s312, 31
      %s314 = scalar_select %p313, %s312, 31
      %s315 = smul.addr %s314, 8
      %s316 = scalar_lea.vmem %s2, %s315
      %s317 = smul.u32 16, %s21
      %s318 = smul.u32 16, %s21
      %p319 = scmp.lt.s32.totalorder %s318, 31
      %s320 = scalar_select %p319, %s318, 31
      %s321 = smul.addr %s320, 8
      %s322 = scalar_lea.vmem %s5, %s321
      %s323 = smul.u32 16, %s21
      %s324 = smul.u32 16, %s21
      %p325 = scmp.lt.s32.totalorder %s324, 31
      %s326 = scalar_select %p325, %s324, 31
      %s327 = smul.addr %s326, 8
      %s328 = scalar_lea.vmem %s6, %s327
      %s329 = smul.u32 16, %s21
      %p330 = scmp.eq.s32.totalorder %s22, 0
      // Predicated region
      $region45: #{jknet_forward.6} parent=43 // pred_check
        %p331 = pneg %p330
      $region46: #{jknet_forward.6} parent=43 // pred_check_branch
        %333 = sbr.rel (%p331) target = $region48
      $region47: #{jknet_forward.6} parent=43 // pred_region
        %334 = vst [vmem:[#allocation2] sm:$0xff] 0.0
        %335 = vst [vmem:[#allocation2 + $0x8] sm:$0xff] 0.0
        %336 = vst [vmem:[#allocation2 + $0x10] sm:$0xff] 0.0
        %337 = vst [vmem:[#allocation2 + $0x18] sm:$0xff] 0.0
        %338 = vst [vmem:[#allocation2 + $0x20] sm:$0xff] 0.0
        %339 = vst [vmem:[#allocation2 + $0x28] sm:$0xff] 0.0
        %340 = vst [vmem:[#allocation2 + $0x30] sm:$0xff] 0.0
        %341 = vst [vmem:[#allocation2 + $0x38] sm:$0xff] 0.0
        %342 = vst [vmem:[#allocation2 + $0x40] sm:$0xff] 0.0
        %343 = vst [vmem:[#allocation2 + $0x48] sm:$0xff] 0.0
        %344 = vst [vmem:[#allocation2 + $0x50] sm:$0xff] 0.0
        %345 = vst [vmem:[#allocation2 + $0x58] sm:$0xff] 0.0
        %346 = vst [vmem:[#allocation2 + $0x60] sm:$0xff] 0.0
        %347 = vst [vmem:[#allocation2 + $0x68] sm:$0xff] 0.0
        %348 = vst [vmem:[#allocation2 + $0x70] sm:$0xff] 0.0
        %349 = vst [vmem:[#allocation2 + $0x78] sm:$0xff] 0.0
      $region48: #{jknet_forward.6} parent=43 // pred_fallthru
        _
      %v350 = vld [vmem:[%s309] sm:$0xff]
      %v351 = vld [vmem:[%s309 + $0x8] sm:$0xff]
      %v352 = vld [vmem:[%s309 + $0x10] sm:$0xff]
      %v353 = vld [vmem:[%s309 + $0x18] sm:$0xff]
      %v354 = vld [vmem:[%s309 + $0x20] sm:$0xff]
      %v355 = vld [vmem:[%s309 + $0x28] sm:$0xff]
      %v356 = vld [vmem:[%s309 + $0x30] sm:$0xff]
      %v357 = vld [vmem:[%s309 + $0x38] sm:$0xff]
      %v358 = vld [vmem:[%s309 + $0x40] sm:$0xff]
      %v359 = vld [vmem:[%s309 + $0x48] sm:$0xff]
      %v360 = vld [vmem:[%s309 + $0x50] sm:$0xff]
      %v361 = vld [vmem:[%s309 + $0x58] sm:$0xff]
      %v362 = vld [vmem:[%s309 + $0x60] sm:$0xff]
      %v363 = vld [vmem:[%s309 + $0x68] sm:$0xff]
      %v364 = vld [vmem:[%s309 + $0x70] sm:$0xff]
      %v365 = vld [vmem:[%s309 + $0x78] sm:$0xff]
      %v366 = vld [vmem:[%s309 + $0x80] sm:$0xff]
      %v367 = vld [vmem:[%s309 + $0x88] sm:$0xff]
      %v368 = vld [vmem:[%s309 + $0x90] sm:$0xff]
      %v369 = vld [vmem:[%s309 + $0x98] sm:$0xff]
      %v370 = vld [vmem:[%s309 + $0xa0] sm:$0xff]
      %v371 = vld [vmem:[%s309 + $0xa8] sm:$0xff]
      %v372 = vld [vmem:[%s309 + $0xb0] sm:$0xff]
      %v373 = vld [vmem:[%s309 + $0xb8] sm:$0xff]
      %v374 = vld [vmem:[%s309 + $0xc0] sm:$0xff]
      %v375 = vld [vmem:[%s309 + $0xc8] sm:$0xff]
      %v376 = vld [vmem:[%s309 + $0xd0] sm:$0xff]
      %v377 = vld [vmem:[%s309 + $0xd8] sm:$0xff]
      %v378 = vld [vmem:[%s309 + $0xe0] sm:$0xff]
      %v379 = vld [vmem:[%s309 + $0xe8] sm:$0xff]
      %v380 = vld [vmem:[%s309 + $0xf0] sm:$0xff]
      %v381 = vld [vmem:[%s309 + $0xf8] sm:$0xff]
      %s382 = smul.u32 %s22, 256
      %s383 = scalar_lea.vmem %s1, %s382
      %v384 = vld [vmem:[%s383] sm:$0xff]
      %v385 = vld [vmem:[%s383 + $0x8] sm:$0xff]
      %v386 = vld [vmem:[%s383 + $0x10] sm:$0xff]
      %v387 = vld [vmem:[%s383 + $0x18] sm:$0xff]
      %v388 = vld [vmem:[%s383 + $0x20] sm:$0xff]
      %v389 = vld [vmem:[%s383 + $0x28] sm:$0xff]
      %v390 = vld [vmem:[%s383 + $0x30] sm:$0xff]
      %v391 = vld [vmem:[%s383 + $0x38] sm:$0xff]
      %v392 = vld [vmem:[%s383 + $0x40] sm:$0xff]
      %v393 = vld [vmem:[%s383 + $0x48] sm:$0xff]
      %v394 = vld [vmem:[%s383 + $0x50] sm:$0xff]
      %v395 = vld [vmem:[%s383 + $0x58] sm:$0xff]
      %v396 = vld [vmem:[%s383 + $0x60] sm:$0xff]
      %v397 = vld [vmem:[%s383 + $0x68] sm:$0xff]
      %v398 = vld [vmem:[%s383 + $0x70] sm:$0xff]
      %v399 = vld [vmem:[%s383 + $0x78] sm:$0xff]
      %v400 = vld [vmem:[%s383 + $0x80] sm:$0xff]
      %v401 = vld [vmem:[%s383 + $0x88] sm:$0xff]
      %v402 = vld [vmem:[%s383 + $0x90] sm:$0xff]
      %v403 = vld [vmem:[%s383 + $0x98] sm:$0xff]
      %v404 = vld [vmem:[%s383 + $0xa0] sm:$0xff]
      %v405 = vld [vmem:[%s383 + $0xa8] sm:$0xff]
      %v406 = vld [vmem:[%s383 + $0xb0] sm:$0xff]
      %v407 = vld [vmem:[%s383 + $0xb8] sm:$0xff]
      %v408 = vld [vmem:[%s383 + $0xc0] sm:$0xff]
      %v409 = vld [vmem:[%s383 + $0xc8] sm:$0xff]
      %v410 = vld [vmem:[%s383 + $0xd0] sm:$0xff]
      %v411 = vld [vmem:[%s383 + $0xd8] sm:$0xff]
      %v412 = vld [vmem:[%s383 + $0xe0] sm:$0xff]
      %v413 = vld [vmem:[%s383 + $0xe8] sm:$0xff]
      %v414 = vld [vmem:[%s383 + $0xf0] sm:$0xff]
      %v415 = vld [vmem:[%s383 + $0xf8] sm:$0xff]
      %v416 = vld [vmem:[#allocation2] sm:$0xff]
      %v417 = vld [vmem:[#allocation2 + $0x8] sm:$0xff]
      %v418 = vld [vmem:[#allocation2 + $0x10] sm:$0xff]
      %v419 = vld [vmem:[#allocation2 + $0x18] sm:$0xff]
      %v420 = vld [vmem:[#allocation2 + $0x20] sm:$0xff]
      %v421 = vld [vmem:[#allocation2 + $0x28] sm:$0xff]
      %v422 = vld [vmem:[#allocation2 + $0x30] sm:$0xff]
      %v423 = vld [vmem:[#allocation2 + $0x38] sm:$0xff]
      %v424 = vld [vmem:[#allocation2 + $0x40] sm:$0xff]
      %v425 = vld [vmem:[#allocation2 + $0x48] sm:$0xff]
      %v426 = vld [vmem:[#allocation2 + $0x50] sm:$0xff]
      %v427 = vld [vmem:[#allocation2 + $0x58] sm:$0xff]
      %v428 = vld [vmem:[#allocation2 + $0x60] sm:$0xff]
      %v429 = vld [vmem:[#allocation2 + $0x68] sm:$0xff]
      %v430 = vld [vmem:[#allocation2 + $0x70] sm:$0xff]
      %v431 = vld [vmem:[#allocation2 + $0x78] sm:$0xff]
      %432 = vmatpush.msra.mxu0 %v399
      %433 = vmatpush.msra.mxu0 %v398
      %434 = vmatpush.msra.mxu0 %v397
      %435 = vmatpush.msra.mxu0 %v396
      %436 = vmatpush.msra.mxu0 %v395
      %437 = vmatpush.msra.mxu0 %v394
      %438 = vmatpush.msra.mxu0 %v393
      %439 = vmatpush.msra.mxu0 %v392
      %440 = vmatpush.msra.mxu0 %v391
      %441 = vmatpush.msra.mxu0 %v390
      %442 = vmatpush.msra.mxu0 %v389
      %443 = vmatpush.msra.mxu0 %v388
      %444 = vmatpush.msra.mxu0 %v387
      %445 = vmatpush.msra.mxu0 %v386
      %446 = vmatpush.msra.mxu0 %v385
      %447 = vmatpush.msra.mxu0 %v384
      %448 = vmatmul.f32.gmra.mxu0 %v350
      %v449 = vpop.f32.mrf.mxu0
      %v450 = vadd.f32 0.0, %v449
      %451 = vmatmul.f32.gmra.mxu0 %v352
      %v452 = vpop.f32.mrf.mxu0
      %v453 = vadd.f32 0.0, %v452
      %454 = vmatmul.f32.gmra.mxu0 %v354
      %v455 = vpop.f32.mrf.mxu0
      %v456 = vadd.f32 0.0, %v455
      %457 = vmatmul.f32.gmra.mxu0 %v356
      %v458 = vpop.f32.mrf.mxu0
      %v459 = vadd.f32 0.0, %v458
      %460 = vmatmul.f32.gmra.mxu0 %v358
      %v461 = vpop.f32.mrf.mxu0
      %v462 = vadd.f32 0.0, %v461
      %463 = vmatmul.f32.gmra.mxu0 %v360
      %v464 = vpop.f32.mrf.mxu0
      %v465 = vadd.f32 0.0, %v464
      %466 = vmatmul.f32.gmra.mxu0 %v362
      %v467 = vpop.f32.mrf.mxu0
      %v468 = vadd.f32 0.0, %v467
      %469 = vmatmul.f32.gmra.mxu0 %v364
      %v470 = vpop.f32.mrf.mxu0
      %v471 = vadd.f32 0.0, %v470
      %472 = vmatmul.f32.gmra.mxu0 %v366
      %v473 = vpop.f32.mrf.mxu0
      %v474 = vadd.f32 0.0, %v473
      %475 = vmatmul.f32.gmra.mxu0 %v368
      %v476 = vpop.f32.mrf.mxu0
      %v477 = vadd.f32 0.0, %v476
      %478 = vmatmul.f32.gmra.mxu0 %v370
      %v479 = vpop.f32.mrf.mxu0
      %v480 = vadd.f32 0.0, %v479
      %481 = vmatmul.f32.gmra.mxu0 %v372
      %v482 = vpop.f32.mrf.mxu0
      %v483 = vadd.f32 0.0, %v482
      %484 = vmatmul.f32.gmra.mxu0 %v374
      %v485 = vpop.f32.mrf.mxu0
      %v486 = vadd.f32 0.0, %v485
      %487 = vmatmul.f32.gmra.mxu0 %v376
      %v488 = vpop.f32.mrf.mxu0
      %v489 = vadd.f32 0.0, %v488
      %490 = vmatmul.f32.gmra.mxu0 %v378
      %v491 = vpop.f32.mrf.mxu0
      %v492 = vadd.f32 0.0, %v491
      %493 = vmatmul.f32.gmra.mxu0 %v380
      %v494 = vpop.f32.mrf.mxu0
      %v495 = vadd.f32 0.0, %v494
      %496 = vdwg.mxu0
      %497 = vmatpush.msra.mxu0 %v415
      %498 = vmatpush.msra.mxu0 %v414
      %499 = vmatpush.msra.mxu0 %v413
      %500 = vmatpush.msra.mxu0 %v412
      %501 = vmatpush.msra.mxu0 %v411
      %502 = vmatpush.msra.mxu0 %v410
      %503 = vmatpush.msra.mxu0 %v409
      %504 = vmatpush.msra.mxu0 %v408
      %505 = vmatpush.msra.mxu0 %v407
      %506 = vmatpush.msra.mxu0 %v406
      %507 = vmatpush.msra.mxu0 %v405
      %508 = vmatpush.msra.mxu0 %v404
      %509 = vmatpush.msra.mxu0 %v403
      %510 = vmatpush.msra.mxu0 %v402
      %511 = vmatpush.msra.mxu0 %v401
      %512 = vmatpush.msra.mxu0 %v400
      %513 = vmatmul.f32.gmra.mxu0 %v351
      %v514 = vpop.f32.mrf.mxu0
      %v515 = vadd.f32 %v450, %v514
      %516 = vmatmul.f32.gmra.mxu0 %v353
      %v517 = vpop.f32.mrf.mxu0
      %v518 = vadd.f32 %v453, %v517
      %519 = vmatmul.f32.gmra.mxu0 %v355
      %v520 = vpop.f32.mrf.mxu0
      %v521 = vadd.f32 %v456, %v520
      %522 = vmatmul.f32.gmra.mxu0 %v357
      %v523 = vpop.f32.mrf.mxu0
      %v524 = vadd.f32 %v459, %v523
      %525 = vmatmul.f32.gmra.mxu0 %v359
      %v526 = vpop.f32.mrf.mxu0
      %v527 = vadd.f32 %v462, %v526
      %528 = vmatmul.f32.gmra.mxu0 %v361
      %v529 = vpop.f32.mrf.mxu0
      %v530 = vadd.f32 %v465, %v529
      %531 = vmatmul.f32.gmra.mxu0 %v363
      %v532 = vpop.f32.mrf.mxu0
      %v533 = vadd.f32 %v468, %v532
      %534 = vmatmul.f32.gmra.mxu0 %v365
      %v535 = vpop.f32.mrf.mxu0
      %v536 = vadd.f32 %v471, %v535
      %537 = vmatmul.f32.gmra.mxu0 %v367
      %v538 = vpop.f32.mrf.mxu0
      %v539 = vadd.f32 %v474, %v538
      %540 = vmatmul.f32.gmra.mxu0 %v369
      %v541 = vpop.f32.mrf.mxu0
      %v542 = vadd.f32 %v477, %v541
      %543 = vmatmul.f32.gmra.mxu0 %v371
      %v544 = vpop.f32.mrf.mxu0
      %v545 = vadd.f32 %v480, %v544
      %546 = vmatmul.f32.gmra.mxu0 %v373
      %v547 = vpop.f32.mrf.mxu0
      %v548 = vadd.f32 %v483, %v547
      %549 = vmatmul.f32.gmra.mxu0 %v375
      %v550 = vpop.f32.mrf.mxu0
      %v551 = vadd.f32 %v486, %v550
      %552 = vmatmul.f32.gmra.mxu0 %v377
      %v553 = vpop.f32.mrf.mxu0
      %v554 = vadd.f32 %v489, %v553
      %555 = vmatmul.f32.gmra.mxu0 %v379
      %v556 = vpop.f32.mrf.mxu0
      %v557 = vadd.f32 %v492, %v556
      %558 = vmatmul.f32.gmra.mxu0 %v381
      %v559 = vpop.f32.mrf.mxu0
      %v560 = vadd.f32 %v495, %v559
      %561 = vdwg.mxu0
      %v562 = vadd.f32 %v416, %v515
      %v563 = vadd.f32 %v417, %v518
      %v564 = vadd.f32 %v418, %v521
      %v565 = vadd.f32 %v419, %v524
      %v566 = vadd.f32 %v420, %v527
      %v567 = vadd.f32 %v421, %v530
      %v568 = vadd.f32 %v422, %v533
      %v569 = vadd.f32 %v423, %v536
      %v570 = vadd.f32 %v424, %v539
      %v571 = vadd.f32 %v425, %v542
      %v572 = vadd.f32 %v426, %v545
      %v573 = vadd.f32 %v427, %v548
      %v574 = vadd.f32 %v428, %v551
      %v575 = vadd.f32 %v429, %v554
      %v576 = vadd.f32 %v430, %v557
      %v577 = vadd.f32 %v431, %v560
      %578 = vst [vmem:[#allocation2] sm:$0xff] %v562
      %579 = vst [vmem:[#allocation2 + $0x8] sm:$0xff] %v563
      %580 = vst [vmem:[#allocation2 + $0x10] sm:$0xff] %v564
      %581 = vst [vmem:[#allocation2 + $0x18] sm:$0xff] %v565
      %582 = vst [vmem:[#allocation2 + $0x20] sm:$0xff] %v566
      %583 = vst [vmem:[#allocation2 + $0x28] sm:$0xff] %v567
      %584 = vst [vmem:[#allocation2 + $0x30] sm:$0xff] %v568
      %585 = vst [vmem:[#allocation2 + $0x38] sm:$0xff] %v569
      %586 = vst [vmem:[#allocation2 + $0x40] sm:$0xff] %v570
      %587 = vst [vmem:[#allocation2 + $0x48] sm:$0xff] %v571
      %588 = vst [vmem:[#allocation2 + $0x50] sm:$0xff] %v572
      %589 = vst [vmem:[#allocation2 + $0x58] sm:$0xff] %v573
      %590 = vst [vmem:[#allocation2 + $0x60] sm:$0xff] %v574
      %591 = vst [vmem:[#allocation2 + $0x68] sm:$0xff] %v575
      %592 = vst [vmem:[#allocation2 + $0x70] sm:$0xff] %v576
      %593 = vst [vmem:[#allocation2 + $0x78] sm:$0xff] %v577
      // Predicated region
      $region49: #{jknet_forward.6} parent=43 // pred_check
        %p594 = pneg %p330
      $region50: #{jknet_forward.6} parent=43 // pred_check_branch
        %596 = sbr.rel (%p594) target = $region52
      $region51: #{jknet_forward.6} parent=43 // pred_region
        %v597 = vld [vmem:[%s316] sm:$0xff]
        %v598 = vld [vmem:[%s316 + $0x8] sm:$0xff]
        %v599 = vld [vmem:[%s316 + $0x10] sm:$0xff]
        %v600 = vld [vmem:[%s316 + $0x18] sm:$0xff]
        %v601 = vld [vmem:[%s316 + $0x20] sm:$0xff]
        %v602 = vld [vmem:[%s316 + $0x28] sm:$0xff]
        %v603 = vld [vmem:[%s316 + $0x30] sm:$0xff]
        %v604 = vld [vmem:[%s316 + $0x38] sm:$0xff]
        %v605 = vld [vmem:[%s316 + $0x40] sm:$0xff]
        %v606 = vld [vmem:[%s316 + $0x48] sm:$0xff]
        %v607 = vld [vmem:[%s316 + $0x50] sm:$0xff]
        %v608 = vld [vmem:[%s316 + $0x58] sm:$0xff]
        %v609 = vld [vmem:[%s316 + $0x60] sm:$0xff]
        %v610 = vld [vmem:[%s316 + $0x68] sm:$0xff]
        %v611 = vld [vmem:[%s316 + $0x70] sm:$0xff]
        %v612 = vld [vmem:[%s316 + $0x78] sm:$0xff]
        %v613 = vld [vmem:[#allocation2] sm:$0xff]
        %v614 = vld [vmem:[#allocation2 + $0x8] sm:$0xff]
        %v615 = vld [vmem:[#allocation2 + $0x10] sm:$0xff]
        %v616 = vld [vmem:[#allocation2 + $0x18] sm:$0xff]
        %v617 = vld [vmem:[#allocation2 + $0x20] sm:$0xff]
        %v618 = vld [vmem:[#allocation2 + $0x28] sm:$0xff]
        %v619 = vld [vmem:[#allocation2 + $0x30] sm:$0xff]
        %v620 = vld [vmem:[#allocation2 + $0x38] sm:$0xff]
        %v621 = vld [vmem:[#allocation2 + $0x40] sm:$0xff]
        %v622 = vld [vmem:[#allocation2 + $0x48] sm:$0xff]
        %v623 = vld [vmem:[#allocation2 + $0x50] sm:$0xff]
        %v624 = vld [vmem:[#allocation2 + $0x58] sm:$0xff]
        %v625 = vld [vmem:[#allocation2 + $0x60] sm:$0xff]
        %v626 = vld [vmem:[#allocation2 + $0x68] sm:$0xff]
        %v627 = vld [vmem:[#allocation2 + $0x70] sm:$0xff]
        %v628 = vld [vmem:[#allocation2 + $0x78] sm:$0xff]
        %630 = vset.pattern.permute.xlu0 0
        %631 = vperm.xlu0 %630, %v597
        %v632 = vpop.permute.xlu0 %631
        %635 = vset.pattern.permute.xlu0 0
        %636 = vperm.xlu0 %635, %v598
        %v637 = vpop.permute.xlu0 %636
        %640 = vset.pattern.permute.xlu0 0
        %641 = vperm.xlu0 %640, %v599
        %v642 = vpop.permute.xlu0 %641
        %645 = vset.pattern.permute.xlu0 0
        %646 = vperm.xlu0 %645, %v600
        %v647 = vpop.permute.xlu0 %646
        %650 = vset.pattern.permute.xlu0 0
        %651 = vperm.xlu0 %650, %v601
        %v652 = vpop.permute.xlu0 %651
        %655 = vset.pattern.permute.xlu0 0
        %656 = vperm.xlu0 %655, %v602
        %v657 = vpop.permute.xlu0 %656
        %660 = vset.pattern.permute.xlu0 0
        %661 = vperm.xlu0 %660, %v603
        %v662 = vpop.permute.xlu0 %661
        %665 = vset.pattern.permute.xlu0 0
        %666 = vperm.xlu0 %665, %v604
        %v667 = vpop.permute.xlu0 %666
        %670 = vset.pattern.permute.xlu0 0
        %671 = vperm.xlu0 %670, %v605
        %v672 = vpop.permute.xlu0 %671
        %675 = vset.pattern.permute.xlu0 0
        %676 = vperm.xlu0 %675, %v606
        %v677 = vpop.permute.xlu0 %676
        %680 = vset.pattern.permute.xlu0 0
        %681 = vperm.xlu0 %680, %v607
        %v682 = vpop.permute.xlu0 %681
        %685 = vset.pattern.permute.xlu0 0
        %686 = vperm.xlu0 %685, %v608
        %v687 = vpop.permute.xlu0 %686
        %690 = vset.pattern.permute.xlu0 0
        %691 = vperm.xlu0 %690, %v609
        %v692 = vpop.permute.xlu0 %691
        %695 = vset.pattern.permute.xlu0 0
        %696 = vperm.xlu0 %695, %v610
        %v697 = vpop.permute.xlu0 %696
        %700 = vset.pattern.permute.xlu0 0
        %701 = vperm.xlu0 %700, %v611
        %v702 = vpop.permute.xlu0 %701
        %705 = vset.pattern.permute.xlu0 0
        %706 = vperm.xlu0 %705, %v612
        %v707 = vpop.permute.xlu0 %706
        %v709 = vmul.f32 %v613, %v632
        %v710 = vmul.f32 %v614, %v637
        %v711 = vmul.f32 %v615, %v642
        %v712 = vmul.f32 %v616, %v647
        %v713 = vmul.f32 %v617, %v652
        %v714 = vmul.f32 %v618, %v657
        %v715 = vmul.f32 %v619, %v662
        %v716 = vmul.f32 %v620, %v667
        %v717 = vmul.f32 %v621, %v672
        %v718 = vmul.f32 %v622, %v677
        %v719 = vmul.f32 %v623, %v682
        %v720 = vmul.f32 %v624, %v687
        %v721 = vmul.f32 %v625, %v692
        %v722 = vmul.f32 %v626, %v697
        %v723 = vmul.f32 %v627, %v702
        %v724 = vmul.f32 %v628, %v707
        %v725 = vld [vmem:[%s3] sm:$0x1]
        %v727 = vperm.slane %v725, 0
        %v729 = vadd.f32 %v709, %v727
        %v730 = vadd.f32 %v710, %v727
        %v731 = vadd.f32 %v711, %v727
        %v732 = vadd.f32 %v712, %v727
        %v733 = vadd.f32 %v713, %v727
        %v734 = vadd.f32 %v714, %v727
        %v735 = vadd.f32 %v715, %v727
        %v736 = vadd.f32 %v716, %v727
        %v737 = vadd.f32 %v717, %v727
        %v738 = vadd.f32 %v718, %v727
        %v739 = vadd.f32 %v719, %v727
        %v740 = vadd.f32 %v720, %v727
        %v741 = vadd.f32 %v721, %v727
        %v742 = vadd.f32 %v722, %v727
        %v743 = vadd.f32 %v723, %v727
        %v744 = vadd.f32 %v724, %v727
        %v745 = vmax.f32 %v729, 0.0
        %v746 = vmax.f32 %v730, 0.0
        %v747 = vmax.f32 %v731, 0.0
        %v748 = vmax.f32 %v732, 0.0
        %v749 = vmax.f32 %v733, 0.0
        %v750 = vmax.f32 %v734, 0.0
        %v751 = vmax.f32 %v735, 0.0
        %v752 = vmax.f32 %v736, 0.0
        %v753 = vmax.f32 %v737, 0.0
        %v754 = vmax.f32 %v738, 0.0
        %v755 = vmax.f32 %v739, 0.0
        %v756 = vmax.f32 %v740, 0.0
        %v757 = vmax.f32 %v741, 0.0
        %v758 = vmax.f32 %v742, 0.0
        %v759 = vmax.f32 %v743, 0.0
        %v760 = vmax.f32 %v744, 0.0
        %v761 = vld [vmem:[%s4] sm:$0xff]
        %v762 = vld [vmem:[%s4 + $0x8] sm:$0xff]
        %v763 = vld [vmem:[%s4 + $0x10] sm:$0xff]
        %v764 = vld [vmem:[%s4 + $0x18] sm:$0xff]
        %v765 = vld [vmem:[%s4 + $0x20] sm:$0xff]
        %v766 = vld [vmem:[%s4 + $0x28] sm:$0xff]
        %v767 = vld [vmem:[%s4 + $0x30] sm:$0xff]
        %v768 = vld [vmem:[%s4 + $0x38] sm:$0xff]
        %v769 = vld [vmem:[%s4 + $0x40] sm:$0xff]
        %v770 = vld [vmem:[%s4 + $0x48] sm:$0xff]
        %v771 = vld [vmem:[%s4 + $0x50] sm:$0xff]
        %v772 = vld [vmem:[%s4 + $0x58] sm:$0xff]
        %v773 = vld [vmem:[%s4 + $0x60] sm:$0xff]
        %v774 = vld [vmem:[%s4 + $0x68] sm:$0xff]
        %v775 = vld [vmem:[%s4 + $0x70] sm:$0xff]
        %v776 = vld [vmem:[%s4 + $0x78] sm:$0xff]
        %777 = vmatpush.msra.mxu0 %v776
        %778 = vmatpush.msra.mxu0 %v775
        %779 = vmatpush.msra.mxu0 %v774
        %780 = vmatpush.msra.mxu0 %v773
        %781 = vmatpush.msra.mxu0 %v772
        %782 = vmatpush.msra.mxu0 %v771
        %783 = vmatpush.msra.mxu0 %v770
        %784 = vmatpush.msra.mxu0 %v769
        %785 = vmatpush.msra.mxu0 %v768
        %786 = vmatpush.msra.mxu0 %v767
        %787 = vmatpush.msra.mxu0 %v766
        %788 = vmatpush.msra.mxu0 %v765
        %789 = vmatpush.msra.mxu0 %v764
        %790 = vmatpush.msra.mxu0 %v763
        %791 = vmatpush.msra.mxu0 %v762
        %792 = vmatpush.msra.mxu0 %v761
        %793 = vmatmul.f32.gmra.mxu0 %v745
        %v794 = vpop.f32.mrf.mxu0
        %v795 = vadd.f32 0.0, %v794
        %796 = vmatmul.f32.gmra.mxu0 %v746
        %v797 = vpop.f32.mrf.mxu0
        %v798 = vadd.f32 0.0, %v797
        %799 = vmatmul.f32.gmra.mxu0 %v747
        %v800 = vpop.f32.mrf.mxu0
        %v801 = vadd.f32 0.0, %v800
        %802 = vmatmul.f32.gmra.mxu0 %v748
        %v803 = vpop.f32.mrf.mxu0
        %v804 = vadd.f32 0.0, %v803
        %805 = vmatmul.f32.gmra.mxu0 %v749
        %v806 = vpop.f32.mrf.mxu0
        %v807 = vadd.f32 0.0, %v806
        %808 = vmatmul.f32.gmra.mxu0 %v750
        %v809 = vpop.f32.mrf.mxu0
        %v810 = vadd.f32 0.0, %v809
        %811 = vmatmul.f32.gmra.mxu0 %v751
        %v812 = vpop.f32.mrf.mxu0
        %v813 = vadd.f32 0.0, %v812
        %814 = vmatmul.f32.gmra.mxu0 %v752
        %v815 = vpop.f32.mrf.mxu0
        %v816 = vadd.f32 0.0, %v815
        %817 = vmatmul.f32.gmra.mxu0 %v753
        %v818 = vpop.f32.mrf.mxu0
        %v819 = vadd.f32 0.0, %v818
        %820 = vmatmul.f32.gmra.mxu0 %v754
        %v821 = vpop.f32.mrf.mxu0
        %v822 = vadd.f32 0.0, %v821
        %823 = vmatmul.f32.gmra.mxu0 %v755
        %v824 = vpop.f32.mrf.mxu0
        %v825 = vadd.f32 0.0, %v824
        %826 = vmatmul.f32.gmra.mxu0 %v756
        %v827 = vpop.f32.mrf.mxu0
        %v828 = vadd.f32 0.0, %v827
        %829 = vmatmul.f32.gmra.mxu0 %v757
        %v830 = vpop.f32.mrf.mxu0
        %v831 = vadd.f32 0.0, %v830
        %832 = vmatmul.f32.gmra.mxu0 %v758
        %v833 = vpop.f32.mrf.mxu0
        %v834 = vadd.f32 0.0, %v833
        %835 = vmatmul.f32.gmra.mxu0 %v759
        %v836 = vpop.f32.mrf.mxu0
        %v837 = vadd.f32 0.0, %v836
        %838 = vmatmul.f32.gmra.mxu0 %v760
        %v839 = vpop.f32.mrf.mxu0
        %v840 = vadd.f32 0.0, %v839
        %841 = vdwg.mxu0
        %v842 = vld [vmem:[%s322] sm:$0xff]
        %v843 = vld [vmem:[%s322 + $0x8] sm:$0xff]
        %v844 = vld [vmem:[%s322 + $0x10] sm:$0xff]
        %v845 = vld [vmem:[%s322 + $0x18] sm:$0xff]
        %v846 = vld [vmem:[%s322 + $0x20] sm:$0xff]
        %v847 = vld [vmem:[%s322 + $0x28] sm:$0xff]
        %v848 = vld [vmem:[%s322 + $0x30] sm:$0xff]
        %v849 = vld [vmem:[%s322 + $0x38] sm:$0xff]
        %v850 = vld [vmem:[%s322 + $0x40] sm:$0xff]
        %v851 = vld [vmem:[%s322 + $0x48] sm:$0xff]
        %v852 = vld [vmem:[%s322 + $0x50] sm:$0xff]
        %v853 = vld [vmem:[%s322 + $0x58] sm:$0xff]
        %v854 = vld [vmem:[%s322 + $0x60] sm:$0xff]
        %v855 = vld [vmem:[%s322 + $0x68] sm:$0xff]
        %v856 = vld [vmem:[%s322 + $0x70] sm:$0xff]
        %v857 = vld [vmem:[%s322 + $0x78] sm:$0xff]
        %v858 = vadd.f32 %v842, %v795
        %v859 = vadd.f32 %v843, %v798
        %v860 = vadd.f32 %v844, %v801
        %v861 = vadd.f32 %v845, %v804
        %v862 = vadd.f32 %v846, %v807
        %v863 = vadd.f32 %v847, %v810
        %v864 = vadd.f32 %v848, %v813
        %v865 = vadd.f32 %v849, %v816
        %v866 = vadd.f32 %v850, %v819
        %v867 = vadd.f32 %v851, %v822
        %v868 = vadd.f32 %v852, %v825
        %v869 = vadd.f32 %v853, %v828
        %v870 = vadd.f32 %v854, %v831
        %v871 = vadd.f32 %v855, %v834
        %v872 = vadd.f32 %v856, %v837
        %v873 = vadd.f32 %v857, %v840
        %874 = vst [vmem:[%s328] sm:$0xff] %v858
        %875 = vst [vmem:[%s328 + $0x8] sm:$0xff] %v859
        %876 = vst [vmem:[%s328 + $0x10] sm:$0xff] %v860
        %877 = vst [vmem:[%s328 + $0x18] sm:$0xff] %v861
        %878 = vst [vmem:[%s328 + $0x20] sm:$0xff] %v862
        %879 = vst [vmem:[%s328 + $0x28] sm:$0xff] %v863
        %880 = vst [vmem:[%s328 + $0x30] sm:$0xff] %v864
        %881 = vst [vmem:[%s328 + $0x38] sm:$0xff] %v865
        %882 = vst [vmem:[%s328 + $0x40] sm:$0xff] %v866
        %883 = vst [vmem:[%s328 + $0x48] sm:$0xff] %v867
        %884 = vst [vmem:[%s328 + $0x50] sm:$0xff] %v868
        %885 = vst [vmem:[%s328 + $0x58] sm:$0xff] %v869
        %886 = vst [vmem:[%s328 + $0x60] sm:$0xff] %v870
        %887 = vst [vmem:[%s328 + $0x68] sm:$0xff] %v871
        %888 = vst [vmem:[%s328 + $0x70] sm:$0xff] %v872
        %889 = vst [vmem:[%s328 + $0x78] sm:$0xff] %v873
      $region52: #{jknet_forward.6} parent=43 // pred_fallthru
        _
      %s890 = smul.u32 16, %s21
      %p891 = scmp.lt.s32.totalorder %s890, 31
      %s892 = scalar_select %p891, %s890, 31
      %s893 = smul.addr %s892, 8
      %s894 = scalar_lea.vmem %s6, %s893
      // Predicated region
      $region53: #{jknet_forward.6} parent=43 // pred_check
        %p895 = pneg %p190
      $region54: #{jknet_forward.6} parent=43 // pred_check_branch
        %897 = sbr.rel (%p895) target = $region56
      $region55: #{jknet_forward.6} parent=43 // pred_region
        %s898 = smul.u32 16, %s21
      $region56: #{jknet_forward.6} parent=43 // pred_fallthru
        _
    $region44: #{jknet_forward.6} parent=5 // pred_fallthru
      _
    %p899 = scmp.le.s32.totalorder 2, %s12
    // Predicated region
    $region57: #{jknet_forward.6} parent=5 // pred_check
      %p900 = pneg %p899
    $region58: #{jknet_forward.6} parent=5 // pred_check_branch
      %902 = sbr.rel (%p900) target = $region60
    $region59: #{jknet_forward.6} parent=5 // pred_region
      %s903 = ssub.s32 %s12, 2
      // Predicated region
      $region61: #{jknet_forward.6} parent=59 // pred_check
        %p904 = pneg %p196
      $region62: #{jknet_forward.6} parent=59 // pred_check_branch
        %906 = sbr.rel (%p904) target = $region64
      $region63: #{jknet_forward.6} parent=59 // pred_region
        %s907 = smul.u32 16, %s23
        %p908 = scmp.lt.s32.totalorder %s907, 31
        %s909 = scalar_select %p908, %s907, 31
        %s910 = smul.addr %s909, 8
        %s911 = scalar_lea.vmem %s6, %s910
      $region64: #{jknet_forward.6} parent=59 // pred_fallthru
        _
    $region60: #{jknet_forward.6} parent=5 // pred_fallthru
      _
  $region6: #{jknet_forward.6} parent=0 // loop_footer
    %s16 = sadd.s32 1, %s12
  $region7: #{jknet_forward.6} parent=0 // loop_footer_branch
    %11 = sbr.rel target = $region3
  $region8: #{jknet_forward.6} parent=0 // loop_exit
    _

// kernel: jknet_forward.5
$region0: #{jknet_forward.5}
  #allocation0 [shape = 'u32[]', space=smem, size = 0x4, offset = 0x4, fixed_abs, tag = 'smem constant byte address 0x4 - core index']
  #allocation1 [shape = 'u32[72,128]{1,0:T(1,128)}', space=vmem, size = 0x9000, scoped, tag = 'internal scratch']
  #allocation2 [shape = 'f32[128,128]{1,0:T(8,128)}', space=vmem, size = 0x10000, scoped, tag = 'scratch operand']
  %s0 = inlined_call_operand.vmem [shape: f32[256,256], index: 0, kind: input, shape index: {}]
  %s1 = inlined_call_operand.vmem [shape: f32[256,128], index: 1, kind: input, shape index: {}]
  %s2 = inlined_call_operand.vmem [shape: f32[256,1], index: 2, kind: input, shape index: {}]
  %s3 = inlined_call_operand.vmem [shape: f32[1,128], index: 3, kind: input, shape index: {}]
  %s4 = inlined_call_operand.vmem [shape: f32[128,256], index: 4, kind: input, shape index: {}]
  %s5 = inlined_call_operand.vmem [shape: f32[256,128], index: 5, kind: input, shape index: {}, may-alias: {5,7}]
  %s6 = inlined_call_operand.vmem [shape: f32[256,128], index: 6, kind: output, shape index: {0}]
  %s7 = inlined_call_operand.vmem [shape: f32[256,128], index: 7, kind: output, shape index: {1}, may-alias: {5,7}]
  %8 = xla_tuple %s6, %s7
  %s9 = sld [smem:[#allocation0]]
  $region73: #{jknet_forward.5} parent=0
    _
  %s11 = ssub.s32 1, %s9
  %s12 = scalar_select 0, %s11, %s9
  loop: start=0, step=1, limit=4
  $region2: #{jknet_forward.5} parent=0 // loop_pre_header
    _
  $region3: #{jknet_forward.5} parent=0 // loop_header
    %s14 = sphi 0, %s18
    %p15 = scmp.ge.s32.totalorder %s14, 4
    %s21 = sphi 0, %s33
    %s22 = sphi 0, %s29
    %s23 = sphi 0, %s21
    %s24 = sphi 0, %s22
    %s25 = sphi 0, %s23
    %s26 = sphi 0, %s24
    %s38 = sphi 0, %s40
    %s41 = sphi 0, %s38
    %s42 = sphi 0, %s41
    %s58 = sphi 0, %s42
    %s62 = sphi 0, %s62
    %s64 = sphi 0, %s62
    %s65 = sphi 0, %s64
    %s79 = sphi 0, %s65
    %s85 = sphi 0, %s87
    %s88 = sphi 0, %s85
    %s89 = sphi 0, %s88
    %s105 = sphi 0, %s89
    %s109 = sphi 0, %s109
    %s111 = sphi 0, %s109
    %s112 = sphi 0, %s111
    %s126 = sphi 0, %s112
    %s130 = sphi 0, %s130
    %s132 = sphi 0, %s130
    %s133 = sphi 0, %s132
    %s147 = sphi 0, %s133
    %s153 = sphi 0, %s155
    %s156 = sphi 0, %s153
    %s157 = sphi 0, %s156
    %s173 = sphi 0, %s157
    %s179 = sphi 0, %s181
    %s182 = sphi 0, %s179
    %s183 = sphi 0, %s182
    %s199 = sphi 0, %s183
    %s205 = sphi 0, %s207
    %s208 = sphi 0, %s205
    %s209 = sphi 0, %s208
    %s225 = sphi 0, %s209
  $region4: #{jknet_forward.5} parent=0 // loop_header_branch
    %17 = sbr.rel (%p15) target = $region8
  $region5: #{jknet_forward.5} parent=0 // loop_body
    %s19 = ssub.s32 %s14, 1
    %s20 = ssub.s32 %s14, 2
    %s27 = sadd.s32 1, %s22
    %p28 = scmp.ge.s32.totalorder %s27, 1
    %s29 = scalar_select %p28, 0, %s27
    %s30 = sadd.s32 1, %s21
    %s31 = scalar_select %p28, %s30, %s21
    %p32 = scmp.ge.s32.totalorder %s31, 2
    %s33 = scalar_select %p32, 0, %s31
    %s34 = ssub.s32 %s21, %s33
    %s35 = ssub.s32 %s22, %s29
    %s36 = sor.u32 %s34, %s35
    %p37 = scmp.eq.s32.totalorder %s36, 0
    %s39 = sadd.s32 %s38, 1
    %s40 = scalar_select %p37, %s38, %s39
    %p43 = pneg %p37
    %p44 = scmp.eq.s32.totalorder %s14, 1
    %p45 = por %p43, %p44
    %p46 = scmp.ne.s32.totalorder %s38, %s41
    %p47 = scmp.eq.s32.totalorder %s14, 0
    %p48 = por %p46, %p47
    %p49 = scmp.ne.s32.totalorder %s38, %s41
    %p50 = scmp.eq.s32.totalorder %s19, 1
    %p51 = por %p49, %p50
    %p52 = scmp.ne.s32.totalorder %s41, %s42
    %p53 = scmp.eq.s32.totalorder %s19, 0
    %p54 = por %p52, %p53
    %p55 = scmp.ne.s32.totalorder %s41, %s42
    %p56 = scmp.eq.s32.totalorder %s20, 1
    %p57 = por %p55, %p56
    %p59 = scmp.ne.s32.totalorder %s42, %s58
    %p60 = scmp.eq.s32.totalorder %s20, 0
    %p61 = por %p59, %p60
    %s63 = sadd.s32 %s62, 1
    %p66 = scmp.eq.s32.totalorder %s14, 1
    %p67 = scmp.ne.s32.totalorder %s62, %s64
    %p68 = scmp.eq.s32.totalorder %s14, 0
    %p69 = por %p67, %p68
    %p70 = scmp.ne.s32.totalorder %s62, %s64
    %p71 = scmp.eq.s32.totalorder %s19, 1
    %p72 = por %p70, %p71
    %p73 = scmp.ne.s32.totalorder %s64, %s65
    %p74 = scmp.eq.s32.totalorder %s19, 0
    %p75 = por %p73, %p74
    %p76 = scmp.ne.s32.totalorder %s64, %s65
    %p77 = scmp.eq.s32.totalorder %s20, 1
    %p78 = por %p76, %p77
    %p80 = scmp.ne.s32.totalorder %s65, %s79
    %p81 = scmp.eq.s32.totalorder %s20, 0
    %p82 = por %p80, %p81
    %s83 = ssub.s32 %s21, %s33
    %p84 = scmp.eq.s32.totalorder %s83, 0
    %s86 = sadd.s32 %s85, 1
    %s87 = scalar_select %p84, %s85, %s86
    %p90 = pneg %p84
    %p91 = scmp.eq.s32.totalorder %s14, 1
    %p92 = por %p90, %p91
    %p93 = scmp.ne.s32.totalorder %s85, %s88
    %p94 = scmp.eq.s32.totalorder %s14, 0
    %p95 = por %p93, %p94
    %p96 = scmp.ne.s32.totalorder %s85, %s88
    %p97 = scmp.eq.s32.totalorder %s19, 1
    %p98 = por %p96, %p97
    %p99 = scmp.ne.s32.totalorder %s88, %s89
    %p100 = scmp.eq.s32.totalorder %s19, 0
    %p101 = por %p99, %p100
    %p102 = scmp.ne.s32.totalorder %s88, %s89
    %p103 = scmp.eq.s32.totalorder %s20, 1
    %p104 = por %p102, %p103
    %p106 = scmp.ne.s32.totalorder %s89, %s105
    %p107 = scmp.eq.s32.totalorder %s20, 0
    %p108 = por %p106, %p107
    %s110 = sadd.s32 %s109, 1
    %p113 = scmp.eq.s32.totalorder %s14, 1
    %p114 = scmp.ne.s32.totalorder %s109, %s111
    %p115 = scmp.eq.s32.totalorder %s14, 0
    %p116 = por %p114, %p115
    %p117 = scmp.ne.s32.totalorder %s109, %s111
    %p118 = scmp.eq.s32.totalorder %s19, 1
    %p119 = por %p117, %p118
    %p120 = scmp.ne.s32.totalorder %s111, %s112
    %p121 = scmp.eq.s32.totalorder %s19, 0
    %p122 = por %p120, %p121
    %p123 = scmp.ne.s32.totalorder %s111, %s112
    %p124 = scmp.eq.s32.totalorder %s20, 1
    %p125 = por %p123, %p124
    %p127 = scmp.ne.s32.totalorder %s112, %s126
    %p128 = scmp.eq.s32.totalorder %s20, 0
    %p129 = por %p127, %p128
    %s131 = sadd.s32 %s130, 1
    %p134 = scmp.eq.s32.totalorder %s14, 1
    %p135 = scmp.ne.s32.totalorder %s130, %s132
    %p136 = scmp.eq.s32.totalorder %s14, 0
    %p137 = por %p135, %p136
    %p138 = scmp.ne.s32.totalorder %s130, %s132
    %p139 = scmp.eq.s32.totalorder %s19, 1
    %p140 = por %p138, %p139
    %p141 = scmp.ne.s32.totalorder %s132, %s133
    %p142 = scmp.eq.s32.totalorder %s19, 0
    %p143 = por %p141, %p142
    %p144 = scmp.ne.s32.totalorder %s132, %s133
    %p145 = scmp.eq.s32.totalorder %s20, 1
    %p146 = por %p144, %p145
    %p148 = scmp.ne.s32.totalorder %s133, %s147
    %p149 = scmp.eq.s32.totalorder %s20, 0
    %p150 = por %p148, %p149
    %s151 = ssub.s32 %s21, %s33
    %p152 = scmp.eq.s32.totalorder %s151, 0
    %s154 = sadd.s32 %s153, 1
    %s155 = scalar_select %p152, %s153, %s154
    %p158 = pneg %p152
    %p159 = scmp.eq.s32.totalorder %s14, 1
    %p160 = por %p158, %p159
    %p161 = scmp.ne.s32.totalorder %s153, %s156
    %p162 = scmp.eq.s32.totalorder %s14, 0
    %p163 = por %p161, %p162
    %p164 = scmp.ne.s32.totalorder %s153, %s156
    %p165 = scmp.eq.s32.totalorder %s19, 1
    %p166 = por %p164, %p165
    %p167 = scmp.ne.s32.totalorder %s156, %s157
    %p168 = scmp.eq.s32.totalorder %s19, 0
    %p169 = por %p167, %p168
    %p170 = scmp.ne.s32.totalorder %s156, %s157
    %p171 = scmp.eq.s32.totalorder %s20, 1
    %p172 = por %p170, %p171
    %p174 = scmp.ne.s32.totalorder %s157, %s173
    %p175 = scmp.eq.s32.totalorder %s20, 0
    %p176 = por %p174, %p175
    %s177 = ssub.s32 %s21, %s33
    %p178 = scmp.eq.s32.totalorder %s177, 0
    %s180 = sadd.s32 %s179, 1
    %s181 = scalar_select %p178, %s179, %s180
    %p184 = pneg %p178
    %p185 = scmp.eq.s32.totalorder %s14, 1
    %p186 = por %p184, %p185
    %p187 = scmp.ne.s32.totalorder %s179, %s182
    %p188 = scmp.eq.s32.totalorder %s14, 0
    %p189 = por %p187, %p188
    %p190 = scmp.ne.s32.totalorder %s179, %s182
    %p191 = scmp.eq.s32.totalorder %s19, 1
    %p192 = por %p190, %p191
    %p193 = scmp.ne.s32.totalorder %s182, %s183
    %p194 = scmp.eq.s32.totalorder %s19, 0
    %p195 = por %p193, %p194
    %p196 = scmp.ne.s32.totalorder %s182, %s183
    %p197 = scmp.eq.s32.totalorder %s20, 1
    %p198 = por %p196, %p197
    %p200 = scmp.ne.s32.totalorder %s183, %s199
    %p201 = scmp.eq.s32.totalorder %s20, 0
    %p202 = por %p200, %p201
    %s203 = ssub.s32 %s21, %s33
    %p204 = scmp.eq.s32.totalorder %s203, 0
    %s206 = sadd.s32 %s205, 1
    %s207 = scalar_select %p204, %s205, %s206
    %p210 = pneg %p204
    %p211 = scmp.eq.s32.totalorder %s14, 1
    %p212 = por %p210, %p211
    %p213 = scmp.ne.s32.totalorder %s205, %s208
    %p214 = scmp.eq.s32.totalorder %s14, 0
    %p215 = por %p213, %p214
    %p216 = scmp.ne.s32.totalorder %s205, %s208
    %p217 = scmp.eq.s32.totalorder %s19, 1
    %p218 = por %p216, %p217
    %p219 = scmp.ne.s32.totalorder %s208, %s209
    %p220 = scmp.eq.s32.totalorder %s19, 0
    %p221 = por %p219, %p220
    %p222 = scmp.ne.s32.totalorder %s208, %s209
    %p223 = scmp.eq.s32.totalorder %s20, 1
    %p224 = por %p222, %p223
    %p226 = scmp.ne.s32.totalorder %s209, %s225
    %p227 = scmp.eq.s32.totalorder %s20, 0
    %p228 = por %p226, %p227
    %p229 = scmp.le.s32.totalorder 1, %s14
    %p230 = scmp.lt.s32.totalorder %s14, 3
    %p231 = pnand %p229, %p230
    %p232 = pneg %p231
    // Predicated region
    $region9: #{jknet_forward.5} parent=5 // pred_check
      _
    $region10: #{jknet_forward.5} parent=5 // pred_check_branch
      %234 = sbr.rel (%p231) target = $region12
    $region11: #{jknet_forward.5} parent=5 // pred_region
      %s235 = ssub.s32 %s14, 1
      // Predicated region
      $region13: #{jknet_forward.5} parent=11 // pred_check
        %p236 = pneg %p75
      $region14: #{jknet_forward.5} parent=11 // pred_check_branch
        %238 = sbr.rel (%p236) target = $region16
      $region15: #{jknet_forward.5} parent=11 // pred_region
        _
      $region16: #{jknet_forward.5} parent=11 // pred_fallthru
        _
      // Predicated region
      $region17: #{jknet_forward.5} parent=11 // pred_check
        %p239 = pneg %p122
      $region18: #{jknet_forward.5} parent=11 // pred_check_branch
        %241 = sbr.rel (%p239) target = $region20
      $region19: #{jknet_forward.5} parent=11 // pred_region
        _
      $region20: #{jknet_forward.5} parent=11 // pred_fallthru
        _
      // Predicated region
      $region21: #{jknet_forward.5} parent=11 // pred_check
        %p242 = pneg %p143
      $region22: #{jknet_forward.5} parent=11 // pred_check_branch
        %244 = sbr.rel (%p242) target = $region24
      $region23: #{jknet_forward.5} parent=11 // pred_region
        _
      $region24: #{jknet_forward.5} parent=11 // pred_fallthru
        _
    $region12: #{jknet_forward.5} parent=5 // pred_fallthru
      _
    %p245 = scmp.lt.s32.totalorder %s14, 2
    // Predicated region
    $region25: #{jknet_forward.5} parent=5 // pred_check
      %p246 = pneg %p245
    $region26: #{jknet_forward.5} parent=5 // pred_check_branch
      %248 = sbr.rel (%p246) target = $region28
    $region27: #{jknet_forward.5} parent=5 // pred_region
      // Predicated region
      $region29: #{jknet_forward.5} parent=27 // pred_check
        %p249 = pneg %p48
      $region30: #{jknet_forward.5} parent=27 // pred_check_branch
        %251 = sbr.rel (%p249) target = $region32
      $region31: #{jknet_forward.5} parent=27 // pred_region
        %s252 = smul.u32 16, %s21
        %s253 = smul.u32 2, %s22
        %p254 = scmp.lt.s32.totalorder %s252, 31
        %s255 = scalar_select %p254, %s252, 31
        %p256 = scmp.lt.s32.totalorder %s253, 1
        %s257 = scalar_select %p256, %s253, 1
        %s258 = smul.addr %s255, 2
        %s259 = sadd.s32 %s257, %s258
        %s260 = smul.addr %s259, 8
        %s261 = scalar_lea.vmem %s0, %s260
        %s262 = smul.u32 16, %s21
        %s263 = smul.u32 2, %s22
      $region32: #{jknet_forward.5} parent=27 // pred_fallthru
        _
      // Predicated region
      $region33: #{jknet_forward.5} parent=27 // pred_check
        %p264 = pneg %p95
      $region34: #{jknet_forward.5} parent=27 // pred_check_branch
        %266 = sbr.rel (%p264) target = $region36
      $region35: #{jknet_forward.5} parent=27 // pred_region
        %s267 = smul.u32 16, %s21
        %p268 = scmp.lt.s32.totalorder %s267, 31
        %s269 = scalar_select %p268, %s267, 31
        %s270 = smul.addr %s269, 8
        %s271 = scalar_lea.vmem %s2, %s270
        %s272 = smul.u32 16, %s21
      $region36: #{jknet_forward.5} parent=27 // pred_fallthru
        _
      // Predicated region
      $region37: #{jknet_forward.5} parent=27 // pred_check
        %p273 = pneg %p163
      $region38: #{jknet_forward.5} parent=27 // pred_check_branch
        %275 = sbr.rel (%p273) target = $region40
      $region39: #{jknet_forward.5} parent=27 // pred_region
        %s276 = smul.u32 16, %s21
        %p277 = scmp.lt.s32.totalorder %s276, 31
        %s278 = scalar_select %p277, %s276, 31
        %s279 = smul.addr %s278, 8
        %s280 = scalar_lea.vmem %s5, %s279
        %s281 = smul.u32 16, %s21
      $region40: #{jknet_forward.5} parent=27 // pred_fallthru
        _
    $region28: #{jknet_forward.5} parent=5 // pred_fallthru
      _
    %p282 = scmp.le.s32.totalorder 1, %s14
    %p283 = scmp.lt.s32.totalorder %s14, 3
    %p284 = pnand %p282, %p283
    %p285 = pneg %p284
    // Predicated region
    $region41: #{jknet_forward.5} parent=5 // pred_check
      _
    $region42: #{jknet_forward.5} parent=5 // pred_check_branch
      %287 = sbr.rel (%p284) target = $region44
    $region43: #{jknet_forward.5} parent=5 // pred_region
      %s288 = ssub.s32 %s14, 1
      %s289 = smul.u32 16, %s23
      %s290 = smul.u32 2, %s24
      %p291 = scmp.lt.s32.totalorder %s289, 31
      %s292 = scalar_select %p291, %s289, 31
      %p293 = scmp.lt.s32.totalorder %s290, 1
      %s294 = scalar_select %p293, %s290, 1
      %s295 = smul.addr %s292, 2
      %s296 = sadd.s32 %s294, %s295
      %s297 = smul.addr %s296, 8
      %s298 = scalar_lea.vmem %s0, %s297
      %p299 = pneg %p54
      %p300 = pneg %p51
      %p301 = pneg %p75
      %p302 = pneg %p72
      %s303 = smul.u32 16, %s23
      %p304 = scmp.lt.s32.totalorder %s303, 31
      %s305 = scalar_select %p304, %s303, 31
      %s306 = smul.addr %s305, 8
      %s307 = scalar_lea.vmem %s2, %s306
      %p308 = pneg %p101
      %p309 = pneg %p98
      %p310 = pneg %p122
      %p311 = pneg %p119
      %p312 = pneg %p143
      %p313 = pneg %p140
      %s314 = smul.u32 16, %s23
      %p315 = scmp.lt.s32.totalorder %s314, 31
      %s316 = scalar_select %p315, %s314, 31
      %s317 = smul.addr %s316, 8
      %s318 = scalar_lea.vmem %s5, %s317
      %p319 = pneg %p169
      %p320 = pneg %p166
      %p321 = pneg %p195
      %p322 = pneg %p192
      %s323 = smul.u32 16, %s23
      %p324 = scmp.lt.s32.totalorder %s323, 31
      %s325 = scalar_select %p324, %s323, 31
      %s326 = smul.addr %s325, 8
      %s327 = scalar_lea.vmem %s6, %s326
      %p328 = pneg %p221
      %p329 = pneg %p218
      %s330 = smul.u32 16, %s23
      %p331 = scmp.lt.s32.totalorder %s330, 31
      %s332 = scalar_select %p331, %s330, 31
      %s333 = smul.addr %s332, 8
      %s334 = scalar_lea.vmem %s7, %s333
      %s335 = smul.u32 16, %s23
      %s336 = smul.u32 2, %s24
      %p337 = scmp.lt.s32.totalorder %s335, 31
      %s338 = scalar_select %p337, %s335, 31
      %p339 = scmp.lt.s32.totalorder %s336, 1
      %s340 = scalar_select %p339, %s336, 1
      %s341 = smul.addr %s338, 2
      %s342 = sadd.s32 %s340, %s341
      %s343 = smul.addr %s342, 8
      %s344 = scalar_lea.vmem %s0, %s343
      %s345 = smul.u32 16, %s23
      %s346 = smul.u32 2, %s24
      %s347 = smul.u32 16, %s23
      %p348 = scmp.lt.s32.totalorder %s347, 31
      %s349 = scalar_select %p348, %s347, 31
      %s350 = smul.addr %s349, 8
      %s351 = scalar_lea.vmem %s2, %s350
      %s352 = smul.u32 16, %s23
      %s353 = smul.u32 16, %s23
      %p354 = scmp.lt.s32.totalorder %s353, 31
      %s355 = scalar_select %p354, %s353, 31
      %s356 = smul.addr %s355, 8
      %s357 = scalar_lea.vmem %s5, %s356
      %s358 = smul.u32 16, %s23
      %s359 = smul.u32 16, %s23
      %p360 = scmp.lt.s32.totalorder %s359, 31
      %s361 = scalar_select %p360, %s359, 31
      %s362 = smul.addr %s361, 8
      %s363 = scalar_lea.vmem %s6, %s362
      %s364 = smul.u32 16, %s23
      %s365 = smul.u32 16, %s23
      %p366 = scmp.lt.s32.totalorder %s365, 31
      %s367 = scalar_select %p366, %s365, 31
      %s368 = smul.addr %s367, 8
      %s369 = scalar_lea.vmem %s7, %s368
      %s370 = smul.u32 16, %s23
      %p371 = scmp.eq.s32.totalorder %s24, 0
      // Predicated region
      $region45: #{jknet_forward.5} parent=43 // pred_check
        %p372 = pneg %p371
      $region46: #{jknet_forward.5} parent=43 // pred_check_branch
        %374 = sbr.rel (%p372) target = $region48
      $region47: #{jknet_forward.5} parent=43 // pred_region
        %375 = vst [vmem:[#allocation2] sm:$0xff] 0.0
        %376 = vst [vmem:[#allocation2 + $0x8] sm:$0xff] 0.0
        %377 = vst [vmem:[#allocation2 + $0x10] sm:$0xff] 0.0
        %378 = vst [vmem:[#allocation2 + $0x18] sm:$0xff] 0.0
        %379 = vst [vmem:[#allocation2 + $0x20] sm:$0xff] 0.0
        %380 = vst [vmem:[#allocation2 + $0x28] sm:$0xff] 0.0
        %381 = vst [vmem:[#allocation2 + $0x30] sm:$0xff] 0.0
        %382 = vst [vmem:[#allocation2 + $0x38] sm:$0xff] 0.0
        %383 = vst [vmem:[#allocation2 + $0x40] sm:$0xff] 0.0
        %384 = vst [vmem:[#allocation2 + $0x48] sm:$0xff] 0.0
        %385 = vst [vmem:[#allocation2 + $0x50] sm:$0xff] 0.0
        %386 = vst [vmem:[#allocation2 + $0x58] sm:$0xff] 0.0
        %387 = vst [vmem:[#allocation2 + $0x60] sm:$0xff] 0.0
        %388 = vst [vmem:[#allocation2 + $0x68] sm:$0xff] 0.0
        %389 = vst [vmem:[#allocation2 + $0x70] sm:$0xff] 0.0
        %390 = vst [vmem:[#allocation2 + $0x78] sm:$0xff] 0.0
      $region48: #{jknet_forward.5} parent=43 // pred_fallthru
        _
      %v391 = vld [vmem:[%s344] sm:$0xff]
      %v392 = vld [vmem:[%s344 + $0x8] sm:$0xff]
      %v393 = vld [vmem:[%s344 + $0x10] sm:$0xff]
      %v394 = vld [vmem:[%s344 + $0x18] sm:$0xff]
      %v395 = vld [vmem:[%s344 + $0x20] sm:$0xff]
      %v396 = vld [vmem:[%s344 + $0x28] sm:$0xff]
      %v397 = vld [vmem:[%s344 + $0x30] sm:$0xff]
      %v398 = vld [vmem:[%s344 + $0x38] sm:$0xff]
      %v399 = vld [vmem:[%s344 + $0x40] sm:$0xff]
      %v400 = vld [vmem:[%s344 + $0x48] sm:$0xff]
      %v401 = vld [vmem:[%s344 + $0x50] sm:$0xff]
      %v402 = vld [vmem:[%s344 + $0x58] sm:$0xff]
      %v403 = vld [vmem:[%s344 + $0x60] sm:$0xff]
      %v404 = vld [vmem:[%s344 + $0x68] sm:$0xff]
      %v405 = vld [vmem:[%s344 + $0x70] sm:$0xff]
      %v406 = vld [vmem:[%s344 + $0x78] sm:$0xff]
      %v407 = vld [vmem:[%s344 + $0x80] sm:$0xff]
      %v408 = vld [vmem:[%s344 + $0x88] sm:$0xff]
      %v409 = vld [vmem:[%s344 + $0x90] sm:$0xff]
      %v410 = vld [vmem:[%s344 + $0x98] sm:$0xff]
      %v411 = vld [vmem:[%s344 + $0xa0] sm:$0xff]
      %v412 = vld [vmem:[%s344 + $0xa8] sm:$0xff]
      %v413 = vld [vmem:[%s344 + $0xb0] sm:$0xff]
      %v414 = vld [vmem:[%s344 + $0xb8] sm:$0xff]
      %v415 = vld [vmem:[%s344 + $0xc0] sm:$0xff]
      %v416 = vld [vmem:[%s344 + $0xc8] sm:$0xff]
      %v417 = vld [vmem:[%s344 + $0xd0] sm:$0xff]
      %v418 = vld [vmem:[%s344 + $0xd8] sm:$0xff]
      %v419 = vld [vmem:[%s344 + $0xe0] sm:$0xff]
      %v420 = vld [vmem:[%s344 + $0xe8] sm:$0xff]
      %v421 = vld [vmem:[%s344 + $0xf0] sm:$0xff]
      %v422 = vld [vmem:[%s344 + $0xf8] sm:$0xff]
      %s423 = smul.u32 %s24, 256
      %s424 = scalar_lea.vmem %s1, %s423
      %v425 = vld [vmem:[%s424] sm:$0xff]
      %v426 = vld [vmem:[%s424 + $0x8] sm:$0xff]
      %v427 = vld [vmem:[%s424 + $0x10] sm:$0xff]
      %v428 = vld [vmem:[%s424 + $0x18] sm:$0xff]
      %v429 = vld [vmem:[%s424 + $0x20] sm:$0xff]
      %v430 = vld [vmem:[%s424 + $0x28] sm:$0xff]
      %v431 = vld [vmem:[%s424 + $0x30] sm:$0xff]
      %v432 = vld [vmem:[%s424 + $0x38] sm:$0xff]
      %v433 = vld [vmem:[%s424 + $0x40] sm:$0xff]
      %v434 = vld [vmem:[%s424 + $0x48] sm:$0xff]
      %v435 = vld [vmem:[%s424 + $0x50] sm:$0xff]
      %v436 = vld [vmem:[%s424 + $0x58] sm:$0xff]
      %v437 = vld [vmem:[%s424 + $0x60] sm:$0xff]
      %v438 = vld [vmem:[%s424 + $0x68] sm:$0xff]
      %v439 = vld [vmem:[%s424 + $0x70] sm:$0xff]
      %v440 = vld [vmem:[%s424 + $0x78] sm:$0xff]
      %v441 = vld [vmem:[%s424 + $0x80] sm:$0xff]
      %v442 = vld [vmem:[%s424 + $0x88] sm:$0xff]
      %v443 = vld [vmem:[%s424 + $0x90] sm:$0xff]
      %v444 = vld [vmem:[%s424 + $0x98] sm:$0xff]
      %v445 = vld [vmem:[%s424 + $0xa0] sm:$0xff]
      %v446 = vld [vmem:[%s424 + $0xa8] sm:$0xff]
      %v447 = vld [vmem:[%s424 + $0xb0] sm:$0xff]
      %v448 = vld [vmem:[%s424 + $0xb8] sm:$0xff]
      %v449 = vld [vmem:[%s424 + $0xc0] sm:$0xff]
      %v450 = vld [vmem:[%s424 + $0xc8] sm:$0xff]
      %v451 = vld [vmem:[%s424 + $0xd0] sm:$0xff]
      %v452 = vld [vmem:[%s424 + $0xd8] sm:$0xff]
      %v453 = vld [vmem:[%s424 + $0xe0] sm:$0xff]
      %v454 = vld [vmem:[%s424 + $0xe8] sm:$0xff]
      %v455 = vld [vmem:[%s424 + $0xf0] sm:$0xff]
      %v456 = vld [vmem:[%s424 + $0xf8] sm:$0xff]
      %v457 = vld [vmem:[#allocation2] sm:$0xff]
      %v458 = vld [vmem:[#allocation2 + $0x8] sm:$0xff]
      %v459 = vld [vmem:[#allocation2 + $0x10] sm:$0xff]
      %v460 = vld [vmem:[#allocation2 + $0x18] sm:$0xff]
      %v461 = vld [vmem:[#allocation2 + $0x20] sm:$0xff]
      %v462 = vld [vmem:[#allocation2 + $0x28] sm:$0xff]
      %v463 = vld [vmem:[#allocation2 + $0x30] sm:$0xff]
      %v464 = vld [vmem:[#allocation2 + $0x38] sm:$0xff]
      %v465 = vld [vmem:[#allocation2 + $0x40] sm:$0xff]
      %v466 = vld [vmem:[#allocation2 + $0x48] sm:$0xff]
      %v467 = vld [vmem:[#allocation2 + $0x50] sm:$0xff]
      %v468 = vld [vmem:[#allocation2 + $0x58] sm:$0xff]
      %v469 = vld [vmem:[#allocation2 + $0x60] sm:$0xff]
      %v470 = vld [vmem:[#allocation2 + $0x68] sm:$0xff]
      %v471 = vld [vmem:[#allocation2 + $0x70] sm:$0xff]
      %v472 = vld [vmem:[#allocation2 + $0x78] sm:$0xff]
      %473 = vmatpush.msra.mxu0 %v440
      %474 = vmatpush.msra.mxu0 %v439
      %475 = vmatpush.msra.mxu0 %v438
      %476 = vmatpush.msra.mxu0 %v437
      %477 = vmatpush.msra.mxu0 %v436
      %478 = vmatpush.msra.mxu0 %v435
      %479 = vmatpush.msra.mxu0 %v434
      %480 = vmatpush.msra.mxu0 %v433
      %481 = vmatpush.msra.mxu0 %v432
      %482 = vmatpush.msra.mxu0 %v431
      %483 = vmatpush.msra.mxu0 %v430
      %484 = vmatpush.msra.mxu0 %v429
      %485 = vmatpush.msra.mxu0 %v428
      %486 = vmatpush.msra.mxu0 %v427
      %487 = vmatpush.msra.mxu0 %v426
      %488 = vmatpush.msra.mxu0 %v425
      %489 = vmatmul.f32.gmra.mxu0 %v391
      %v490 = vpop.f32.mrf.mxu0
      %v491 = vadd.f32 0.0, %v490
      %492 = vmatmul.f32.gmra.mxu0 %v393
      %v493 = vpop.f32.mrf.mxu0
      %v494 = vadd.f32 0.0, %v493
      %495 = vmatmul.f32.gmra.mxu0 %v395
      %v496 = vpop.f32.mrf.mxu0
      %v497 = vadd.f32 0.0, %v496
      %498 = vmatmul.f32.gmra.mxu0 %v397
      %v499 = vpop.f32.mrf.mxu0
      %v500 = vadd.f32 0.0, %v499
      %501 = vmatmul.f32.gmra.mxu0 %v399
      %v502 = vpop.f32.mrf.mxu0
      %v503 = vadd.f32 0.0, %v502
      %504 = vmatmul.f32.gmra.mxu0 %v401
      %v505 = vpop.f32.mrf.mxu0
      %v506 = vadd.f32 0.0, %v505
      %507 = vmatmul.f32.gmra.mxu0 %v403
      %v508 = vpop.f32.mrf.mxu0
      %v509 = vadd.f32 0.0, %v508
      %510 = vmatmul.f32.gmra.mxu0 %v405
      %v511 = vpop.f32.mrf.mxu0
      %v512 = vadd.f32 0.0, %v511
      %513 = vmatmul.f32.gmra.mxu0 %v407
      %v514 = vpop.f32.mrf.mxu0
      %v515 = vadd.f32 0.0, %v514
      %516 = vmatmul.f32.gmra.mxu0 %v409
      %v517 = vpop.f32.mrf.mxu0
      %v518 = vadd.f32 0.0, %v517
      %519 = vmatmul.f32.gmra.mxu0 %v411
      %v520 = vpop.f32.mrf.mxu0
      %v521 = vadd.f32 0.0, %v520
      %522 = vmatmul.f32.gmra.mxu0 %v413
      %v523 = vpop.f32.mrf.mxu0
      %v524 = vadd.f32 0.0, %v523
      %525 = vmatmul.f32.gmra.mxu0 %v415
      %v526 = vpop.f32.mrf.mxu0
      %v527 = vadd.f32 0.0, %v526
      %528 = vmatmul.f32.gmra.mxu0 %v417
      %v529 = vpop.f32.mrf.mxu0
      %v530 = vadd.f32 0.0, %v529
      %531 = vmatmul.f32.gmra.mxu0 %v419
      %v532 = vpop.f32.mrf.mxu0
      %v533 = vadd.f32 0.0, %v532
      %534 = vmatmul.f32.gmra.mxu0 %v421
      %v535 = vpop.f32.mrf.mxu0
      %v536 = vadd.f32 0.0, %v535
      %537 = vdwg.mxu0
      %538 = vmatpush.msra.mxu0 %v456
      %539 = vmatpush.msra.mxu0 %v455
      %540 = vmatpush.msra.mxu0 %v454
      %541 = vmatpush.msra.mxu0 %v453
      %542 = vmatpush.msra.mxu0 %v452
      %543 = vmatpush.msra.mxu0 %v451
      %544 = vmatpush.msra.mxu0 %v450
      %545 = vmatpush.msra.mxu0 %v449
      %546 = vmatpush.msra.mxu0 %v448
      %547 = vmatpush.msra.mxu0 %v447
      %548 = vmatpush.msra.mxu0 %v446
      %549 = vmatpush.msra.mxu0 %v445
      %550 = vmatpush.msra.mxu0 %v444
      %551 = vmatpush.msra.mxu0 %v443
      %552 = vmatpush.msra.mxu0 %v442
      %553 = vmatpush.msra.mxu0 %v441
      %554 = vmatmul.f32.gmra.mxu0 %v392
      %v555 = vpop.f32.mrf.mxu0
      %v556 = vadd.f32 %v491, %v555
      %557 = vmatmul.f32.gmra.mxu0 %v394
      %v558 = vpop.f32.mrf.mxu0
      %v559 = vadd.f32 %v494, %v558
      %560 = vmatmul.f32.gmra.mxu0 %v396
      %v561 = vpop.f32.mrf.mxu0
      %v562 = vadd.f32 %v497, %v561
      %563 = vmatmul.f32.gmra.mxu0 %v398
      %v564 = vpop.f32.mrf.mxu0
      %v565 = vadd.f32 %v500, %v564
      %566 = vmatmul.f32.gmra.mxu0 %v400
      %v567 = vpop.f32.mrf.mxu0
      %v568 = vadd.f32 %v503, %v567
      %569 = vmatmul.f32.gmra.mxu0 %v402
      %v570 = vpop.f32.mrf.mxu0
      %v571 = vadd.f32 %v506, %v570
      %572 = vmatmul.f32.gmra.mxu0 %v404
      %v573 = vpop.f32.mrf.mxu0
      %v574 = vadd.f32 %v509, %v573
      %575 = vmatmul.f32.gmra.mxu0 %v406
      %v576 = vpop.f32.mrf.mxu0
      %v577 = vadd.f32 %v512, %v576
      %578 = vmatmul.f32.gmra.mxu0 %v408
      %v579 = vpop.f32.mrf.mxu0
      %v580 = vadd.f32 %v515, %v579
      %581 = vmatmul.f32.gmra.mxu0 %v410
      %v582 = vpop.f32.mrf.mxu0
      %v583 = vadd.f32 %v518, %v582
      %584 = vmatmul.f32.gmra.mxu0 %v412
      %v585 = vpop.f32.mrf.mxu0
      %v586 = vadd.f32 %v521, %v585
      %587 = vmatmul.f32.gmra.mxu0 %v414
      %v588 = vpop.f32.mrf.mxu0
      %v589 = vadd.f32 %v524, %v588
      %590 = vmatmul.f32.gmra.mxu0 %v416
      %v591 = vpop.f32.mrf.mxu0
      %v592 = vadd.f32 %v527, %v591
      %593 = vmatmul.f32.gmra.mxu0 %v418
      %v594 = vpop.f32.mrf.mxu0
      %v595 = vadd.f32 %v530, %v594
      %596 = vmatmul.f32.gmra.mxu0 %v420
      %v597 = vpop.f32.mrf.mxu0
      %v598 = vadd.f32 %v533, %v597
      %599 = vmatmul.f32.gmra.mxu0 %v422
      %v600 = vpop.f32.mrf.mxu0
      %v601 = vadd.f32 %v536, %v600
      %602 = vdwg.mxu0
      %v603 = vadd.f32 %v457, %v556
      %v604 = vadd.f32 %v458, %v559
      %v605 = vadd.f32 %v459, %v562
      %v606 = vadd.f32 %v460, %v565
      %v607 = vadd.f32 %v461, %v568
      %v608 = vadd.f32 %v462, %v571
      %v609 = vadd.f32 %v463, %v574
      %v610 = vadd.f32 %v464, %v577
      %v611 = vadd.f32 %v465, %v580
      %v612 = vadd.f32 %v466, %v583
      %v613 = vadd.f32 %v467, %v586
      %v614 = vadd.f32 %v468, %v589
      %v615 = vadd.f32 %v469, %v592
      %v616 = vadd.f32 %v470, %v595
      %v617 = vadd.f32 %v471, %v598
      %v618 = vadd.f32 %v472, %v601
      %619 = vst [vmem:[#allocation2] sm:$0xff] %v603
      %620 = vst [vmem:[#allocation2 + $0x8] sm:$0xff] %v604
      %621 = vst [vmem:[#allocation2 + $0x10] sm:$0xff] %v605
      %622 = vst [vmem:[#allocation2 + $0x18] sm:$0xff] %v606
      %623 = vst [vmem:[#allocation2 + $0x20] sm:$0xff] %v607
      %624 = vst [vmem:[#allocation2 + $0x28] sm:$0xff] %v608
      %625 = vst [vmem:[#allocation2 + $0x30] sm:$0xff] %v609
      %626 = vst [vmem:[#allocation2 + $0x38] sm:$0xff] %v610
      %627 = vst [vmem:[#allocation2 + $0x40] sm:$0xff] %v611
      %628 = vst [vmem:[#allocation2 + $0x48] sm:$0xff] %v612
      %629 = vst [vmem:[#allocation2 + $0x50] sm:$0xff] %v613
      %630 = vst [vmem:[#allocation2 + $0x58] sm:$0xff] %v614
      %631 = vst [vmem:[#allocation2 + $0x60] sm:$0xff] %v615
      %632 = vst [vmem:[#allocation2 + $0x68] sm:$0xff] %v616
      %633 = vst [vmem:[#allocation2 + $0x70] sm:$0xff] %v617
      %634 = vst [vmem:[#allocation2 + $0x78] sm:$0xff] %v618
      // Predicated region
      $region49: #{jknet_forward.5} parent=43 // pred_check
        %p635 = pneg %p371
      $region50: #{jknet_forward.5} parent=43 // pred_check_branch
        %637 = sbr.rel (%p635) target = $region52
      $region51: #{jknet_forward.5} parent=43 // pred_region
        %v638 = vld [vmem:[%s351] sm:$0xff]
        %v639 = vld [vmem:[%s351 + $0x8] sm:$0xff]
        %v640 = vld [vmem:[%s351 + $0x10] sm:$0xff]
        %v641 = vld [vmem:[%s351 + $0x18] sm:$0xff]
        %v642 = vld [vmem:[%s351 + $0x20] sm:$0xff]
        %v643 = vld [vmem:[%s351 + $0x28] sm:$0xff]
        %v644 = vld [vmem:[%s351 + $0x30] sm:$0xff]
        %v645 = vld [vmem:[%s351 + $0x38] sm:$0xff]
        %v646 = vld [vmem:[%s351 + $0x40] sm:$0xff]
        %v647 = vld [vmem:[%s351 + $0x48] sm:$0xff]
        %v648 = vld [vmem:[%s351 + $0x50] sm:$0xff]
        %v649 = vld [vmem:[%s351 + $0x58] sm:$0xff]
        %v650 = vld [vmem:[%s351 + $0x60] sm:$0xff]
        %v651 = vld [vmem:[%s351 + $0x68] sm:$0xff]
        %v652 = vld [vmem:[%s351 + $0x70] sm:$0xff]
        %v653 = vld [vmem:[%s351 + $0x78] sm:$0xff]
        %v654 = vld [vmem:[#allocation2] sm:$0xff]
        %v655 = vld [vmem:[#allocation2 + $0x8] sm:$0xff]
        %v656 = vld [vmem:[#allocation2 + $0x10] sm:$0xff]
        %v657 = vld [vmem:[#allocation2 + $0x18] sm:$0xff]
        %v658 = vld [vmem:[#allocation2 + $0x20] sm:$0xff]
        %v659 = vld [vmem:[#allocation2 + $0x28] sm:$0xff]
        %v660 = vld [vmem:[#allocation2 + $0x30] sm:$0xff]
        %v661 = vld [vmem:[#allocation2 + $0x38] sm:$0xff]
        %v662 = vld [vmem:[#allocation2 + $0x40] sm:$0xff]
        %v663 = vld [vmem:[#allocation2 + $0x48] sm:$0xff]
        %v664 = vld [vmem:[#allocation2 + $0x50] sm:$0xff]
        %v665 = vld [vmem:[#allocation2 + $0x58] sm:$0xff]
        %v666 = vld [vmem:[#allocation2 + $0x60] sm:$0xff]
        %v667 = vld [vmem:[#allocation2 + $0x68] sm:$0xff]
        %v668 = vld [vmem:[#allocation2 + $0x70] sm:$0xff]
        %v669 = vld [vmem:[#allocation2 + $0x78] sm:$0xff]
        %671 = vset.pattern.permute.xlu0 0
        %672 = vperm.xlu0 %671, %v638
        %v673 = vpop.permute.xlu0 %672
        %676 = vset.pattern.permute.xlu0 0
        %677 = vperm.xlu0 %676, %v639
        %v678 = vpop.permute.xlu0 %677
        %681 = vset.pattern.permute.xlu0 0
        %682 = vperm.xlu0 %681, %v640
        %v683 = vpop.permute.xlu0 %682
        %686 = vset.pattern.permute.xlu0 0
        %687 = vperm.xlu0 %686, %v641
        %v688 = vpop.permute.xlu0 %687
        %691 = vset.pattern.permute.xlu0 0
        %692 = vperm.xlu0 %691, %v642
        %v693 = vpop.permute.xlu0 %692
        %696 = vset.pattern.permute.xlu0 0
        %697 = vperm.xlu0 %696, %v643
        %v698 = vpop.permute.xlu0 %697
        %701 = vset.pattern.permute.xlu0 0
        %702 = vperm.xlu0 %701, %v644
        %v703 = vpop.permute.xlu0 %702
        %706 = vset.pattern.permute.xlu0 0
        %707 = vperm.xlu0 %706, %v645
        %v708 = vpop.permute.xlu0 %707
        %711 = vset.pattern.permute.xlu0 0
        %712 = vperm.xlu0 %711, %v646
        %v713 = vpop.permute.xlu0 %712
        %716 = vset.pattern.permute.xlu0 0
        %717 = vperm.xlu0 %716, %v647
        %v718 = vpop.permute.xlu0 %717
        %721 = vset.pattern.permute.xlu0 0
        %722 = vperm.xlu0 %721, %v648
        %v723 = vpop.permute.xlu0 %722
        %726 = vset.pattern.permute.xlu0 0
        %727 = vperm.xlu0 %726, %v649
        %v728 = vpop.permute.xlu0 %727
        %731 = vset.pattern.permute.xlu0 0
        %732 = vperm.xlu0 %731, %v650
        %v733 = vpop.permute.xlu0 %732
        %736 = vset.pattern.permute.xlu0 0
        %737 = vperm.xlu0 %736, %v651
        %v738 = vpop.permute.xlu0 %737
        %741 = vset.pattern.permute.xlu0 0
        %742 = vperm.xlu0 %741, %v652
        %v743 = vpop.permute.xlu0 %742
        %746 = vset.pattern.permute.xlu0 0
        %747 = vperm.xlu0 %746, %v653
        %v748 = vpop.permute.xlu0 %747
        %v750 = vmul.f32 %v654, %v673
        %v751 = vmul.f32 %v655, %v678
        %v752 = vmul.f32 %v656, %v683
        %v753 = vmul.f32 %v657, %v688
        %v754 = vmul.f32 %v658, %v693
        %v755 = vmul.f32 %v659, %v698
        %v756 = vmul.f32 %v660, %v703
        %v757 = vmul.f32 %v661, %v708
        %v758 = vmul.f32 %v662, %v713
        %v759 = vmul.f32 %v663, %v718
        %v760 = vmul.f32 %v664, %v723
        %v761 = vmul.f32 %v665, %v728
        %v762 = vmul.f32 %v666, %v733
        %v763 = vmul.f32 %v667, %v738
        %v764 = vmul.f32 %v668, %v743
        %v765 = vmul.f32 %v669, %v748
        %v766 = vld [vmem:[%s3] sm:$0x1]
        %v768 = vperm.slane %v766, 0
        %v770 = vadd.f32 %v750, %v768
        %v771 = vadd.f32 %v751, %v768
        %v772 = vadd.f32 %v752, %v768
        %v773 = vadd.f32 %v753, %v768
        %v774 = vadd.f32 %v754, %v768
        %v775 = vadd.f32 %v755, %v768
        %v776 = vadd.f32 %v756, %v768
        %v777 = vadd.f32 %v757, %v768
        %v778 = vadd.f32 %v758, %v768
        %v779 = vadd.f32 %v759, %v768
        %v780 = vadd.f32 %v760, %v768
        %v781 = vadd.f32 %v761, %v768
        %v782 = vadd.f32 %v762, %v768
        %v783 = vadd.f32 %v763, %v768
        %v784 = vadd.f32 %v764, %v768
        %v785 = vadd.f32 %v765, %v768
        %v786 = vmax.f32 %v770, 0.0
        %v787 = vmax.f32 %v771, 0.0
        %v788 = vmax.f32 %v772, 0.0
        %v789 = vmax.f32 %v773, 0.0
        %v790 = vmax.f32 %v774, 0.0
        %v791 = vmax.f32 %v775, 0.0
        %v792 = vmax.f32 %v776, 0.0
        %v793 = vmax.f32 %v777, 0.0
        %v794 = vmax.f32 %v778, 0.0
        %v795 = vmax.f32 %v779, 0.0
        %v796 = vmax.f32 %v780, 0.0
        %v797 = vmax.f32 %v781, 0.0
        %v798 = vmax.f32 %v782, 0.0
        %v799 = vmax.f32 %v783, 0.0
        %v800 = vmax.f32 %v784, 0.0
        %v801 = vmax.f32 %v785, 0.0
        %v802 = vld [vmem:[%s4] sm:$0xff]
        %v803 = vld [vmem:[%s4 + $0x8] sm:$0xff]
        %v804 = vld [vmem:[%s4 + $0x10] sm:$0xff]
        %v805 = vld [vmem:[%s4 + $0x18] sm:$0xff]
        %v806 = vld [vmem:[%s4 + $0x20] sm:$0xff]
        %v807 = vld [vmem:[%s4 + $0x28] sm:$0xff]
        %v808 = vld [vmem:[%s4 + $0x30] sm:$0xff]
        %v809 = vld [vmem:[%s4 + $0x38] sm:$0xff]
        %v810 = vld [vmem:[%s4 + $0x40] sm:$0xff]
        %v811 = vld [vmem:[%s4 + $0x48] sm:$0xff]
        %v812 = vld [vmem:[%s4 + $0x50] sm:$0xff]
        %v813 = vld [vmem:[%s4 + $0x58] sm:$0xff]
        %v814 = vld [vmem:[%s4 + $0x60] sm:$0xff]
        %v815 = vld [vmem:[%s4 + $0x68] sm:$0xff]
        %v816 = vld [vmem:[%s4 + $0x70] sm:$0xff]
        %v817 = vld [vmem:[%s4 + $0x78] sm:$0xff]
        %v818 = vld [vmem:[%s4 + $0x80] sm:$0xff]
        %v819 = vld [vmem:[%s4 + $0x88] sm:$0xff]
        %v820 = vld [vmem:[%s4 + $0x90] sm:$0xff]
        %v821 = vld [vmem:[%s4 + $0x98] sm:$0xff]
        %v822 = vld [vmem:[%s4 + $0xa0] sm:$0xff]
        %v823 = vld [vmem:[%s4 + $0xa8] sm:$0xff]
        %v824 = vld [vmem:[%s4 + $0xb0] sm:$0xff]
        %v825 = vld [vmem:[%s4 + $0xb8] sm:$0xff]
        %v826 = vld [vmem:[%s4 + $0xc0] sm:$0xff]
        %v827 = vld [vmem:[%s4 + $0xc8] sm:$0xff]
        %v828 = vld [vmem:[%s4 + $0xd0] sm:$0xff]
        %v829 = vld [vmem:[%s4 + $0xd8] sm:$0xff]
        %v830 = vld [vmem:[%s4 + $0xe0] sm:$0xff]
        %v831 = vld [vmem:[%s4 + $0xe8] sm:$0xff]
        %v832 = vld [vmem:[%s4 + $0xf0] sm:$0xff]
        %v833 = vld [vmem:[%s4 + $0xf8] sm:$0xff]
        %834 = vmatpush.msra.mxu0 %v832
        %835 = vmatpush.msra.mxu0 %v830
        %836 = vmatpush.msra.mxu0 %v828
        %837 = vmatpush.msra.mxu0 %v826
        %838 = vmatpush.msra.mxu0 %v824
        %839 = vmatpush.msra.mxu0 %v822
        %840 = vmatpush.msra.mxu0 %v820
        %841 = vmatpush.msra.mxu0 %v818
        %842 = vmatpush.msra.mxu0 %v816
        %843 = vmatpush.msra.mxu0 %v814
        %844 = vmatpush.msra.mxu0 %v812
        %845 = vmatpush.msra.mxu0 %v810
        %846 = vmatpush.msra.mxu0 %v808
        %847 = vmatpush.msra.mxu0 %v806
        %848 = vmatpush.msra.mxu0 %v804
        %849 = vmatpush.msra.mxu0 %v802
        %850 = vmatmul.f32.gmra.mxu0 %v786
        %v851 = vpop.f32.mrf.mxu0
        %v852 = vadd.f32 0.0, %v851
        %853 = vmatmul.f32.gmra.mxu0 %v787
        %v854 = vpop.f32.mrf.mxu0
        %v855 = vadd.f32 0.0, %v854
        %856 = vmatmul.f32.gmra.mxu0 %v788
        %v857 = vpop.f32.mrf.mxu0
        %v858 = vadd.f32 0.0, %v857
        %859 = vmatmul.f32.gmra.mxu0 %v789
        %v860 = vpop.f32.mrf.mxu0
        %v861 = vadd.f32 0.0, %v860
        %862 = vmatmul.f32.gmra.mxu0 %v790
        %v863 = vpop.f32.mrf.mxu0
        %v864 = vadd.f32 0.0, %v863
        %865 = vmatmul.f32.gmra.mxu0 %v791
        %v866 = vpop.f32.mrf.mxu0
        %v867 = vadd.f32 0.0, %v866
        %868 = vmatmul.f32.gmra.mxu0 %v792
        %v869 = vpop.f32.mrf.mxu0
        %v870 = vadd.f32 0.0, %v869
        %871 = vmatmul.f32.gmra.mxu0 %v793
        %v872 = vpop.f32.mrf.mxu0
        %v873 = vadd.f32 0.0, %v872
        %874 = vmatmul.f32.gmra.mxu0 %v794
        %v875 = vpop.f32.mrf.mxu0
        %v876 = vadd.f32 0.0, %v875
        %877 = vmatmul.f32.gmra.mxu0 %v795
        %v878 = vpop.f32.mrf.mxu0
        %v879 = vadd.f32 0.0, %v878
        %880 = vmatmul.f32.gmra.mxu0 %v796
        %v881 = vpop.f32.mrf.mxu0
        %v882 = vadd.f32 0.0, %v881
        %883 = vmatmul.f32.gmra.mxu0 %v797
        %v884 = vpop.f32.mrf.mxu0
        %v885 = vadd.f32 0.0, %v884
        %886 = vmatmul.f32.gmra.mxu0 %v798
        %v887 = vpop.f32.mrf.mxu0
        %v888 = vadd.f32 0.0, %v887
        %889 = vmatmul.f32.gmra.mxu0 %v799
        %v890 = vpop.f32.mrf.mxu0
        %v891 = vadd.f32 0.0, %v890
        %892 = vmatmul.f32.gmra.mxu0 %v800
        %v893 = vpop.f32.mrf.mxu0
        %v894 = vadd.f32 0.0, %v893
        %895 = vmatmul.f32.gmra.mxu0 %v801
        %v896 = vpop.f32.mrf.mxu0
        %v897 = vadd.f32 0.0, %v896
        %898 = vdwg.mxu0
        %899 = vmatpush.msra.mxu0 %v833
        %900 = vmatpush.msra.mxu0 %v831
        %901 = vmatpush.msra.mxu0 %v829
        %902 = vmatpush.msra.mxu0 %v827
        %903 = vmatpush.msra.mxu0 %v825
        %904 = vmatpush.msra.mxu0 %v823
        %905 = vmatpush.msra.mxu0 %v821
        %906 = vmatpush.msra.mxu0 %v819
        %907 = vmatpush.msra.mxu0 %v817
        %908 = vmatpush.msra.mxu0 %v815
        %909 = vmatpush.msra.mxu0 %v813
        %910 = vmatpush.msra.mxu0 %v811
        %911 = vmatpush.msra.mxu0 %v809
        %912 = vmatpush.msra.mxu0 %v807
        %913 = vmatpush.msra.mxu0 %v805
        %914 = vmatpush.msra.mxu0 %v803
        %915 = vmatmul.f32.gmra.mxu0 %v786
        %v916 = vpop.f32.mrf.mxu0
        %v917 = vadd.f32 0.0, %v916
        %918 = vmatmul.f32.gmra.mxu0 %v787
        %v919 = vpop.f32.mrf.mxu0
        %v920 = vadd.f32 0.0, %v919
        %921 = vmatmul.f32.gmra.mxu0 %v788
        %v922 = vpop.f32.mrf.mxu0
        %v923 = vadd.f32 0.0, %v922
        %924 = vmatmul.f32.gmra.mxu0 %v789
        %v925 = vpop.f32.mrf.mxu0
        %v926 = vadd.f32 0.0, %v925
        %927 = vmatmul.f32.gmra.mxu0 %v790
        %v928 = vpop.f32.mrf.mxu0
        %v929 = vadd.f32 0.0, %v928
        %930 = vmatmul.f32.gmra.mxu0 %v791
        %v931 = vpop.f32.mrf.mxu0
        %v932 = vadd.f32 0.0, %v931
        %933 = vmatmul.f32.gmra.mxu0 %v792
        %v934 = vpop.f32.mrf.mxu0
        %v935 = vadd.f32 0.0, %v934
        %936 = vmatmul.f32.gmra.mxu0 %v793
        %v937 = vpop.f32.mrf.mxu0
        %v938 = vadd.f32 0.0, %v937
        %939 = vmatmul.f32.gmra.mxu0 %v794
        %v940 = vpop.f32.mrf.mxu0
        %v941 = vadd.f32 0.0, %v940
        %942 = vmatmul.f32.gmra.mxu0 %v795
        %v943 = vpop.f32.mrf.mxu0
        %v944 = vadd.f32 0.0, %v943
        %945 = vmatmul.f32.gmra.mxu0 %v796
        %v946 = vpop.f32.mrf.mxu0
        %v947 = vadd.f32 0.0, %v946
        %948 = vmatmul.f32.gmra.mxu0 %v797
        %v949 = vpop.f32.mrf.mxu0
        %v950 = vadd.f32 0.0, %v949
        %951 = vmatmul.f32.gmra.mxu0 %v798
        %v952 = vpop.f32.mrf.mxu0
        %v953 = vadd.f32 0.0, %v952
        %954 = vmatmul.f32.gmra.mxu0 %v799
        %v955 = vpop.f32.mrf.mxu0
        %v956 = vadd.f32 0.0, %v955
        %957 = vmatmul.f32.gmra.mxu0 %v800
        %v958 = vpop.f32.mrf.mxu0
        %v959 = vadd.f32 0.0, %v958
        %960 = vmatmul.f32.gmra.mxu0 %v801
        %v961 = vpop.f32.mrf.mxu0
        %v962 = vadd.f32 0.0, %v961
        %963 = vdwg.mxu0
        %v964 = vmul.f32 %v673, %v852
        %v965 = vmul.f32 %v678, %v855
        %v966 = vmul.f32 %v683, %v858
        %v967 = vmul.f32 %v688, %v861
        %v968 = vmul.f32 %v693, %v864
        %v969 = vmul.f32 %v698, %v867
        %v970 = vmul.f32 %v703, %v870
        %v971 = vmul.f32 %v708, %v873
        %v972 = vmul.f32 %v713, %v876
        %v973 = vmul.f32 %v718, %v879
        %v974 = vmul.f32 %v723, %v882
        %v975 = vmul.f32 %v728, %v885
        %v976 = vmul.f32 %v733, %v888
        %v977 = vmul.f32 %v738, %v891
        %v978 = vmul.f32 %v743, %v894
        %v979 = vmul.f32 %v748, %v897
        %980 = vst [vmem:[%s363] sm:$0xff] %v964
        %981 = vst [vmem:[%s363 + $0x8] sm:$0xff] %v965
        %982 = vst [vmem:[%s363 + $0x10] sm:$0xff] %v966
        %983 = vst [vmem:[%s363 + $0x18] sm:$0xff] %v967
        %984 = vst [vmem:[%s363 + $0x20] sm:$0xff] %v968
        %985 = vst [vmem:[%s363 + $0x28] sm:$0xff] %v969
        %986 = vst [vmem:[%s363 + $0x30] sm:$0xff] %v970
        %987 = vst [vmem:[%s363 + $0x38] sm:$0xff] %v971
        %988 = vst [vmem:[%s363 + $0x40] sm:$0xff] %v972
        %989 = vst [vmem:[%s363 + $0x48] sm:$0xff] %v973
        %990 = vst [vmem:[%s363 + $0x50] sm:$0xff] %v974
        %991 = vst [vmem:[%s363 + $0x58] sm:$0xff] %v975
        %992 = vst [vmem:[%s363 + $0x60] sm:$0xff] %v976
        %993 = vst [vmem:[%s363 + $0x68] sm:$0xff] %v977
        %994 = vst [vmem:[%s363 + $0x70] sm:$0xff] %v978
        %995 = vst [vmem:[%s363 + $0x78] sm:$0xff] %v979
        %v996 = vld [vmem:[%s357] sm:$0xff]
        %v997 = vld [vmem:[%s357 + $0x8] sm:$0xff]
        %v998 = vld [vmem:[%s357 + $0x10] sm:$0xff]
        %v999 = vld [vmem:[%s357 + $0x18] sm:$0xff]
        %v1000 = vld [vmem:[%s357 + $0x20] sm:$0xff]
        %v1001 = vld [vmem:[%s357 + $0x28] sm:$0xff]
        %v1002 = vld [vmem:[%s357 + $0x30] sm:$0xff]
        %v1003 = vld [vmem:[%s357 + $0x38] sm:$0xff]
        %v1004 = vld [vmem:[%s357 + $0x40] sm:$0xff]
        %v1005 = vld [vmem:[%s357 + $0x48] sm:$0xff]
        %v1006 = vld [vmem:[%s357 + $0x50] sm:$0xff]
        %v1007 = vld [vmem:[%s357 + $0x58] sm:$0xff]
        %v1008 = vld [vmem:[%s357 + $0x60] sm:$0xff]
        %v1009 = vld [vmem:[%s357 + $0x68] sm:$0xff]
        %v1010 = vld [vmem:[%s357 + $0x70] sm:$0xff]
        %v1011 = vld [vmem:[%s357 + $0x78] sm:$0xff]
        %v1012 = vadd.f32 %v996, %v917
        %v1013 = vadd.f32 %v997, %v920
        %v1014 = vadd.f32 %v998, %v923
        %v1015 = vadd.f32 %v999, %v926
        %v1016 = vadd.f32 %v1000, %v929
        %v1017 = vadd.f32 %v1001, %v932
        %v1018 = vadd.f32 %v1002, %v935
        %v1019 = vadd.f32 %v1003, %v938
        %v1020 = vadd.f32 %v1004, %v941
        %v1021 = vadd.f32 %v1005, %v944
        %v1022 = vadd.f32 %v1006, %v947
        %v1023 = vadd.f32 %v1007, %v950
        %v1024 = vadd.f32 %v1008, %v953
        %v1025 = vadd.f32 %v1009, %v956
        %v1026 = vadd.f32 %v1010, %v959
        %v1027 = vadd.f32 %v1011, %v962
        %1028 = vst [vmem:[%s369] sm:$0xff] %v1012
        %1029 = vst [vmem:[%s369 + $0x8] sm:$0xff] %v1013
        %1030 = vst [vmem:[%s369 + $0x10] sm:$0xff] %v1014
        %1031 = vst [vmem:[%s369 + $0x18] sm:$0xff] %v1015
        %1032 = vst [vmem:[%s369 + $0x20] sm:$0xff] %v1016
        %1033 = vst [vmem:[%s369 + $0x28] sm:$0xff] %v1017
        %1034 = vst [vmem:[%s369 + $0x30] sm:$0xff] %v1018
        %1035 = vst [vmem:[%s369 + $0x38] sm:$0xff] %v1019
        %1036 = vst [vmem:[%s369 + $0x40] sm:$0xff] %v1020
        %1037 = vst [vmem:[%s369 + $0x48] sm:$0xff] %v1021
        %1038 = vst [vmem:[%s369 + $0x50] sm:$0xff] %v1022
        %1039 = vst [vmem:[%s369 + $0x58] sm:$0xff] %v1023
        %1040 = vst [vmem:[%s369 + $0x60] sm:$0xff] %v1024
        %1041 = vst [vmem:[%s369 + $0x68] sm:$0xff] %v1025
        %1042 = vst [vmem:[%s369 + $0x70] sm:$0xff] %v1026
        %1043 = vst [vmem:[%s369 + $0x78] sm:$0xff] %v1027
      $region52: #{jknet_forward.5} parent=43 // pred_fallthru
        _
      %s1044 = smul.u32 16, %s23
      %p1045 = scmp.lt.s32.totalorder %s1044, 31
      %s1046 = scalar_select %p1045, %s1044, 31
      %s1047 = smul.addr %s1046, 8
      %s1048 = scalar_lea.vmem %s6, %s1047
      %s1049 = smul.u32 16, %s23
      %p1050 = scmp.lt.s32.totalorder %s1049, 31
      %s1051 = scalar_select %p1050, %s1049, 31
      %s1052 = smul.addr %s1051, 8
      %s1053 = scalar_lea.vmem %s7, %s1052
      // Predicated region
      $region53: #{jknet_forward.5} parent=43 // pred_check
        %p1054 = pneg %p192
      $region54: #{jknet_forward.5} parent=43 // pred_check_branch
        %1056 = sbr.rel (%p1054) target = $region56
      $region55: #{jknet_forward.5} parent=43 // pred_region
        %s1057 = smul.u32 16, %s23
      $region56: #{jknet_forward.5} parent=43 // pred_fallthru
        _
      // Predicated region
      $region57: #{jknet_forward.5} parent=43 // pred_check
        %p1058 = pneg %p218
      $region58: #{jknet_forward.5} parent=43 // pred_check_branch
        %1060 = sbr.rel (%p1058) target = $region60
      $region59: #{jknet_forward.5} parent=43 // pred_region
        %s1061 = smul.u32 16, %s23
      $region60: #{jknet_forward.5} parent=43 // pred_fallthru
        _
    $region44: #{jknet_forward.5} parent=5 // pred_fallthru
      _
    %p1062 = scmp.le.s32.totalorder 2, %s14
    // Predicated region
    $region61: #{jknet_forward.5} parent=5 // pred_check
      %p1063 = pneg %p1062
    $region62: #{jknet_forward.5} parent=5 // pred_check_branch
      %1065 = sbr.rel (%p1063) target = $region64
    $region63: #{jknet_forward.5} parent=5 // pred_region
      %s1066 = ssub.s32 %s14, 2
      // Predicated region
      $region65: #{jknet_forward.5} parent=63 // pred_check
        %p1067 = pneg %p198
      $region66: #{jknet_forward.5} parent=63 // pred_check_branch
        %1069 = sbr.rel (%p1067) target = $region68
      $region67: #{jknet_forward.5} parent=63 // pred_region
        %s1070 = smul.u32 16, %s25
        %p1071 = scmp.lt.s32.totalorder %s1070, 31
        %s1072 = scalar_select %p1071, %s1070, 31
        %s1073 = smul.addr %s1072, 8
        %s1074 = scalar_lea.vmem %s6, %s1073
      $region68: #{jknet_forward.5} parent=63 // pred_fallthru
        _
      // Predicated region
      $region69: #{jknet_forward.5} parent=63 // pred_check
        %p1075 = pneg %p224
      $region70: #{jknet_forward.5} parent=63 // pred_check_branch
        %1077 = sbr.rel (%p1075) target = $region72
      $region71: #{jknet_forward.5} parent=63 // pred_region
        %s1078 = smul.u32 16, %s25
        %p1079 = scmp.lt.s32.totalorder %s1078, 31
        %s1080 = scalar_select %p1079, %s1078, 31
        %s1081 = smul.addr %s1080, 8
        %s1082 = scalar_lea.vmem %s7, %s1081
      $region72: #{jknet_forward.5} parent=63 // pred_fallthru
        _
    $region64: #{jknet_forward.5} parent=5 // pred_fallthru
      _
  $region6: #{jknet_forward.5} parent=0 // loop_footer
    %s18 = sadd.s32 1, %s14
  $region7: #{jknet_forward.5} parent=0 // loop_footer_branch
    %13 = sbr.rel target = $region3
  $region8: #{jknet_forward.5} parent=0 // loop_exit
    _

// kernel: jknet_forward.4
$region0: #{jknet_forward.4}
  #allocation0 [shape = 'u32[]', space=smem, size = 0x4, offset = 0x4, fixed_abs, tag = 'smem constant byte address 0x4 - core index']
  #allocation1 [shape = 'u32[72,128]{1,0:T(1,128)}', space=vmem, size = 0x9000, scoped, tag = 'internal scratch']
  #allocation2 [shape = 'f32[128,128]{1,0:T(8,128)}', space=vmem, size = 0x10000, scoped, tag = 'scratch operand']
  %s0 = inlined_call_operand.vmem [shape: f32[256,256], index: 0, kind: input, shape index: {}]
  %s1 = inlined_call_operand.vmem [shape: f32[256,32], index: 1, kind: input, shape index: {}]
  %s2 = inlined_call_operand.vmem [shape: f32[32,128], index: 2, kind: input, shape index: {}]
  %s3 = inlined_call_operand.vmem [shape: f32[256,1], index: 3, kind: input, shape index: {}, may-alias: {3,4}]
  %s4 = inlined_call_operand.vmem [shape: f32[256,1], index: 4, kind: input, shape index: {}, may-alias: {3,4}]
  %s5 = inlined_call_operand.vmem [shape: f32[1,128], index: 5, kind: input, shape index: {}]
  %s6 = inlined_call_operand.vmem [shape: f32[128,256], index: 6, kind: input, shape index: {}]
  %s7 = inlined_call_operand.vmem [shape: f32[256,128], index: 7, kind: output, shape index: {0}]
  %s8 = inlined_call_operand.vmem [shape: f32[256,128], index: 8, kind: output, shape index: {1}]
  %9 = xla_tuple %s7, %s8
  %s10 = sld [smem:[#allocation0]]
  $region77: #{jknet_forward.4} parent=0
    _
  %s12 = ssub.s32 1, %s10
  %s13 = scalar_select 0, %s12, %s10
  loop: start=0, step=1, limit=4
  $region2: #{jknet_forward.4} parent=0 // loop_pre_header
    _
  $region3: #{jknet_forward.4} parent=0 // loop_header
    %s15 = sphi 0, %s19
    %p16 = scmp.ge.s32.totalorder %s15, 4
    %s22 = sphi 0, %s34
    %s23 = sphi 0, %s30
    %s24 = sphi 0, %s22
    %s25 = sphi 0, %s23
    %s26 = sphi 0, %s24
    %s27 = sphi 0, %s25
    %s39 = sphi 0, %s41
    %s42 = sphi 0, %s39
    %s43 = sphi 0, %s42
    %s59 = sphi 0, %s43
    %s65 = sphi 0, %s67
    %s68 = sphi 0, %s65
    %s69 = sphi 0, %s68
    %s85 = sphi 0, %s69
    %s89 = sphi 0, %s89
    %s91 = sphi 0, %s89
    %s92 = sphi 0, %s91
    %s106 = sphi 0, %s92
    %s112 = sphi 0, %s114
    %s115 = sphi 0, %s112
    %s116 = sphi 0, %s115
    %s132 = sphi 0, %s116
    %s138 = sphi 0, %s140
    %s141 = sphi 0, %s138
    %s142 = sphi 0, %s141
    %s158 = sphi 0, %s142
    %s162 = sphi 0, %s162
    %s164 = sphi 0, %s162
    %s165 = sphi 0, %s164
    %s179 = sphi 0, %s165
    %s183 = sphi 0, %s183
    %s185 = sphi 0, %s183
    %s186 = sphi 0, %s185
    %s200 = sphi 0, %s186
    %s206 = sphi 0, %s208
    %s209 = sphi 0, %s206
    %s210 = sphi 0, %s209
    %s226 = sphi 0, %s210
    %s232 = sphi 0, %s234
    %s235 = sphi 0, %s232
    %s236 = sphi 0, %s235
    %s252 = sphi 0, %s236
  $region4: #{jknet_forward.4} parent=0 // loop_header_branch
    %18 = sbr.rel (%p16) target = $region8
  $region5: #{jknet_forward.4} parent=0 // loop_body
    %s20 = ssub.s32 %s15, 1
    %s21 = ssub.s32 %s15, 2
    %s28 = sadd.s32 1, %s23
    %p29 = scmp.ge.s32.totalorder %s28, 1
    %s30 = scalar_select %p29, 0, %s28
    %s31 = sadd.s32 1, %s22
    %s32 = scalar_select %p29, %s31, %s22
    %p33 = scmp.ge.s32.totalorder %s32, 2
    %s34 = scalar_select %p33, 0, %s32
    %s35 = ssub.s32 %s22, %s34
    %s36 = ssub.s32 %s23, %s30
    %s37 = sor.u32 %s35, %s36
    %p38 = scmp.eq.s32.totalorder %s37, 0
    %s40 = sadd.s32 %s39, 1
    %s41 = scalar_select %p38, %s39, %s40
    %p44 = pneg %p38
    %p45 = scmp.eq.s32.totalorder %s15, 1
    %p46 = por %p44, %p45
    %p47 = scmp.ne.s32.totalorder %s39, %s42
    %p48 = scmp.eq.s32.totalorder %s15, 0
    %p49 = por %p47, %p48
    %p50 = scmp.ne.s32.totalorder %s39, %s42
    %p51 = scmp.eq.s32.totalorder %s20, 1
    %p52 = por %p50, %p51
    %p53 = scmp.ne.s32.totalorder %s42, %s43
    %p54 = scmp.eq.s32.totalorder %s20, 0
    %p55 = por %p53, %p54
    %p56 = scmp.ne.s32.totalorder %s42, %s43
    %p57 = scmp.eq.s32.totalorder %s21, 1
    %p58 = por %p56, %p57
    %p60 = scmp.ne.s32.totalorder %s43, %s59
    %p61 = scmp.eq.s32.totalorder %s21, 0
    %p62 = por %p60, %p61
    %s63 = ssub.s32 %s23, %s30
    %p64 = scmp.eq.s32.totalorder %s63, 0
    %s66 = sadd.s32 %s65, 1
    %s67 = scalar_select %p64, %s65, %s66
    %p70 = pneg %p64
    %p71 = scmp.eq.s32.totalorder %s15, 1
    %p72 = por %p70, %p71
    %p73 = scmp.ne.s32.totalorder %s65, %s68
    %p74 = scmp.eq.s32.totalorder %s15, 0
    %p75 = por %p73, %p74
    %p76 = scmp.ne.s32.totalorder %s65, %s68
    %p77 = scmp.eq.s32.totalorder %s20, 1
    %p78 = por %p76, %p77
    %p79 = scmp.ne.s32.totalorder %s68, %s69
    %p80 = scmp.eq.s32.totalorder %s20, 0
    %p81 = por %p79, %p80
    %p82 = scmp.ne.s32.totalorder %s68, %s69
    %p83 = scmp.eq.s32.totalorder %s21, 1
    %p84 = por %p82, %p83
    %p86 = scmp.ne.s32.totalorder %s69, %s85
    %p87 = scmp.eq.s32.totalorder %s21, 0
    %p88 = por %p86, %p87
    %s90 = sadd.s32 %s89, 1
    %p93 = scmp.eq.s32.totalorder %s15, 1
    %p94 = scmp.ne.s32.totalorder %s89, %s91
    %p95 = scmp.eq.s32.totalorder %s15, 0
    %p96 = por %p94, %p95
    %p97 = scmp.ne.s32.totalorder %s89, %s91
    %p98 = scmp.eq.s32.totalorder %s20, 1
    %p99 = por %p97, %p98
    %p100 = scmp.ne.s32.totalorder %s91, %s92
    %p101 = scmp.eq.s32.totalorder %s20, 0
    %p102 = por %p100, %p101
    %p103 = scmp.ne.s32.totalorder %s91, %s92
    %p104 = scmp.eq.s32.totalorder %s21, 1
    %p105 = por %p103, %p104
    %p107 = scmp.ne.s32.totalorder %s92, %s106
    %p108 = scmp.eq.s32.totalorder %s21, 0
    %p109 = por %p107, %p108
    %s110 = ssub.s32 %s23, %s30
    %p111 = scmp.eq.s32.totalorder %s110, 0
    %s113 = sadd.s32 %s112, 1
    %s114 = scalar_select %p111, %s112, %s113
    %p117 = pneg %p111
    %p118 = scmp.eq.s32.totalorder %s15, 1
    %p119 = por %p117, %p118
    %p120 = scmp.ne.s32.totalorder %s112, %s115
    %p121 = scmp.eq.s32.totalorder %s15, 0
    %p122 = por %p120, %p121
    %p123 = scmp.ne.s32.totalorder %s112, %s115
    %p124 = scmp.eq.s32.totalorder %s20, 1
    %p125 = por %p123, %p124
    %p126 = scmp.ne.s32.totalorder %s115, %s116
    %p127 = scmp.eq.s32.totalorder %s20, 0
    %p128 = por %p126, %p127
    %p129 = scmp.ne.s32.totalorder %s115, %s116
    %p130 = scmp.eq.s32.totalorder %s21, 1
    %p131 = por %p129, %p130
    %p133 = scmp.ne.s32.totalorder %s116, %s132
    %p134 = scmp.eq.s32.totalorder %s21, 0
    %p135 = por %p133, %p134
    %s136 = ssub.s32 %s22, %s34
    %p137 = scmp.eq.s32.totalorder %s136, 0
    %s139 = sadd.s32 %s138, 1
    %s140 = scalar_select %p137, %s138, %s139
    %p143 = pneg %p137
    %p144 = scmp.eq.s32.totalorder %s15, 1
    %p145 = por %p143, %p144
    %p146 = scmp.ne.s32.totalorder %s138, %s141
    %p147 = scmp.eq.s32.totalorder %s15, 0
    %p148 = por %p146, %p147
    %p149 = scmp.ne.s32.totalorder %s138, %s141
    %p150 = scmp.eq.s32.totalorder %s20, 1
    %p151 = por %p149, %p150
    %p152 = scmp.ne.s32.totalorder %s141, %s142
    %p153 = scmp.eq.s32.totalorder %s20, 0
    %p154 = por %p152, %p153
    %p155 = scmp.ne.s32.totalorder %s141, %s142
    %p156 = scmp.eq.s32.totalorder %s21, 1
    %p157 = por %p155, %p156
    %p159 = scmp.ne.s32.totalorder %s142, %s158
    %p160 = scmp.eq.s32.totalorder %s21, 0
    %p161 = por %p159, %p160
    %s163 = sadd.s32 %s162, 1
    %p166 = scmp.eq.s32.totalorder %s15, 1
    %p167 = scmp.ne.s32.totalorder %s162, %s164
    %p168 = scmp.eq.s32.totalorder %s15, 0
    %p169 = por %p167, %p168
    %p170 = scmp.ne.s32.totalorder %s162, %s164
    %p171 = scmp.eq.s32.totalorder %s20, 1
    %p172 = por %p170, %p171
    %p173 = scmp.ne.s32.totalorder %s164, %s165
    %p174 = scmp.eq.s32.totalorder %s20, 0
    %p175 = por %p173, %p174
    %p176 = scmp.ne.s32.totalorder %s164, %s165
    %p177 = scmp.eq.s32.totalorder %s21, 1
    %p178 = por %p176, %p177
    %p180 = scmp.ne.s32.totalorder %s165, %s179
    %p181 = scmp.eq.s32.totalorder %s21, 0
    %p182 = por %p180, %p181
    %s184 = sadd.s32 %s183, 1
    %p187 = scmp.eq.s32.totalorder %s15, 1
    %p188 = scmp.ne.s32.totalorder %s183, %s185
    %p189 = scmp.eq.s32.totalorder %s15, 0
    %p190 = por %p188, %p189
    %p191 = scmp.ne.s32.totalorder %s183, %s185
    %p192 = scmp.eq.s32.totalorder %s20, 1
    %p193 = por %p191, %p192
    %p194 = scmp.ne.s32.totalorder %s185, %s186
    %p195 = scmp.eq.s32.totalorder %s20, 0
    %p196 = por %p194, %p195
    %p197 = scmp.ne.s32.totalorder %s185, %s186
    %p198 = scmp.eq.s32.totalorder %s21, 1
    %p199 = por %p197, %p198
    %p201 = scmp.ne.s32.totalorder %s186, %s200
    %p202 = scmp.eq.s32.totalorder %s21, 0
    %p203 = por %p201, %p202
    %s204 = ssub.s32 %s22, %s34
    %p205 = scmp.eq.s32.totalorder %s204, 0
    %s207 = sadd.s32 %s206, 1
    %s208 = scalar_select %p205, %s206, %s207
    %p211 = pneg %p205
    %p212 = scmp.eq.s32.totalorder %s15, 1
    %p213 = por %p211, %p212
    %p214 = scmp.ne.s32.totalorder %s206, %s209
    %p215 = scmp.eq.s32.totalorder %s15, 0
    %p216 = por %p214, %p215
    %p217 = scmp.ne.s32.totalorder %s206, %s209
    %p218 = scmp.eq.s32.totalorder %s20, 1
    %p219 = por %p217, %p218
    %p220 = scmp.ne.s32.totalorder %s209, %s210
    %p221 = scmp.eq.s32.totalorder %s20, 0
    %p222 = por %p220, %p221
    %p223 = scmp.ne.s32.totalorder %s209, %s210
    %p224 = scmp.eq.s32.totalorder %s21, 1
    %p225 = por %p223, %p224
    %p227 = scmp.ne.s32.totalorder %s210, %s226
    %p228 = scmp.eq.s32.totalorder %s21, 0
    %p229 = por %p227, %p228
    %s230 = ssub.s32 %s22, %s34
    %p231 = scmp.eq.s32.totalorder %s230, 0
    %s233 = sadd.s32 %s232, 1
    %s234 = scalar_select %p231, %s232, %s233
    %p237 = pneg %p231
    %p238 = scmp.eq.s32.totalorder %s15, 1
    %p239 = por %p237, %p238
    %p240 = scmp.ne.s32.totalorder %s232, %s235
    %p241 = scmp.eq.s32.totalorder %s15, 0
    %p242 = por %p240, %p241
    %p243 = scmp.ne.s32.totalorder %s232, %s235
    %p244 = scmp.eq.s32.totalorder %s20, 1
    %p245 = por %p243, %p244
    %p246 = scmp.ne.s32.totalorder %s235, %s236
    %p247 = scmp.eq.s32.totalorder %s20, 0
    %p248 = por %p246, %p247
    %p249 = scmp.ne.s32.totalorder %s235, %s236
    %p250 = scmp.eq.s32.totalorder %s21, 1
    %p251 = por %p249, %p250
    %p253 = scmp.ne.s32.totalorder %s236, %s252
    %p254 = scmp.eq.s32.totalorder %s21, 0
    %p255 = por %p253, %p254
    %p256 = scmp.le.s32.totalorder 1, %s15
    %p257 = scmp.lt.s32.totalorder %s15, 3
    %p258 = pnand %p256, %p257
    %p259 = pneg %p258
    // Predicated region
    $region9: #{jknet_forward.4} parent=5 // pred_check
      _
    $region10: #{jknet_forward.4} parent=5 // pred_check_branch
      %261 = sbr.rel (%p258) target = $region12
    $region11: #{jknet_forward.4} parent=5 // pred_region
      %s262 = ssub.s32 %s15, 1
      // Predicated region
      $region13: #{jknet_forward.4} parent=11 // pred_check
        %p263 = pneg %p81
      $region14: #{jknet_forward.4} parent=11 // pred_check_branch
        %265 = sbr.rel (%p263) target = $region16
      $region15: #{jknet_forward.4} parent=11 // pred_region
        %s266 = smul.u32 32, %s25
        %p267 = scmp.lt.s32.totalorder %s266, 31
        %s268 = scalar_select %p267, %s266, 31
        %s269 = smul.addr %s268, 8
        %s270 = scalar_lea.vmem %s1, %s269
        %s271 = smul.u32 32, %s25
      $region16: #{jknet_forward.4} parent=11 // pred_fallthru
        _
      // Predicated region
      $region17: #{jknet_forward.4} parent=11 // pred_check
        %p272 = pneg %p102
      $region18: #{jknet_forward.4} parent=11 // pred_check_branch
        %274 = sbr.rel (%p272) target = $region20
      $region19: #{jknet_forward.4} parent=11 // pred_region
        _
      $region20: #{jknet_forward.4} parent=11 // pred_fallthru
        _
      // Predicated region
      $region21: #{jknet_forward.4} parent=11 // pred_check
        %p275 = pneg %p128
      $region22: #{jknet_forward.4} parent=11 // pred_check_branch
        %277 = sbr.rel (%p275) target = $region24
      $region23: #{jknet_forward.4} parent=11 // pred_region
        %s278 = smul.u32 32, %s25
        %p279 = scmp.lt.s32.totalorder %s278, 31
        %s280 = scalar_select %p279, %s278, 31
        %s281 = smul.addr %s280, 8
        %s282 = scalar_lea.vmem %s3, %s281
        %s283 = smul.u32 32, %s25
      $region24: #{jknet_forward.4} parent=11 // pred_fallthru
        _
      // Predicated region
      $region25: #{jknet_forward.4} parent=11 // pred_check
        %p284 = pneg %p175
      $region26: #{jknet_forward.4} parent=11 // pred_check_branch
        %286 = sbr.rel (%p284) target = $region28
      $region27: #{jknet_forward.4} parent=11 // pred_region
        _
      $region28: #{jknet_forward.4} parent=11 // pred_fallthru
        _
      // Predicated region
      $region29: #{jknet_forward.4} parent=11 // pred_check
        %p287 = pneg %p196
      $region30: #{jknet_forward.4} parent=11 // pred_check_branch
        %289 = sbr.rel (%p287) target = $region32
      $region31: #{jknet_forward.4} parent=11 // pred_region
        _
      $region32: #{jknet_forward.4} parent=11 // pred_fallthru
        _
    $region12: #{jknet_forward.4} parent=5 // pred_fallthru
      _
    %p290 = scmp.lt.s32.totalorder %s15, 2
    // Predicated region
    $region33: #{jknet_forward.4} parent=5 // pred_check
      %p291 = pneg %p290
    $region34: #{jknet_forward.4} parent=5 // pred_check_branch
      %293 = sbr.rel (%p291) target = $region36
    $region35: #{jknet_forward.4} parent=5 // pred_region
      // Predicated region
      $region37: #{jknet_forward.4} parent=35 // pred_check
        %p294 = pneg %p49
      $region38: #{jknet_forward.4} parent=35 // pred_check_branch
        %296 = sbr.rel (%p294) target = $region40
      $region39: #{jknet_forward.4} parent=35 // pred_region
        %s297 = smul.u32 16, %s22
        %s298 = smul.u32 2, %s23
        %p299 = scmp.lt.s32.totalorder %s297, 31
        %s300 = scalar_select %p299, %s297, 31
        %p301 = scmp.lt.s32.totalorder %s298, 1
        %s302 = scalar_select %p301, %s298, 1
        %s303 = smul.addr %s300, 2
        %s304 = sadd.s32 %s302, %s303
        %s305 = smul.addr %s304, 8
        %s306 = scalar_lea.vmem %s0, %s305
        %s307 = smul.u32 16, %s22
        %s308 = smul.u32 2, %s23
      $region40: #{jknet_forward.4} parent=35 // pred_fallthru
        _
      // Predicated region
      $region41: #{jknet_forward.4} parent=35 // pred_check
        %p309 = pneg %p148
      $region42: #{jknet_forward.4} parent=35 // pred_check_branch
        %311 = sbr.rel (%p309) target = $region44
      $region43: #{jknet_forward.4} parent=35 // pred_region
        %s312 = smul.u32 16, %s22
        %p313 = scmp.lt.s32.totalorder %s312, 31
        %s314 = scalar_select %p313, %s312, 31
        %s315 = smul.addr %s314, 8
        %s316 = scalar_lea.vmem %s4, %s315
        %s317 = smul.u32 16, %s22
      $region44: #{jknet_forward.4} parent=35 // pred_fallthru
        _
    $region36: #{jknet_forward.4} parent=5 // pred_fallthru
      _
    %p318 = scmp.le.s32.totalorder 1, %s15
    %p319 = scmp.lt.s32.totalorder %s15, 3
    %p320 = pnand %p318, %p319
    %p321 = pneg %p320
    // Predicated region
    $region45: #{jknet_forward.4} parent=5 // pred_check
      _
    $region46: #{jknet_forward.4} parent=5 // pred_check_branch
      %323 = sbr.rel (%p320) target = $region48
    $region47: #{jknet_forward.4} parent=5 // pred_region
      %s324 = ssub.s32 %s15, 1
      %s325 = smul.u32 16, %s24
      %s326 = smul.u32 2, %s25
      %p327 = scmp.lt.s32.totalorder %s325, 31
      %s328 = scalar_select %p327, %s325, 31
      %p329 = scmp.lt.s32.totalorder %s326, 1
      %s330 = scalar_select %p329, %s326, 1
      %s331 = smul.addr %s328, 2
      %s332 = sadd.s32 %s330, %s331
      %s333 = smul.addr %s332, 8
      %s334 = scalar_lea.vmem %s0, %s333
      %p335 = pneg %p55
      %p336 = pneg %p52
      %s337 = smul.u32 32, %s25
      %p338 = scmp.lt.s32.totalorder %s337, 31
      %s339 = scalar_select %p338, %s337, 31
      %s340 = smul.addr %s339, 8
      %s341 = scalar_lea.vmem %s1, %s340
      %p342 = pneg %p81
      %p343 = pneg %p78
      %p344 = pneg %p102
      %p345 = pneg %p99
      %s346 = smul.u32 32, %s25
      %p347 = scmp.lt.s32.totalorder %s346, 31
      %s348 = scalar_select %p347, %s346, 31
      %s349 = smul.addr %s348, 8
      %s350 = scalar_lea.vmem %s3, %s349
      %p351 = pneg %p128
      %p352 = pneg %p125
      %s353 = smul.u32 16, %s24
      %p354 = scmp.lt.s32.totalorder %s353, 31
      %s355 = scalar_select %p354, %s353, 31
      %s356 = smul.addr %s355, 8
      %s357 = scalar_lea.vmem %s4, %s356
      %p358 = pneg %p154
      %p359 = pneg %p151
      %p360 = pneg %p175
      %p361 = pneg %p172
      %p362 = pneg %p196
      %p363 = pneg %p193
      %p364 = pneg %p222
      %p365 = pneg %p219
      %s366 = smul.u32 16, %s24
      %p367 = scmp.lt.s32.totalorder %s366, 31
      %s368 = scalar_select %p367, %s366, 31
      %s369 = smul.addr %s368, 8
      %s370 = scalar_lea.vmem %s7, %s369
      %p371 = pneg %p248
      %p372 = pneg %p245
      %s373 = smul.u32 16, %s24
      %p374 = scmp.lt.s32.totalorder %s373, 31
      %s375 = scalar_select %p374, %s373, 31
      %s376 = smul.addr %s375, 8
      %s377 = scalar_lea.vmem %s8, %s376
      %s378 = smul.u32 16, %s24
      %s379 = smul.u32 2, %s25
      %p380 = scmp.lt.s32.totalorder %s378, 31
      %s381 = scalar_select %p380, %s378, 31
      %p382 = scmp.lt.s32.totalorder %s379, 1
      %s383 = scalar_select %p382, %s379, 1
      %s384 = smul.addr %s381, 2
      %s385 = sadd.s32 %s383, %s384
      %s386 = smul.addr %s385, 8
      %s387 = scalar_lea.vmem %s0, %s386
      %s388 = smul.u32 16, %s24
      %s389 = smul.u32 2, %s25
      %s390 = smul.u32 32, %s25
      %p391 = scmp.lt.s32.totalorder %s390, 31
      %s392 = scalar_select %p391, %s390, 31
      %s393 = smul.addr %s392, 8
      %s394 = scalar_lea.vmem %s1, %s393
      %s395 = smul.u32 32, %s25
      %s396 = smul.u32 32, %s25
      %p397 = scmp.lt.s32.totalorder %s396, 31
      %s398 = scalar_select %p397, %s396, 31
      %s399 = smul.addr %s398, 8
      %s400 = scalar_lea.vmem %s3, %s399
      %s401 = smul.u32 32, %s25
      %s402 = smul.u32 16, %s24
      %p403 = scmp.lt.s32.totalorder %s402, 31
      %s404 = scalar_select %p403, %s402, 31
      %s405 = smul.addr %s404, 8
      %s406 = scalar_lea.vmem %s4, %s405
      %s407 = smul.u32 16, %s24
      %s408 = smul.u32 16, %s24
      %p409 = scmp.lt.s32.totalorder %s408, 31
      %s410 = scalar_select %p409, %s408, 31
      %s411 = smul.addr %s410, 8
      %s412 = scalar_lea.vmem %s7, %s411
      %s413 = smul.u32 16, %s24
      %s414 = smul.u32 16, %s24
      %p415 = scmp.lt.s32.totalorder %s414, 31
      %s416 = scalar_select %p415, %s414, 31
      %s417 = smul.addr %s416, 8
      %s418 = scalar_lea.vmem %s8, %s417
      %s419 = smul.u32 16, %s24
      %p420 = scmp.eq.s32.totalorder %s25, 0
      // Predicated region
      $region49: #{jknet_forward.4} parent=47 // pred_check
        %p421 = pneg %p420
      $region50: #{jknet_forward.4} parent=47 // pred_check_branch
        %423 = sbr.rel (%p421) target = $region52
      $region51: #{jknet_forward.4} parent=47 // pred_region
        %424 = vst [vmem:[#allocation2] sm:$0xff] 0.0
        %425 = vst [vmem:[#allocation2 + $0x8] sm:$0xff] 0.0
        %426 = vst [vmem:[#allocation2 + $0x10] sm:$0xff] 0.0
        %427 = vst [vmem:[#allocation2 + $0x18] sm:$0xff] 0.0
        %428 = vst [vmem:[#allocation2 + $0x20] sm:$0xff] 0.0
        %429 = vst [vmem:[#allocation2 + $0x28] sm:$0xff] 0.0
        %430 = vst [vmem:[#allocation2 + $0x30] sm:$0xff] 0.0
        %431 = vst [vmem:[#allocation2 + $0x38] sm:$0xff] 0.0
        %432 = vst [vmem:[#allocation2 + $0x40] sm:$0xff] 0.0
        %433 = vst [vmem:[#allocation2 + $0x48] sm:$0xff] 0.0
        %434 = vst [vmem:[#allocation2 + $0x50] sm:$0xff] 0.0
        %435 = vst [vmem:[#allocation2 + $0x58] sm:$0xff] 0.0
        %436 = vst [vmem:[#allocation2 + $0x60] sm:$0xff] 0.0
        %437 = vst [vmem:[#allocation2 + $0x68] sm:$0xff] 0.0
        %438 = vst [vmem:[#allocation2 + $0x70] sm:$0xff] 0.0
        %439 = vst [vmem:[#allocation2 + $0x78] sm:$0xff] 0.0
      $region52: #{jknet_forward.4} parent=47 // pred_fallthru
        _
      %v440 = vld [vmem:[%s387] sm:$0xff]
      %v441 = vld [vmem:[%s387 + $0x8] sm:$0xff]
      %v442 = vld [vmem:[%s387 + $0x10] sm:$0xff]
      %v443 = vld [vmem:[%s387 + $0x18] sm:$0xff]
      %v444 = vld [vmem:[%s387 + $0x20] sm:$0xff]
      %v445 = vld [vmem:[%s387 + $0x28] sm:$0xff]
      %v446 = vld [vmem:[%s387 + $0x30] sm:$0xff]
      %v447 = vld [vmem:[%s387 + $0x38] sm:$0xff]
      %v448 = vld [vmem:[%s387 + $0x40] sm:$0xff]
      %v449 = vld [vmem:[%s387 + $0x48] sm:$0xff]
      %v450 = vld [vmem:[%s387 + $0x50] sm:$0xff]
      %v451 = vld [vmem:[%s387 + $0x58] sm:$0xff]
      %v452 = vld [vmem:[%s387 + $0x60] sm:$0xff]
      %v453 = vld [vmem:[%s387 + $0x68] sm:$0xff]
      %v454 = vld [vmem:[%s387 + $0x70] sm:$0xff]
      %v455 = vld [vmem:[%s387 + $0x78] sm:$0xff]
      %v456 = vld [vmem:[%s387 + $0x80] sm:$0xff]
      %v457 = vld [vmem:[%s387 + $0x88] sm:$0xff]
      %v458 = vld [vmem:[%s387 + $0x90] sm:$0xff]
      %v459 = vld [vmem:[%s387 + $0x98] sm:$0xff]
      %v460 = vld [vmem:[%s387 + $0xa0] sm:$0xff]
      %v461 = vld [vmem:[%s387 + $0xa8] sm:$0xff]
      %v462 = vld [vmem:[%s387 + $0xb0] sm:$0xff]
      %v463 = vld [vmem:[%s387 + $0xb8] sm:$0xff]
      %v464 = vld [vmem:[%s387 + $0xc0] sm:$0xff]
      %v465 = vld [vmem:[%s387 + $0xc8] sm:$0xff]
      %v466 = vld [vmem:[%s387 + $0xd0] sm:$0xff]
      %v467 = vld [vmem:[%s387 + $0xd8] sm:$0xff]
      %v468 = vld [vmem:[%s387 + $0xe0] sm:$0xff]
      %v469 = vld [vmem:[%s387 + $0xe8] sm:$0xff]
      %v470 = vld [vmem:[%s387 + $0xf0] sm:$0xff]
      %v471 = vld [vmem:[%s387 + $0xf8] sm:$0xff]
      %v472 = vld [vmem:[%s394] sm:$0xff]
      %v473 = vld [vmem:[%s394 + $0x8] sm:$0xff]
      %v474 = vld [vmem:[%s394 + $0x10] sm:$0xff]
      %v475 = vld [vmem:[%s394 + $0x18] sm:$0xff]
      %v476 = vld [vmem:[%s394 + $0x20] sm:$0xff]
      %v477 = vld [vmem:[%s394 + $0x28] sm:$0xff]
      %v478 = vld [vmem:[%s394 + $0x30] sm:$0xff]
      %v479 = vld [vmem:[%s394 + $0x38] sm:$0xff]
      %v480 = vld [vmem:[%s394 + $0x40] sm:$0xff]
      %v481 = vld [vmem:[%s394 + $0x48] sm:$0xff]
      %v482 = vld [vmem:[%s394 + $0x50] sm:$0xff]
      %v483 = vld [vmem:[%s394 + $0x58] sm:$0xff]
      %v484 = vld [vmem:[%s394 + $0x60] sm:$0xff]
      %v485 = vld [vmem:[%s394 + $0x68] sm:$0xff]
      %v486 = vld [vmem:[%s394 + $0x70] sm:$0xff]
      %v487 = vld [vmem:[%s394 + $0x78] sm:$0xff]
      %v488 = vld [vmem:[%s394 + $0x80] sm:$0xff]
      %v489 = vld [vmem:[%s394 + $0x88] sm:$0xff]
      %v490 = vld [vmem:[%s394 + $0x90] sm:$0xff]
      %v491 = vld [vmem:[%s394 + $0x98] sm:$0xff]
      %v492 = vld [vmem:[%s394 + $0xa0] sm:$0xff]
      %v493 = vld [vmem:[%s394 + $0xa8] sm:$0xff]
      %v494 = vld [vmem:[%s394 + $0xb0] sm:$0xff]
      %v495 = vld [vmem:[%s394 + $0xb8] sm:$0xff]
      %v496 = vld [vmem:[%s394 + $0xc0] sm:$0xff]
      %v497 = vld [vmem:[%s394 + $0xc8] sm:$0xff]
      %v498 = vld [vmem:[%s394 + $0xd0] sm:$0xff]
      %v499 = vld [vmem:[%s394 + $0xd8] sm:$0xff]
      %v500 = vld [vmem:[%s394 + $0xe0] sm:$0xff]
      %v501 = vld [vmem:[%s394 + $0xe8] sm:$0xff]
      %v502 = vld [vmem:[%s394 + $0xf0] sm:$0xff]
      %v503 = vld [vmem:[%s394 + $0xf8] sm:$0xff]
      %v504 = vld [vmem:[%s2] sm:$0xff]
      %v505 = vld [vmem:[%s2 + $0x8] sm:$0xff]
      %v506 = vld [vmem:[%s2 + $0x10] sm:$0xff]
      %v507 = vld [vmem:[%s2 + $0x18] sm:$0xff]
      %vm508 = vcmask 261120
      %v510 = vsel %vm508, %v472, 0
      %v513 = vsel %vm508, %v473, 0
      %v516 = vsel %vm508, %v474, 0
      %v519 = vsel %vm508, %v475, 0
      %v522 = vsel %vm508, %v476, 0
      %v525 = vsel %vm508, %v477, 0
      %v528 = vsel %vm508, %v478, 0
      %v531 = vsel %vm508, %v479, 0
      %v534 = vsel %vm508, %v480, 0
      %v537 = vsel %vm508, %v481, 0
      %v540 = vsel %vm508, %v482, 0
      %v543 = vsel %vm508, %v483, 0
      %v546 = vsel %vm508, %v484, 0
      %v549 = vsel %vm508, %v485, 0
      %v552 = vsel %vm508, %v486, 0
      %v555 = vsel %vm508, %v487, 0
      %v558 = vsel %vm508, %v488, 0
      %v561 = vsel %vm508, %v489, 0
      %v564 = vsel %vm508, %v490, 0
      %v567 = vsel %vm508, %v491, 0
      %v570 = vsel %vm508, %v492, 0
      %v573 = vsel %vm508, %v493, 0
      %v576 = vsel %vm508, %v494, 0
      %v579 = vsel %vm508, %v495, 0
      %v582 = vsel %vm508, %v496, 0
      %v585 = vsel %vm508, %v497, 0
      %v588 = vsel %vm508, %v498, 0
      %v591 = vsel %vm508, %v499, 0
      %v594 = vsel %vm508, %v500, 0
      %v597 = vsel %vm508, %v501, 0
      %v600 = vsel %vm508, %v502, 0
      %v603 = vsel %vm508, %v503, 0
      %605 = vmatpush.msra.mxu0 0.0
      %606 = vmatpush.msra.mxu0 0.0
      %607 = vmatpush.msra.mxu0 0.0
      %608 = vmatpush.msra.mxu0 0.0
      %609 = vmatpush.msra.mxu0 0.0
      %610 = vmatpush.msra.mxu0 0.0
      %611 = vmatpush.msra.mxu0 0.0
      %612 = vmatpush.msra.mxu0 0.0
      %613 = vmatpush.msra.mxu0 0.0
      %614 = vmatpush.msra.mxu0 0.0
      %615 = vmatpush.msra.mxu0 0.0
      %616 = vmatpush.msra.mxu0 0.0
      %617 = vmatpush.msra.mxu0 %v507
      %618 = vmatpush.msra.mxu0 %v506
      %619 = vmatpush.msra.mxu0 %v505
      %620 = vmatpush.msra.mxu0 %v504
      %621 = vmatmul.f32.gmra.mxu0 %v510
      %v622 = vpop.f32.mrf.mxu0
      %v623 = vadd.f32 0.0, %v622
      %624 = vmatmul.f32.gmra.mxu0 %v513
      %v625 = vpop.f32.mrf.mxu0
      %v626 = vadd.f32 0.0, %v625
      %627 = vmatmul.f32.gmra.mxu0 %v516
      %v628 = vpop.f32.mrf.mxu0
      %v629 = vadd.f32 0.0, %v628
      %630 = vmatmul.f32.gmra.mxu0 %v519
      %v631 = vpop.f32.mrf.mxu0
      %v632 = vadd.f32 0.0, %v631
      %633 = vmatmul.f32.gmra.mxu0 %v522
      %v634 = vpop.f32.mrf.mxu0
      %v635 = vadd.f32 0.0, %v634
      %636 = vmatmul.f32.gmra.mxu0 %v525
      %v637 = vpop.f32.mrf.mxu0
      %v638 = vadd.f32 0.0, %v637
      %639 = vmatmul.f32.gmra.mxu0 %v528
      %v640 = vpop.f32.mrf.mxu0
      %v641 = vadd.f32 0.0, %v640
      %642 = vmatmul.f32.gmra.mxu0 %v531
      %v643 = vpop.f32.mrf.mxu0
      %v644 = vadd.f32 0.0, %v643
      %645 = vmatmul.f32.gmra.mxu0 %v534
      %v646 = vpop.f32.mrf.mxu0
      %v647 = vadd.f32 0.0, %v646
      %648 = vmatmul.f32.gmra.mxu0 %v537
      %v649 = vpop.f32.mrf.mxu0
      %v650 = vadd.f32 0.0, %v649
      %651 = vmatmul.f32.gmra.mxu0 %v540
      %v652 = vpop.f32.mrf.mxu0
      %v653 = vadd.f32 0.0, %v652
      %654 = vmatmul.f32.gmra.mxu0 %v543
      %v655 = vpop.f32.mrf.mxu0
      %v656 = vadd.f32 0.0, %v655
      %657 = vmatmul.f32.gmra.mxu0 %v546
      %v658 = vpop.f32.mrf.mxu0
      %v659 = vadd.f32 0.0, %v658
      %660 = vmatmul.f32.gmra.mxu0 %v549
      %v661 = vpop.f32.mrf.mxu0
      %v662 = vadd.f32 0.0, %v661
      %663 = vmatmul.f32.gmra.mxu0 %v552
      %v664 = vpop.f32.mrf.mxu0
      %v665 = vadd.f32 0.0, %v664
      %666 = vmatmul.f32.gmra.mxu0 %v555
      %v667 = vpop.f32.mrf.mxu0
      %v668 = vadd.f32 0.0, %v667
      %669 = vmatmul.f32.gmra.mxu0 %v558
      %v670 = vpop.f32.mrf.mxu0
      %v671 = vadd.f32 0.0, %v670
      %672 = vmatmul.f32.gmra.mxu0 %v561
      %v673 = vpop.f32.mrf.mxu0
      %v674 = vadd.f32 0.0, %v673
      %675 = vmatmul.f32.gmra.mxu0 %v564
      %v676 = vpop.f32.mrf.mxu0
      %v677 = vadd.f32 0.0, %v676
      %678 = vmatmul.f32.gmra.mxu0 %v567
      %v679 = vpop.f32.mrf.mxu0
      %v680 = vadd.f32 0.0, %v679
      %681 = vmatmul.f32.gmra.mxu0 %v570
      %v682 = vpop.f32.mrf.mxu0
      %v683 = vadd.f32 0.0, %v682
      %684 = vmatmul.f32.gmra.mxu0 %v573
      %v685 = vpop.f32.mrf.mxu0
      %v686 = vadd.f32 0.0, %v685
      %687 = vmatmul.f32.gmra.mxu0 %v576
      %v688 = vpop.f32.mrf.mxu0
      %v689 = vadd.f32 0.0, %v688
      %690 = vmatmul.f32.gmra.mxu0 %v579
      %v691 = vpop.f32.mrf.mxu0
      %v692 = vadd.f32 0.0, %v691
      %693 = vmatmul.f32.gmra.mxu0 %v582
      %v694 = vpop.f32.mrf.mxu0
      %v695 = vadd.f32 0.0, %v694
      %696 = vmatmul.f32.gmra.mxu0 %v585
      %v697 = vpop.f32.mrf.mxu0
      %v698 = vadd.f32 0.0, %v697
      %699 = vmatmul.f32.gmra.mxu0 %v588
      %v700 = vpop.f32.mrf.mxu0
      %v701 = vadd.f32 0.0, %v700
      %702 = vmatmul.f32.gmra.mxu0 %v591
      %v703 = vpop.f32.mrf.mxu0
      %v704 = vadd.f32 0.0, %v703
      %705 = vmatmul.f32.gmra.mxu0 %v594
      %v706 = vpop.f32.mrf.mxu0
      %v707 = vadd.f32 0.0, %v706
      %708 = vmatmul.f32.gmra.mxu0 %v597
      %v709 = vpop.f32.mrf.mxu0
      %v710 = vadd.f32 0.0, %v709
      %711 = vmatmul.f32.gmra.mxu0 %v600
      %v712 = vpop.f32.mrf.mxu0
      %v713 = vadd.f32 0.0, %v712
      %714 = vmatmul.f32.gmra.mxu0 %v603
      %v715 = vpop.f32.mrf.mxu0
      %v716 = vadd.f32 0.0, %v715
      %717 = vdwg.mxu0
      %v718 = vld [vmem:[%s400] sm:$0xff]
      %v719 = vld [vmem:[%s400 + $0x8] sm:$0xff]
      %v720 = vld [vmem:[%s400 + $0x10] sm:$0xff]
      %v721 = vld [vmem:[%s400 + $0x18] sm:$0xff]
      %v722 = vld [vmem:[%s400 + $0x20] sm:$0xff]
      %v723 = vld [vmem:[%s400 + $0x28] sm:$0xff]
      %v724 = vld [vmem:[%s400 + $0x30] sm:$0xff]
      %v725 = vld [vmem:[%s400 + $0x38] sm:$0xff]
      %v726 = vld [vmem:[%s400 + $0x40] sm:$0xff]
      %v727 = vld [vmem:[%s400 + $0x48] sm:$0xff]
      %v728 = vld [vmem:[%s400 + $0x50] sm:$0xff]
      %v729 = vld [vmem:[%s400 + $0x58] sm:$0xff]
      %v730 = vld [vmem:[%s400 + $0x60] sm:$0xff]
      %v731 = vld [vmem:[%s400 + $0x68] sm:$0xff]
      %v732 = vld [vmem:[%s400 + $0x70] sm:$0xff]
      %v733 = vld [vmem:[%s400 + $0x78] sm:$0xff]
      %v734 = vld [vmem:[%s400 + $0x80] sm:$0xff]
      %v735 = vld [vmem:[%s400 + $0x88] sm:$0xff]
      %v736 = vld [vmem:[%s400 + $0x90] sm:$0xff]
      %v737 = vld [vmem:[%s400 + $0x98] sm:$0xff]
      %v738 = vld [vmem:[%s400 + $0xa0] sm:$0xff]
      %v739 = vld [vmem:[%s400 + $0xa8] sm:$0xff]
      %v740 = vld [vmem:[%s400 + $0xb0] sm:$0xff]
      %v741 = vld [vmem:[%s400 + $0xb8] sm:$0xff]
      %v742 = vld [vmem:[%s400 + $0xc0] sm:$0xff]
      %v743 = vld [vmem:[%s400 + $0xc8] sm:$0xff]
      %v744 = vld [vmem:[%s400 + $0xd0] sm:$0xff]
      %v745 = vld [vmem:[%s400 + $0xd8] sm:$0xff]
      %v746 = vld [vmem:[%s400 + $0xe0] sm:$0xff]
      %v747 = vld [vmem:[%s400 + $0xe8] sm:$0xff]
      %v748 = vld [vmem:[%s400 + $0xf0] sm:$0xff]
      %v749 = vld [vmem:[%s400 + $0xf8] sm:$0xff]
      %751 = vset.pattern.permute.xlu0 0
      %752 = vperm.xlu0 %751, %v718
      %v753 = vpop.permute.xlu0 %752
      %756 = vset.pattern.permute.xlu0 0
      %757 = vperm.xlu0 %756, %v719
      %v758 = vpop.permute.xlu0 %757
      %761 = vset.pattern.permute.xlu0 0
      %762 = vperm.xlu0 %761, %v720
      %v763 = vpop.permute.xlu0 %762
      %766 = vset.pattern.permute.xlu0 0
      %767 = vperm.xlu0 %766, %v721
      %v768 = vpop.permute.xlu0 %767
      %771 = vset.pattern.permute.xlu0 0
      %772 = vperm.xlu0 %771, %v722
      %v773 = vpop.permute.xlu0 %772
      %776 = vset.pattern.permute.xlu0 0
      %777 = vperm.xlu0 %776, %v723
      %v778 = vpop.permute.xlu0 %777
      %781 = vset.pattern.permute.xlu0 0
      %782 = vperm.xlu0 %781, %v724
      %v783 = vpop.permute.xlu0 %782
      %786 = vset.pattern.permute.xlu0 0
      %787 = vperm.xlu0 %786, %v725
      %v788 = vpop.permute.xlu0 %787
      %791 = vset.pattern.permute.xlu0 0
      %792 = vperm.xlu0 %791, %v726
      %v793 = vpop.permute.xlu0 %792
      %796 = vset.pattern.permute.xlu0 0
      %797 = vperm.xlu0 %796, %v727
      %v798 = vpop.permute.xlu0 %797
      %801 = vset.pattern.permute.xlu0 0
      %802 = vperm.xlu0 %801, %v728
      %v803 = vpop.permute.xlu0 %802
      %806 = vset.pattern.permute.xlu0 0
      %807 = vperm.xlu0 %806, %v729
      %v808 = vpop.permute.xlu0 %807
      %811 = vset.pattern.permute.xlu0 0
      %812 = vperm.xlu0 %811, %v730
      %v813 = vpop.permute.xlu0 %812
      %816 = vset.pattern.permute.xlu0 0
      %817 = vperm.xlu0 %816, %v731
      %v818 = vpop.permute.xlu0 %817
      %821 = vset.pattern.permute.xlu0 0
      %822 = vperm.xlu0 %821, %v732
      %v823 = vpop.permute.xlu0 %822
      %826 = vset.pattern.permute.xlu0 0
      %827 = vperm.xlu0 %826, %v733
      %v828 = vpop.permute.xlu0 %827
      %831 = vset.pattern.permute.xlu0 0
      %832 = vperm.xlu0 %831, %v734
      %v833 = vpop.permute.xlu0 %832
      %836 = vset.pattern.permute.xlu0 0
      %837 = vperm.xlu0 %836, %v735
      %v838 = vpop.permute.xlu0 %837
      %841 = vset.pattern.permute.xlu0 0
      %842 = vperm.xlu0 %841, %v736
      %v843 = vpop.permute.xlu0 %842
      %846 = vset.pattern.permute.xlu0 0
      %847 = vperm.xlu0 %846, %v737
      %v848 = vpop.permute.xlu0 %847
      %851 = vset.pattern.permute.xlu0 0
      %852 = vperm.xlu0 %851, %v738
      %v853 = vpop.permute.xlu0 %852
      %856 = vset.pattern.permute.xlu0 0
      %857 = vperm.xlu0 %856, %v739
      %v858 = vpop.permute.xlu0 %857
      %861 = vset.pattern.permute.xlu0 0
      %862 = vperm.xlu0 %861, %v740
      %v863 = vpop.permute.xlu0 %862
      %866 = vset.pattern.permute.xlu0 0
      %867 = vperm.xlu0 %866, %v741
      %v868 = vpop.permute.xlu0 %867
      %871 = vset.pattern.permute.xlu0 0
      %872 = vperm.xlu0 %871, %v742
      %v873 = vpop.permute.xlu0 %872
      %876 = vset.pattern.permute.xlu0 0
      %877 = vperm.xlu0 %876, %v743
      %v878 = vpop.permute.xlu0 %877
      %881 = vset.pattern.permute.xlu0 0
      %882 = vperm.xlu0 %881, %v744
      %v883 = vpop.permute.xlu0 %882
      %886 = vset.pattern.permute.xlu0 0
      %887 = vperm.xlu0 %886, %v745
      %v888 = vpop.permute.xlu0 %887
      %891 = vset.pattern.permute.xlu0 0
      %892 = vperm.xlu0 %891, %v746
      %v893 = vpop.permute.xlu0 %892
      %896 = vset.pattern.permute.xlu0 0
      %897 = vperm.xlu0 %896, %v747
      %v898 = vpop.permute.xlu0 %897
      %901 = vset.pattern.permute.xlu0 0
      %902 = vperm.xlu0 %901, %v748
      %v903 = vpop.permute.xlu0 %902
      %906 = vset.pattern.permute.xlu0 0
      %907 = vperm.xlu0 %906, %v749
      %v908 = vpop.permute.xlu0 %907
      %v910 = vmul.f32 %v753, %v623
      %v911 = vmul.f32 %v758, %v626
      %v912 = vmul.f32 %v763, %v629
      %v913 = vmul.f32 %v768, %v632
      %v914 = vmul.f32 %v773, %v635
      %v915 = vmul.f32 %v778, %v638
      %v916 = vmul.f32 %v783, %v641
      %v917 = vmul.f32 %v788, %v644
      %v918 = vmul.f32 %v793, %v647
      %v919 = vmul.f32 %v798, %v650
      %v920 = vmul.f32 %v803, %v653
      %v921 = vmul.f32 %v808, %v656
      %v922 = vmul.f32 %v813, %v659
      %v923 = vmul.f32 %v818, %v662
      %v924 = vmul.f32 %v823, %v665
      %v925 = vmul.f32 %v828, %v668
      %v926 = vmul.f32 %v833, %v671
      %v927 = vmul.f32 %v838, %v674
      %v928 = vmul.f32 %v843, %v677
      %v929 = vmul.f32 %v848, %v680
      %v930 = vmul.f32 %v853, %v683
      %v931 = vmul.f32 %v858, %v686
      %v932 = vmul.f32 %v863, %v689
      %v933 = vmul.f32 %v868, %v692
      %v934 = vmul.f32 %v873, %v695
      %v935 = vmul.f32 %v878, %v698
      %v936 = vmul.f32 %v883, %v701
      %v937 = vmul.f32 %v888, %v704
      %v938 = vmul.f32 %v893, %v707
      %v939 = vmul.f32 %v898, %v710
      %v940 = vmul.f32 %v903, %v713
      %v941 = vmul.f32 %v908, %v716
      %v942 = vld [vmem:[#allocation2] sm:$0xff]
      %v943 = vld [vmem:[#allocation2 + $0x8] sm:$0xff]
      %v944 = vld [vmem:[#allocation2 + $0x10] sm:$0xff]
      %v945 = vld [vmem:[#allocation2 + $0x18] sm:$0xff]
      %v946 = vld [vmem:[#allocation2 + $0x20] sm:$0xff]
      %v947 = vld [vmem:[#allocation2 + $0x28] sm:$0xff]
      %v948 = vld [vmem:[#allocation2 + $0x30] sm:$0xff]
      %v949 = vld [vmem:[#allocation2 + $0x38] sm:$0xff]
      %v950 = vld [vmem:[#allocation2 + $0x40] sm:$0xff]
      %v951 = vld [vmem:[#allocation2 + $0x48] sm:$0xff]
      %v952 = vld [vmem:[#allocation2 + $0x50] sm:$0xff]
      %v953 = vld [vmem:[#allocation2 + $0x58] sm:$0xff]
      %v954 = vld [vmem:[#allocation2 + $0x60] sm:$0xff]
      %v955 = vld [vmem:[#allocation2 + $0x68] sm:$0xff]
      %v956 = vld [vmem:[#allocation2 + $0x70] sm:$0xff]
      %v957 = vld [vmem:[#allocation2 + $0x78] sm:$0xff]
      %958 = vmatpush.msra.mxu0 %v925
      %959 = vmatpush.msra.mxu0 %v924
      %960 = vmatpush.msra.mxu0 %v923
      %961 = vmatpush.msra.mxu0 %v922
      %962 = vmatpush.msra.mxu0 %v921
      %963 = vmatpush.msra.mxu0 %v920
      %964 = vmatpush.msra.mxu0 %v919
      %965 = vmatpush.msra.mxu0 %v918
      %966 = vmatpush.msra.mxu0 %v917
      %967 = vmatpush.msra.mxu0 %v916
      %968 = vmatpush.msra.mxu0 %v915
      %969 = vmatpush.msra.mxu0 %v914
      %970 = vmatpush.msra.mxu0 %v913
      %971 = vmatpush.msra.mxu0 %v912
      %972 = vmatpush.msra.mxu0 %v911
      %973 = vmatpush.msra.mxu0 %v910
      %974 = vmatmul.f32.gmra.mxu0 %v440
      %v975 = vpop.f32.mrf.mxu0
      %v976 = vadd.f32 0.0, %v975
      %977 = vmatmul.f32.gmra.mxu0 %v442
      %v978 = vpop.f32.mrf.mxu0
      %v979 = vadd.f32 0.0, %v978
      %980 = vmatmul.f32.gmra.mxu0 %v444
      %v981 = vpop.f32.mrf.mxu0
      %v982 = vadd.f32 0.0, %v981
      %983 = vmatmul.f32.gmra.mxu0 %v446
      %v984 = vpop.f32.mrf.mxu0
      %v985 = vadd.f32 0.0, %v984
      %986 = vmatmul.f32.gmra.mxu0 %v448
      %v987 = vpop.f32.mrf.mxu0
      %v988 = vadd.f32 0.0, %v987
      %989 = vmatmul.f32.gmra.mxu0 %v450
      %v990 = vpop.f32.mrf.mxu0
      %v991 = vadd.f32 0.0, %v990
      %992 = vmatmul.f32.gmra.mxu0 %v452
      %v993 = vpop.f32.mrf.mxu0
      %v994 = vadd.f32 0.0, %v993
      %995 = vmatmul.f32.gmra.mxu0 %v454
      %v996 = vpop.f32.mrf.mxu0
      %v997 = vadd.f32 0.0, %v996
      %998 = vmatmul.f32.gmra.mxu0 %v456
      %v999 = vpop.f32.mrf.mxu0
      %v1000 = vadd.f32 0.0, %v999
      %1001 = vmatmul.f32.gmra.mxu0 %v458
      %v1002 = vpop.f32.mrf.mxu0
      %v1003 = vadd.f32 0.0, %v1002
      %1004 = vmatmul.f32.gmra.mxu0 %v460
      %v1005 = vpop.f32.mrf.mxu0
      %v1006 = vadd.f32 0.0, %v1005
      %1007 = vmatmul.f32.gmra.mxu0 %v462
      %v1008 = vpop.f32.mrf.mxu0
      %v1009 = vadd.f32 0.0, %v1008
      %1010 = vmatmul.f32.gmra.mxu0 %v464
      %v1011 = vpop.f32.mrf.mxu0
      %v1012 = vadd.f32 0.0, %v1011
      %1013 = vmatmul.f32.gmra.mxu0 %v466
      %v1014 = vpop.f32.mrf.mxu0
      %v1015 = vadd.f32 0.0, %v1014
      %1016 = vmatmul.f32.gmra.mxu0 %v468
      %v1017 = vpop.f32.mrf.mxu0
      %v1018 = vadd.f32 0.0, %v1017
      %1019 = vmatmul.f32.gmra.mxu0 %v470
      %v1020 = vpop.f32.mrf.mxu0
      %v1021 = vadd.f32 0.0, %v1020
      %1022 = vdwg.mxu0
      %1023 = vmatpush.msra.mxu0 %v941
      %1024 = vmatpush.msra.mxu0 %v940
      %1025 = vmatpush.msra.mxu0 %v939
      %1026 = vmatpush.msra.mxu0 %v938
      %1027 = vmatpush.msra.mxu0 %v937
      %1028 = vmatpush.msra.mxu0 %v936
      %1029 = vmatpush.msra.mxu0 %v935
      %1030 = vmatpush.msra.mxu0 %v934
      %1031 = vmatpush.msra.mxu0 %v933
      %1032 = vmatpush.msra.mxu0 %v932
      %1033 = vmatpush.msra.mxu0 %v931
      %1034 = vmatpush.msra.mxu0 %v930
      %1035 = vmatpush.msra.mxu0 %v929
      %1036 = vmatpush.msra.mxu0 %v928
      %1037 = vmatpush.msra.mxu0 %v927
      %1038 = vmatpush.msra.mxu0 %v926
      %1039 = vmatmul.f32.gmra.mxu0 %v441
      %v1040 = vpop.f32.mrf.mxu0
      %v1041 = vadd.f32 %v976, %v1040
      %1042 = vmatmul.f32.gmra.mxu0 %v443
      %v1043 = vpop.f32.mrf.mxu0
      %v1044 = vadd.f32 %v979, %v1043
      %1045 = vmatmul.f32.gmra.mxu0 %v445
      %v1046 = vpop.f32.mrf.mxu0
      %v1047 = vadd.f32 %v982, %v1046
      %1048 = vmatmul.f32.gmra.mxu0 %v447
      %v1049 = vpop.f32.mrf.mxu0
      %v1050 = vadd.f32 %v985, %v1049
      %1051 = vmatmul.f32.gmra.mxu0 %v449
      %v1052 = vpop.f32.mrf.mxu0
      %v1053 = vadd.f32 %v988, %v1052
      %1054 = vmatmul.f32.gmra.mxu0 %v451
      %v1055 = vpop.f32.mrf.mxu0
      %v1056 = vadd.f32 %v991, %v1055
      %1057 = vmatmul.f32.gmra.mxu0 %v453
      %v1058 = vpop.f32.mrf.mxu0
      %v1059 = vadd.f32 %v994, %v1058
      %1060 = vmatmul.f32.gmra.mxu0 %v455
      %v1061 = vpop.f32.mrf.mxu0
      %v1062 = vadd.f32 %v997, %v1061
      %1063 = vmatmul.f32.gmra.mxu0 %v457
      %v1064 = vpop.f32.mrf.mxu0
      %v1065 = vadd.f32 %v1000, %v1064
      %1066 = vmatmul.f32.gmra.mxu0 %v459
      %v1067 = vpop.f32.mrf.mxu0
      %v1068 = vadd.f32 %v1003, %v1067
      %1069 = vmatmul.f32.gmra.mxu0 %v461
      %v1070 = vpop.f32.mrf.mxu0
      %v1071 = vadd.f32 %v1006, %v1070
      %1072 = vmatmul.f32.gmra.mxu0 %v463
      %v1073 = vpop.f32.mrf.mxu0
      %v1074 = vadd.f32 %v1009, %v1073
      %1075 = vmatmul.f32.gmra.mxu0 %v465
      %v1076 = vpop.f32.mrf.mxu0
      %v1077 = vadd.f32 %v1012, %v1076
      %1078 = vmatmul.f32.gmra.mxu0 %v467
      %v1079 = vpop.f32.mrf.mxu0
      %v1080 = vadd.f32 %v1015, %v1079
      %1081 = vmatmul.f32.gmra.mxu0 %v469
      %v1082 = vpop.f32.mrf.mxu0
      %v1083 = vadd.f32 %v1018, %v1082
      %1084 = vmatmul.f32.gmra.mxu0 %v471
      %v1085 = vpop.f32.mrf.mxu0
      %v1086 = vadd.f32 %v1021, %v1085
      %1087 = vdwg.mxu0
      %v1088 = vadd.f32 %v942, %v1041
      %v1089 = vadd.f32 %v943, %v1044
      %v1090 = vadd.f32 %v944, %v1047
      %v1091 = vadd.f32 %v945, %v1050
      %v1092 = vadd.f32 %v946, %v1053
      %v1093 = vadd.f32 %v947, %v1056
      %v1094 = vadd.f32 %v948, %v1059
      %v1095 = vadd.f32 %v949, %v1062
      %v1096 = vadd.f32 %v950, %v1065
      %v1097 = vadd.f32 %v951, %v1068
      %v1098 = vadd.f32 %v952, %v1071
      %v1099 = vadd.f32 %v953, %v1074
      %v1100 = vadd.f32 %v954, %v1077
      %v1101 = vadd.f32 %v955, %v1080
      %v1102 = vadd.f32 %v956, %v1083
      %v1103 = vadd.f32 %v957, %v1086
      %1104 = vst [vmem:[#allocation2] sm:$0xff] %v1088
      %1105 = vst [vmem:[#allocation2 + $0x8] sm:$0xff] %v1089
      %1106 = vst [vmem:[#allocation2 + $0x10] sm:$0xff] %v1090
      %1107 = vst [vmem:[#allocation2 + $0x18] sm:$0xff] %v1091
      %1108 = vst [vmem:[#allocation2 + $0x20] sm:$0xff] %v1092
      %1109 = vst [vmem:[#allocation2 + $0x28] sm:$0xff] %v1093
      %1110 = vst [vmem:[#allocation2 + $0x30] sm:$0xff] %v1094
      %1111 = vst [vmem:[#allocation2 + $0x38] sm:$0xff] %v1095
      %1112 = vst [vmem:[#allocation2 + $0x40] sm:$0xff] %v1096
      %1113 = vst [vmem:[#allocation2 + $0x48] sm:$0xff] %v1097
      %1114 = vst [vmem:[#allocation2 + $0x50] sm:$0xff] %v1098
      %1115 = vst [vmem:[#allocation2 + $0x58] sm:$0xff] %v1099
      %1116 = vst [vmem:[#allocation2 + $0x60] sm:$0xff] %v1100
      %1117 = vst [vmem:[#allocation2 + $0x68] sm:$0xff] %v1101
      %1118 = vst [vmem:[#allocation2 + $0x70] sm:$0xff] %v1102
      %1119 = vst [vmem:[#allocation2 + $0x78] sm:$0xff] %v1103
      // Predicated region
      $region53: #{jknet_forward.4} parent=47 // pred_check
        %p1120 = pneg %p420
      $region54: #{jknet_forward.4} parent=47 // pred_check_branch
        %1122 = sbr.rel (%p1120) target = $region56
      $region55: #{jknet_forward.4} parent=47 // pred_region
        %v1123 = vld [vmem:[%s406] sm:$0xff]
        %v1124 = vld [vmem:[%s406 + $0x8] sm:$0xff]
        %v1125 = vld [vmem:[%s406 + $0x10] sm:$0xff]
        %v1126 = vld [vmem:[%s406 + $0x18] sm:$0xff]
        %v1127 = vld [vmem:[%s406 + $0x20] sm:$0xff]
        %v1128 = vld [vmem:[%s406 + $0x28] sm:$0xff]
        %v1129 = vld [vmem:[%s406 + $0x30] sm:$0xff]
        %v1130 = vld [vmem:[%s406 + $0x38] sm:$0xff]
        %v1131 = vld [vmem:[%s406 + $0x40] sm:$0xff]
        %v1132 = vld [vmem:[%s406 + $0x48] sm:$0xff]
        %v1133 = vld [vmem:[%s406 + $0x50] sm:$0xff]
        %v1134 = vld [vmem:[%s406 + $0x58] sm:$0xff]
        %v1135 = vld [vmem:[%s406 + $0x60] sm:$0xff]
        %v1136 = vld [vmem:[%s406 + $0x68] sm:$0xff]
        %v1137 = vld [vmem:[%s406 + $0x70] sm:$0xff]
        %v1138 = vld [vmem:[%s406 + $0x78] sm:$0xff]
        %v1139 = vld [vmem:[#allocation2] sm:$0xff]
        %v1140 = vld [vmem:[#allocation2 + $0x8] sm:$0xff]
        %v1141 = vld [vmem:[#allocation2 + $0x10] sm:$0xff]
        %v1142 = vld [vmem:[#allocation2 + $0x18] sm:$0xff]
        %v1143 = vld [vmem:[#allocation2 + $0x20] sm:$0xff]
        %v1144 = vld [vmem:[#allocation2 + $0x28] sm:$0xff]
        %v1145 = vld [vmem:[#allocation2 + $0x30] sm:$0xff]
        %v1146 = vld [vmem:[#allocation2 + $0x38] sm:$0xff]
        %v1147 = vld [vmem:[#allocation2 + $0x40] sm:$0xff]
        %v1148 = vld [vmem:[#allocation2 + $0x48] sm:$0xff]
        %v1149 = vld [vmem:[#allocation2 + $0x50] sm:$0xff]
        %v1150 = vld [vmem:[#allocation2 + $0x58] sm:$0xff]
        %v1151 = vld [vmem:[#allocation2 + $0x60] sm:$0xff]
        %v1152 = vld [vmem:[#allocation2 + $0x68] sm:$0xff]
        %v1153 = vld [vmem:[#allocation2 + $0x70] sm:$0xff]
        %v1154 = vld [vmem:[#allocation2 + $0x78] sm:$0xff]
        %1156 = vset.pattern.permute.xlu0 0
        %1157 = vperm.xlu0 %1156, %v1123
        %v1158 = vpop.permute.xlu0 %1157
        %1161 = vset.pattern.permute.xlu0 0
        %1162 = vperm.xlu0 %1161, %v1124
        %v1163 = vpop.permute.xlu0 %1162
        %1166 = vset.pattern.permute.xlu0 0
        %1167 = vperm.xlu0 %1166, %v1125
        %v1168 = vpop.permute.xlu0 %1167
        %1171 = vset.pattern.permute.xlu0 0
        %1172 = vperm.xlu0 %1171, %v1126
        %v1173 = vpop.permute.xlu0 %1172
        %1176 = vset.pattern.permute.xlu0 0
        %1177 = vperm.xlu0 %1176, %v1127
        %v1178 = vpop.permute.xlu0 %1177
        %1181 = vset.pattern.permute.xlu0 0
        %1182 = vperm.xlu0 %1181, %v1128
        %v1183 = vpop.permute.xlu0 %1182
        %1186 = vset.pattern.permute.xlu0 0
        %1187 = vperm.xlu0 %1186, %v1129
        %v1188 = vpop.permute.xlu0 %1187
        %1191 = vset.pattern.permute.xlu0 0
        %1192 = vperm.xlu0 %1191, %v1130
        %v1193 = vpop.permute.xlu0 %1192
        %1196 = vset.pattern.permute.xlu0 0
        %1197 = vperm.xlu0 %1196, %v1131
        %v1198 = vpop.permute.xlu0 %1197
        %1201 = vset.pattern.permute.xlu0 0
        %1202 = vperm.xlu0 %1201, %v1132
        %v1203 = vpop.permute.xlu0 %1202
        %1206 = vset.pattern.permute.xlu0 0
        %1207 = vperm.xlu0 %1206, %v1133
        %v1208 = vpop.permute.xlu0 %1207
        %1211 = vset.pattern.permute.xlu0 0
        %1212 = vperm.xlu0 %1211, %v1134
        %v1213 = vpop.permute.xlu0 %1212
        %1216 = vset.pattern.permute.xlu0 0
        %1217 = vperm.xlu0 %1216, %v1135
        %v1218 = vpop.permute.xlu0 %1217
        %1221 = vset.pattern.permute.xlu0 0
        %1222 = vperm.xlu0 %1221, %v1136
        %v1223 = vpop.permute.xlu0 %1222
        %1226 = vset.pattern.permute.xlu0 0
        %1227 = vperm.xlu0 %1226, %v1137
        %v1228 = vpop.permute.xlu0 %1227
        %1231 = vset.pattern.permute.xlu0 0
        %1232 = vperm.xlu0 %1231, %v1138
        %v1233 = vpop.permute.xlu0 %1232
        %v1235 = vmul.f32 %v1139, %v1158
        %v1236 = vmul.f32 %v1140, %v1163
        %v1237 = vmul.f32 %v1141, %v1168
        %v1238 = vmul.f32 %v1142, %v1173
        %v1239 = vmul.f32 %v1143, %v1178
        %v1240 = vmul.f32 %v1144, %v1183
        %v1241 = vmul.f32 %v1145, %v1188
        %v1242 = vmul.f32 %v1146, %v1193
        %v1243 = vmul.f32 %v1147, %v1198
        %v1244 = vmul.f32 %v1148, %v1203
        %v1245 = vmul.f32 %v1149, %v1208
        %v1246 = vmul.f32 %v1150, %v1213
        %v1247 = vmul.f32 %v1151, %v1218
        %v1248 = vmul.f32 %v1152, %v1223
        %v1249 = vmul.f32 %v1153, %v1228
        %v1250 = vmul.f32 %v1154, %v1233
        %v1251 = vld [vmem:[%s5] sm:$0x1]
        %v1253 = vperm.slane %v1251, 0
        %v1255 = vadd.f32 %v1235, %v1253
        %v1256 = vadd.f32 %v1236, %v1253
        %v1257 = vadd.f32 %v1237, %v1253
        %v1258 = vadd.f32 %v1238, %v1253
        %v1259 = vadd.f32 %v1239, %v1253
        %v1260 = vadd.f32 %v1240, %v1253
        %v1261 = vadd.f32 %v1241, %v1253
        %v1262 = vadd.f32 %v1242, %v1253
        %v1263 = vadd.f32 %v1243, %v1253
        %v1264 = vadd.f32 %v1244, %v1253
        %v1265 = vadd.f32 %v1245, %v1253
        %v1266 = vadd.f32 %v1246, %v1253
        %v1267 = vadd.f32 %v1247, %v1253
        %v1268 = vadd.f32 %v1248, %v1253
        %v1269 = vadd.f32 %v1249, %v1253
        %v1270 = vadd.f32 %v1250, %v1253
        %v1271 = vmax.f32 %v1255, 0.0
        %v1272 = vmax.f32 %v1256, 0.0
        %v1273 = vmax.f32 %v1257, 0.0
        %v1274 = vmax.f32 %v1258, 0.0
        %v1275 = vmax.f32 %v1259, 0.0
        %v1276 = vmax.f32 %v1260, 0.0
        %v1277 = vmax.f32 %v1261, 0.0
        %v1278 = vmax.f32 %v1262, 0.0
        %v1279 = vmax.f32 %v1263, 0.0
        %v1280 = vmax.f32 %v1264, 0.0
        %v1281 = vmax.f32 %v1265, 0.0
        %v1282 = vmax.f32 %v1266, 0.0
        %v1283 = vmax.f32 %v1267, 0.0
        %v1284 = vmax.f32 %v1268, 0.0
        %v1285 = vmax.f32 %v1269, 0.0
        %v1286 = vmax.f32 %v1270, 0.0
        %v1287 = vld [vmem:[%s6] sm:$0xff]
        %v1288 = vld [vmem:[%s6 + $0x8] sm:$0xff]
        %v1289 = vld [vmem:[%s6 + $0x10] sm:$0xff]
        %v1290 = vld [vmem:[%s6 + $0x18] sm:$0xff]
        %v1291 = vld [vmem:[%s6 + $0x20] sm:$0xff]
        %v1292 = vld [vmem:[%s6 + $0x28] sm:$0xff]
        %v1293 = vld [vmem:[%s6 + $0x30] sm:$0xff]
        %v1294 = vld [vmem:[%s6 + $0x38] sm:$0xff]
        %v1295 = vld [vmem:[%s6 + $0x40] sm:$0xff]
        %v1296 = vld [vmem:[%s6 + $0x48] sm:$0xff]
        %v1297 = vld [vmem:[%s6 + $0x50] sm:$0xff]
        %v1298 = vld [vmem:[%s6 + $0x58] sm:$0xff]
        %v1299 = vld [vmem:[%s6 + $0x60] sm:$0xff]
        %v1300 = vld [vmem:[%s6 + $0x68] sm:$0xff]
        %v1301 = vld [vmem:[%s6 + $0x70] sm:$0xff]
        %v1302 = vld [vmem:[%s6 + $0x78] sm:$0xff]
        %v1303 = vld [vmem:[%s6 + $0x80] sm:$0xff]
        %v1304 = vld [vmem:[%s6 + $0x88] sm:$0xff]
        %v1305 = vld [vmem:[%s6 + $0x90] sm:$0xff]
        %v1306 = vld [vmem:[%s6 + $0x98] sm:$0xff]
        %v1307 = vld [vmem:[%s6 + $0xa0] sm:$0xff]
        %v1308 = vld [vmem:[%s6 + $0xa8] sm:$0xff]
        %v1309 = vld [vmem:[%s6 + $0xb0] sm:$0xff]
        %v1310 = vld [vmem:[%s6 + $0xb8] sm:$0xff]
        %v1311 = vld [vmem:[%s6 + $0xc0] sm:$0xff]
        %v1312 = vld [vmem:[%s6 + $0xc8] sm:$0xff]
        %v1313 = vld [vmem:[%s6 + $0xd0] sm:$0xff]
        %v1314 = vld [vmem:[%s6 + $0xd8] sm:$0xff]
        %v1315 = vld [vmem:[%s6 + $0xe0] sm:$0xff]
        %v1316 = vld [vmem:[%s6 + $0xe8] sm:$0xff]
        %v1317 = vld [vmem:[%s6 + $0xf0] sm:$0xff]
        %v1318 = vld [vmem:[%s6 + $0xf8] sm:$0xff]
        %1319 = vmatpush.msra.mxu0 %v1317
        %1320 = vmatpush.msra.mxu0 %v1315
        %1321 = vmatpush.msra.mxu0 %v1313
        %1322 = vmatpush.msra.mxu0 %v1311
        %1323 = vmatpush.msra.mxu0 %v1309
        %1324 = vmatpush.msra.mxu0 %v1307
        %1325 = vmatpush.msra.mxu0 %v1305
        %1326 = vmatpush.msra.mxu0 %v1303
        %1327 = vmatpush.msra.mxu0 %v1301
        %1328 = vmatpush.msra.mxu0 %v1299
        %1329 = vmatpush.msra.mxu0 %v1297
        %1330 = vmatpush.msra.mxu0 %v1295
        %1331 = vmatpush.msra.mxu0 %v1293
        %1332 = vmatpush.msra.mxu0 %v1291
        %1333 = vmatpush.msra.mxu0 %v1289
        %1334 = vmatpush.msra.mxu0 %v1287
        %1335 = vmatmul.f32.gmra.mxu0 %v1271
        %v1336 = vpop.f32.mrf.mxu0
        %v1337 = vadd.f32 0.0, %v1336
        %1338 = vmatmul.f32.gmra.mxu0 %v1272
        %v1339 = vpop.f32.mrf.mxu0
        %v1340 = vadd.f32 0.0, %v1339
        %1341 = vmatmul.f32.gmra.mxu0 %v1273
        %v1342 = vpop.f32.mrf.mxu0
        %v1343 = vadd.f32 0.0, %v1342
        %1344 = vmatmul.f32.gmra.mxu0 %v1274
        %v1345 = vpop.f32.mrf.mxu0
        %v1346 = vadd.f32 0.0, %v1345
        %1347 = vmatmul.f32.gmra.mxu0 %v1275
        %v1348 = vpop.f32.mrf.mxu0
        %v1349 = vadd.f32 0.0, %v1348
        %1350 = vmatmul.f32.gmra.mxu0 %v1276
        %v1351 = vpop.f32.mrf.mxu0
        %v1352 = vadd.f32 0.0, %v1351
        %1353 = vmatmul.f32.gmra.mxu0 %v1277
        %v1354 = vpop.f32.mrf.mxu0
        %v1355 = vadd.f32 0.0, %v1354
        %1356 = vmatmul.f32.gmra.mxu0 %v1278
        %v1357 = vpop.f32.mrf.mxu0
        %v1358 = vadd.f32 0.0, %v1357
        %1359 = vmatmul.f32.gmra.mxu0 %v1279
        %v1360 = vpop.f32.mrf.mxu0
        %v1361 = vadd.f32 0.0, %v1360
        %1362 = vmatmul.f32.gmra.mxu0 %v1280
        %v1363 = vpop.f32.mrf.mxu0
        %v1364 = vadd.f32 0.0, %v1363
        %1365 = vmatmul.f32.gmra.mxu0 %v1281
        %v1366 = vpop.f32.mrf.mxu0
        %v1367 = vadd.f32 0.0, %v1366
        %1368 = vmatmul.f32.gmra.mxu0 %v1282
        %v1369 = vpop.f32.mrf.mxu0
        %v1370 = vadd.f32 0.0, %v1369
        %1371 = vmatmul.f32.gmra.mxu0 %v1283
        %v1372 = vpop.f32.mrf.mxu0
        %v1373 = vadd.f32 0.0, %v1372
        %1374 = vmatmul.f32.gmra.mxu0 %v1284
        %v1375 = vpop.f32.mrf.mxu0
        %v1376 = vadd.f32 0.0, %v1375
        %1377 = vmatmul.f32.gmra.mxu0 %v1285
        %v1378 = vpop.f32.mrf.mxu0
        %v1379 = vadd.f32 0.0, %v1378
        %1380 = vmatmul.f32.gmra.mxu0 %v1286
        %v1381 = vpop.f32.mrf.mxu0
        %v1382 = vadd.f32 0.0, %v1381
        %1383 = vdwg.mxu0
        %1384 = vmatpush.msra.mxu0 %v1318
        %1385 = vmatpush.msra.mxu0 %v1316
        %1386 = vmatpush.msra.mxu0 %v1314
        %1387 = vmatpush.msra.mxu0 %v1312
        %1388 = vmatpush.msra.mxu0 %v1310
        %1389 = vmatpush.msra.mxu0 %v1308
        %1390 = vmatpush.msra.mxu0 %v1306
        %1391 = vmatpush.msra.mxu0 %v1304
        %1392 = vmatpush.msra.mxu0 %v1302
        %1393 = vmatpush.msra.mxu0 %v1300
        %1394 = vmatpush.msra.mxu0 %v1298
        %1395 = vmatpush.msra.mxu0 %v1296
        %1396 = vmatpush.msra.mxu0 %v1294
        %1397 = vmatpush.msra.mxu0 %v1292
        %1398 = vmatpush.msra.mxu0 %v1290
        %1399 = vmatpush.msra.mxu0 %v1288
        %1400 = vmatmul.f32.gmra.mxu0 %v1271
        %v1401 = vpop.f32.mrf.mxu0
        %v1402 = vadd.f32 0.0, %v1401
        %1403 = vmatmul.f32.gmra.mxu0 %v1272
        %v1404 = vpop.f32.mrf.mxu0
        %v1405 = vadd.f32 0.0, %v1404
        %1406 = vmatmul.f32.gmra.mxu0 %v1273
        %v1407 = vpop.f32.mrf.mxu0
        %v1408 = vadd.f32 0.0, %v1407
        %1409 = vmatmul.f32.gmra.mxu0 %v1274
        %v1410 = vpop.f32.mrf.mxu0
        %v1411 = vadd.f32 0.0, %v1410
        %1412 = vmatmul.f32.gmra.mxu0 %v1275
        %v1413 = vpop.f32.mrf.mxu0
        %v1414 = vadd.f32 0.0, %v1413
        %1415 = vmatmul.f32.gmra.mxu0 %v1276
        %v1416 = vpop.f32.mrf.mxu0
        %v1417 = vadd.f32 0.0, %v1416
        %1418 = vmatmul.f32.gmra.mxu0 %v1277
        %v1419 = vpop.f32.mrf.mxu0
        %v1420 = vadd.f32 0.0, %v1419
        %1421 = vmatmul.f32.gmra.mxu0 %v1278
        %v1422 = vpop.f32.mrf.mxu0
        %v1423 = vadd.f32 0.0, %v1422
        %1424 = vmatmul.f32.gmra.mxu0 %v1279
        %v1425 = vpop.f32.mrf.mxu0
        %v1426 = vadd.f32 0.0, %v1425
        %1427 = vmatmul.f32.gmra.mxu0 %v1280
        %v1428 = vpop.f32.mrf.mxu0
        %v1429 = vadd.f32 0.0, %v1428
        %1430 = vmatmul.f32.gmra.mxu0 %v1281
        %v1431 = vpop.f32.mrf.mxu0
        %v1432 = vadd.f32 0.0, %v1431
        %1433 = vmatmul.f32.gmra.mxu0 %v1282
        %v1434 = vpop.f32.mrf.mxu0
        %v1435 = vadd.f32 0.0, %v1434
        %1436 = vmatmul.f32.gmra.mxu0 %v1283
        %v1437 = vpop.f32.mrf.mxu0
        %v1438 = vadd.f32 0.0, %v1437
        %1439 = vmatmul.f32.gmra.mxu0 %v1284
        %v1440 = vpop.f32.mrf.mxu0
        %v1441 = vadd.f32 0.0, %v1440
        %1442 = vmatmul.f32.gmra.mxu0 %v1285
        %v1443 = vpop.f32.mrf.mxu0
        %v1444 = vadd.f32 0.0, %v1443
        %1445 = vmatmul.f32.gmra.mxu0 %v1286
        %v1446 = vpop.f32.mrf.mxu0
        %v1447 = vadd.f32 0.0, %v1446
        %1448 = vdwg.mxu0
        %v1449 = vmul.f32 %v1158, %v1337
        %v1450 = vmul.f32 %v1163, %v1340
        %v1451 = vmul.f32 %v1168, %v1343
        %v1452 = vmul.f32 %v1173, %v1346
        %v1453 = vmul.f32 %v1178, %v1349
        %v1454 = vmul.f32 %v1183, %v1352
        %v1455 = vmul.f32 %v1188, %v1355
        %v1456 = vmul.f32 %v1193, %v1358
        %v1457 = vmul.f32 %v1198, %v1361
        %v1458 = vmul.f32 %v1203, %v1364
        %v1459 = vmul.f32 %v1208, %v1367
        %v1460 = vmul.f32 %v1213, %v1370
        %v1461 = vmul.f32 %v1218, %v1373
        %v1462 = vmul.f32 %v1223, %v1376
        %v1463 = vmul.f32 %v1228, %v1379
        %v1464 = vmul.f32 %v1233, %v1382
        %1465 = vst [vmem:[%s412] sm:$0xff] %v1449
        %1466 = vst [vmem:[%s412 + $0x8] sm:$0xff] %v1450
        %1467 = vst [vmem:[%s412 + $0x10] sm:$0xff] %v1451
        %1468 = vst [vmem:[%s412 + $0x18] sm:$0xff] %v1452
        %1469 = vst [vmem:[%s412 + $0x20] sm:$0xff] %v1453
        %1470 = vst [vmem:[%s412 + $0x28] sm:$0xff] %v1454
        %1471 = vst [vmem:[%s412 + $0x30] sm:$0xff] %v1455
        %1472 = vst [vmem:[%s412 + $0x38] sm:$0xff] %v1456
        %1473 = vst [vmem:[%s412 + $0x40] sm:$0xff] %v1457
        %1474 = vst [vmem:[%s412 + $0x48] sm:$0xff] %v1458
        %1475 = vst [vmem:[%s412 + $0x50] sm:$0xff] %v1459
        %1476 = vst [vmem:[%s412 + $0x58] sm:$0xff] %v1460
        %1477 = vst [vmem:[%s412 + $0x60] sm:$0xff] %v1461
        %1478 = vst [vmem:[%s412 + $0x68] sm:$0xff] %v1462
        %1479 = vst [vmem:[%s412 + $0x70] sm:$0xff] %v1463
        %1480 = vst [vmem:[%s412 + $0x78] sm:$0xff] %v1464
        %1481 = vst [vmem:[%s418] sm:$0xff] %v1402
        %1482 = vst [vmem:[%s418 + $0x8] sm:$0xff] %v1405
        %1483 = vst [vmem:[%s418 + $0x10] sm:$0xff] %v1408
        %1484 = vst [vmem:[%s418 + $0x18] sm:$0xff] %v1411
        %1485 = vst [vmem:[%s418 + $0x20] sm:$0xff] %v1414
        %1486 = vst [vmem:[%s418 + $0x28] sm:$0xff] %v1417
        %1487 = vst [vmem:[%s418 + $0x30] sm:$0xff] %v1420
        %1488 = vst [vmem:[%s418 + $0x38] sm:$0xff] %v1423
        %1489 = vst [vmem:[%s418 + $0x40] sm:$0xff] %v1426
        %1490 = vst [vmem:[%s418 + $0x48] sm:$0xff] %v1429
        %1491 = vst [vmem:[%s418 + $0x50] sm:$0xff] %v1432
        %1492 = vst [vmem:[%s418 + $0x58] sm:$0xff] %v1435
        %1493 = vst [vmem:[%s418 + $0x60] sm:$0xff] %v1438
        %1494 = vst [vmem:[%s418 + $0x68] sm:$0xff] %v1441
        %1495 = vst [vmem:[%s418 + $0x70] sm:$0xff] %v1444
        %1496 = vst [vmem:[%s418 + $0x78] sm:$0xff] %v1447
      $region56: #{jknet_forward.4} parent=47 // pred_fallthru
        _
      %s1497 = smul.u32 16, %s24
      %p1498 = scmp.lt.s32.totalorder %s1497, 31
      %s1499 = scalar_select %p1498, %s1497, 31
      %s1500 = smul.addr %s1499, 8
      %s1501 = scalar_lea.vmem %s7, %s1500
      %s1502 = smul.u32 16, %s24
      %p1503 = scmp.lt.s32.totalorder %s1502, 31
      %s1504 = scalar_select %p1503, %s1502, 31
      %s1505 = smul.addr %s1504, 8
      %s1506 = scalar_lea.vmem %s8, %s1505
      // Predicated region
      $region57: #{jknet_forward.4} parent=47 // pred_check
        %p1507 = pneg %p219
      $region58: #{jknet_forward.4} parent=47 // pred_check_branch
        %1509 = sbr.rel (%p1507) target = $region60
      $region59: #{jknet_forward.4} parent=47 // pred_region
        %s1510 = smul.u32 16, %s24
      $region60: #{jknet_forward.4} parent=47 // pred_fallthru
        _
      // Predicated region
      $region61: #{jknet_forward.4} parent=47 // pred_check
        %p1511 = pneg %p245
      $region62: #{jknet_forward.4} parent=47 // pred_check_branch
        %1513 = sbr.rel (%p1511) target = $region64
      $region63: #{jknet_forward.4} parent=47 // pred_region
        %s1514 = smul.u32 16, %s24
      $region64: #{jknet_forward.4} parent=47 // pred_fallthru
        _
    $region48: #{jknet_forward.4} parent=5 // pred_fallthru
      _
    %p1515 = scmp.le.s32.totalorder 2, %s15
    // Predicated region
    $region65: #{jknet_forward.4} parent=5 // pred_check
      %p1516 = pneg %p1515
    $region66: #{jknet_forward.4} parent=5 // pred_check_branch
      %1518 = sbr.rel (%p1516) target = $region68
    $region67: #{jknet_forward.4} parent=5 // pred_region
      %s1519 = ssub.s32 %s15, 2
      // Predicated region
      $region69: #{jknet_forward.4} parent=67 // pred_check
        %p1520 = pneg %p225
      $region70: #{jknet_forward.4} parent=67 // pred_check_branch
        %1522 = sbr.rel (%p1520) target = $region72
      $region71: #{jknet_forward.4} parent=67 // pred_region
        %s1523 = smul.u32 16, %s26
        %p1524 = scmp.lt.s32.totalorder %s1523, 31
        %s1525 = scalar_select %p1524, %s1523, 31
        %s1526 = smul.addr %s1525, 8
        %s1527 = scalar_lea.vmem %s7, %s1526
      $region72: #{jknet_forward.4} parent=67 // pred_fallthru
        _
      // Predicated region
      $region73: #{jknet_forward.4} parent=67 // pred_check
        %p1528 = pneg %p251
      $region74: #{jknet_forward.4} parent=67 // pred_check_branch
        %1530 = sbr.rel (%p1528) target = $region76
      $region75: #{jknet_forward.4} parent=67 // pred_region
        %s1531 = smul.u32 16, %s26
        %p1532 = scmp.lt.s32.totalorder %s1531, 31
        %s1533 = scalar_select %p1532, %s1531, 31
        %s1534 = smul.addr %s1533, 8
        %s1535 = scalar_lea.vmem %s8, %s1534
      $region76: #{jknet_forward.4} parent=67 // pred_fallthru
        _
    $region68: #{jknet_forward.4} parent=5 // pred_fallthru
      _
  $region6: #{jknet_forward.4} parent=0 // loop_footer
    %s19 = sadd.s32 1, %s15
  $region7: #{jknet_forward.4} parent=0 // loop_footer_branch
    %14 = sbr.rel target = $region3
  $region8: #{jknet_forward.4} parent=0 // loop_exit
    _

// kernel: jknet_forward.7
$region0: #{jknet_forward.7}
  #allocation0 [shape = 'u32[]', space=smem, size = 0x4, offset = 0x4, fixed_abs, tag = 'smem constant byte address 0x4 - core index']
  #allocation1 [shape = 'u32[72,128]{1,0:T(1,128)}', space=vmem, size = 0x9000, scoped, tag = 'internal scratch']
  #allocation2 [shape = 'f32[128,128]{1,0:T(8,128)}', space=vmem, size = 0x10000, scoped, tag = 'scratch operand']
  %s0 = inlined_call_operand.vmem [shape: f32[256,256], index: 0, kind: input, shape index: {}]
  %s1 = inlined_call_operand.vmem [shape: f32[256,128], index: 1, kind: input, shape index: {}]
  %s2 = inlined_call_operand.vmem [shape: f32[1,128], index: 2, kind: input, shape index: {}]
  %s3 = inlined_call_operand.vmem [shape: f32[256,128], index: 3, kind: output, shape index: {}]
  %s4 = sld [smem:[#allocation0]]
  $region53: #{jknet_forward.7} parent=0
    _
  %s6 = ssub.s32 1, %s4
  %s7 = scalar_select 0, %s6, %s4
  loop: start=0, step=1, limit=4
  $region2: #{jknet_forward.7} parent=0 // loop_pre_header
    _
  $region3: #{jknet_forward.7} parent=0 // loop_header
    %s9 = sphi 0, %s13
    %p10 = scmp.ge.s32.totalorder %s9, 4
    %s16 = sphi 0, %s28
    %s17 = sphi 0, %s24
    %s18 = sphi 0, %s16
    %s19 = sphi 0, %s17
    %s20 = sphi 0, %s18
    %s21 = sphi 0, %s19
    %s33 = sphi 0, %s35
    %s36 = sphi 0, %s33
    %s37 = sphi 0, %s36
    %s53 = sphi 0, %s37
    %s57 = sphi 0, %s57
    %s59 = sphi 0, %s57
    %s60 = sphi 0, %s59
    %s74 = sphi 0, %s60
    %s78 = sphi 0, %s78
    %s80 = sphi 0, %s78
    %s81 = sphi 0, %s80
    %s95 = sphi 0, %s81
    %s101 = sphi 0, %s103
    %s104 = sphi 0, %s101
    %s105 = sphi 0, %s104
    %s121 = sphi 0, %s105
  $region4: #{jknet_forward.7} parent=0 // loop_header_branch
    %12 = sbr.rel (%p10) target = $region8
  $region5: #{jknet_forward.7} parent=0 // loop_body
    %s14 = ssub.s32 %s9, 1
    %s15 = ssub.s32 %s9, 2
    %s22 = sadd.s32 1, %s17
    %p23 = scmp.ge.s32.totalorder %s22, 1
    %s24 = scalar_select %p23, 0, %s22
    %s25 = sadd.s32 1, %s16
    %s26 = scalar_select %p23, %s25, %s16
    %p27 = scmp.ge.s32.totalorder %s26, 2
    %s28 = scalar_select %p27, 0, %s26
    %s29 = ssub.s32 %s16, %s28
    %s30 = ssub.s32 %s17, %s24
    %s31 = sor.u32 %s29, %s30
    %p32 = scmp.eq.s32.totalorder %s31, 0
    %s34 = sadd.s32 %s33, 1
    %s35 = scalar_select %p32, %s33, %s34
    %p38 = pneg %p32
    %p39 = scmp.eq.s32.totalorder %s9, 1
    %p40 = por %p38, %p39
    %p41 = scmp.ne.s32.totalorder %s33, %s36
    %p42 = scmp.eq.s32.totalorder %s9, 0
    %p43 = por %p41, %p42
    %p44 = scmp.ne.s32.totalorder %s33, %s36
    %p45 = scmp.eq.s32.totalorder %s14, 1
    %p46 = por %p44, %p45
    %p47 = scmp.ne.s32.totalorder %s36, %s37
    %p48 = scmp.eq.s32.totalorder %s14, 0
    %p49 = por %p47, %p48
    %p50 = scmp.ne.s32.totalorder %s36, %s37
    %p51 = scmp.eq.s32.totalorder %s15, 1
    %p52 = por %p50, %p51
    %p54 = scmp.ne.s32.totalorder %s37, %s53
    %p55 = scmp.eq.s32.totalorder %s15, 0
    %p56 = por %p54, %p55
    %s58 = sadd.s32 %s57, 1
    %p61 = scmp.eq.s32.totalorder %s9, 1
    %p62 = scmp.ne.s32.totalorder %s57, %s59
    %p63 = scmp.eq.s32.totalorder %s9, 0
    %p64 = por %p62, %p63
    %p65 = scmp.ne.s32.totalorder %s57, %s59
    %p66 = scmp.eq.s32.totalorder %s14, 1
    %p67 = por %p65, %p66
    %p68 = scmp.ne.s32.totalorder %s59, %s60
    %p69 = scmp.eq.s32.totalorder %s14, 0
    %p70 = por %p68, %p69
    %p71 = scmp.ne.s32.totalorder %s59, %s60
    %p72 = scmp.eq.s32.totalorder %s15, 1
    %p73 = por %p71, %p72
    %p75 = scmp.ne.s32.totalorder %s60, %s74
    %p76 = scmp.eq.s32.totalorder %s15, 0
    %p77 = por %p75, %p76
    %s79 = sadd.s32 %s78, 1
    %p82 = scmp.eq.s32.totalorder %s9, 1
    %p83 = scmp.ne.s32.totalorder %s78, %s80
    %p84 = scmp.eq.s32.totalorder %s9, 0
    %p85 = por %p83, %p84
    %p86 = scmp.ne.s32.totalorder %s78, %s80
    %p87 = scmp.eq.s32.totalorder %s14, 1
    %p88 = por %p86, %p87
    %p89 = scmp.ne.s32.totalorder %s80, %s81
    %p90 = scmp.eq.s32.totalorder %s14, 0
    %p91 = por %p89, %p90
    %p92 = scmp.ne.s32.totalorder %s80, %s81
    %p93 = scmp.eq.s32.totalorder %s15, 1
    %p94 = por %p92, %p93
    %p96 = scmp.ne.s32.totalorder %s81, %s95
    %p97 = scmp.eq.s32.totalorder %s15, 0
    %p98 = por %p96, %p97
    %s99 = ssub.s32 %s16, %s28
    %p100 = scmp.eq.s32.totalorder %s99, 0
    %s102 = sadd.s32 %s101, 1
    %s103 = scalar_select %p100, %s101, %s102
    %p106 = pneg %p100
    %p107 = scmp.eq.s32.totalorder %s9, 1
    %p108 = por %p106, %p107
    %p109 = scmp.ne.s32.totalorder %s101, %s104
    %p110 = scmp.eq.s32.totalorder %s9, 0
    %p111 = por %p109, %p110
    %p112 = scmp.ne.s32.totalorder %s101, %s104
    %p113 = scmp.eq.s32.totalorder %s14, 1
    %p114 = por %p112, %p113
    %p115 = scmp.ne.s32.totalorder %s104, %s105
    %p116 = scmp.eq.s32.totalorder %s14, 0
    %p117 = por %p115, %p116
    %p118 = scmp.ne.s32.totalorder %s104, %s105
    %p119 = scmp.eq.s32.totalorder %s15, 1
    %p120 = por %p118, %p119
    %p122 = scmp.ne.s32.totalorder %s105, %s121
    %p123 = scmp.eq.s32.totalorder %s15, 0
    %p124 = por %p122, %p123
    %p125 = scmp.le.s32.totalorder 1, %s9
    %p126 = scmp.lt.s32.totalorder %s9, 3
    %p127 = pnand %p125, %p126
    %p128 = pneg %p127
    // Predicated region
    $region9: #{jknet_forward.7} parent=5 // pred_check
      _
    $region10: #{jknet_forward.7} parent=5 // pred_check_branch
      %130 = sbr.rel (%p127) target = $region12
    $region11: #{jknet_forward.7} parent=5 // pred_region
      %s131 = ssub.s32 %s9, 1
      // Predicated region
      $region13: #{jknet_forward.7} parent=11 // pred_check
        %p132 = pneg %p70
      $region14: #{jknet_forward.7} parent=11 // pred_check_branch
        %134 = sbr.rel (%p132) target = $region16
      $region15: #{jknet_forward.7} parent=11 // pred_region
        _
      $region16: #{jknet_forward.7} parent=11 // pred_fallthru
        _
      // Predicated region
      $region17: #{jknet_forward.7} parent=11 // pred_check
        %p135 = pneg %p91
      $region18: #{jknet_forward.7} parent=11 // pred_check_branch
        %137 = sbr.rel (%p135) target = $region20
      $region19: #{jknet_forward.7} parent=11 // pred_region
        _
      $region20: #{jknet_forward.7} parent=11 // pred_fallthru
        _
    $region12: #{jknet_forward.7} parent=5 // pred_fallthru
      _
    %p138 = scmp.lt.s32.totalorder %s9, 2
    // Predicated region
    $region21: #{jknet_forward.7} parent=5 // pred_check
      %p139 = pneg %p138
    $region22: #{jknet_forward.7} parent=5 // pred_check_branch
      %141 = sbr.rel (%p139) target = $region24
    $region23: #{jknet_forward.7} parent=5 // pred_region
      // Predicated region
      $region25: #{jknet_forward.7} parent=23 // pred_check
        %p142 = pneg %p43
      $region26: #{jknet_forward.7} parent=23 // pred_check_branch
        %144 = sbr.rel (%p142) target = $region28
      $region27: #{jknet_forward.7} parent=23 // pred_region
        %s145 = smul.u32 16, %s16
        %s146 = smul.u32 2, %s17
        %p147 = scmp.lt.s32.totalorder %s145, 31
        %s148 = scalar_select %p147, %s145, 31
        %p149 = scmp.lt.s32.totalorder %s146, 1
        %s150 = scalar_select %p149, %s146, 1
        %s151 = smul.addr %s148, 2
        %s152 = sadd.s32 %s150, %s151
        %s153 = smul.addr %s152, 8
        %s154 = scalar_lea.vmem %s0, %s153
        %s155 = smul.u32 16, %s16
        %s156 = smul.u32 2, %s17
      $region28: #{jknet_forward.7} parent=23 // pred_fallthru
        _
    $region24: #{jknet_forward.7} parent=5 // pred_fallthru
      _
    %p157 = scmp.le.s32.totalorder 1, %s9
    %p158 = scmp.lt.s32.totalorder %s9, 3
    %p159 = pnand %p157, %p158
    %p160 = pneg %p159
    // Predicated region
    $region29: #{jknet_forward.7} parent=5 // pred_check
      _
    $region30: #{jknet_forward.7} parent=5 // pred_check_branch
      %162 = sbr.rel (%p159) target = $region32
    $region31: #{jknet_forward.7} parent=5 // pred_region
      %s163 = ssub.s32 %s9, 1
      %s164 = smul.u32 16, %s18
      %s165 = smul.u32 2, %s19
      %p166 = scmp.lt.s32.totalorder %s164, 31
      %s167 = scalar_select %p166, %s164, 31
      %p168 = scmp.lt.s32.totalorder %s165, 1
      %s169 = scalar_select %p168, %s165, 1
      %s170 = smul.addr %s167, 2
      %s171 = sadd.s32 %s169, %s170
      %s172 = smul.addr %s171, 8
      %s173 = scalar_lea.vmem %s0, %s172
      %p174 = pneg %p49
      %p175 = pneg %p46
      %p176 = pneg %p70
      %p177 = pneg %p67
      %p178 = pneg %p91
      %p179 = pneg %p88
      %p180 = pneg %p117
      %p181 = pneg %p114
      %s182 = smul.u32 16, %s18
      %p183 = scmp.lt.s32.totalorder %s182, 31
      %s184 = scalar_select %p183, %s182, 31
      %s185 = smul.addr %s184, 8
      %s186 = scalar_lea.vmem %s3, %s185
      %s187 = smul.u32 16, %s18
      %s188 = smul.u32 2, %s19
      %p189 = scmp.lt.s32.totalorder %s187, 31
      %s190 = scalar_select %p189, %s187, 31
      %p191 = scmp.lt.s32.totalorder %s188, 1
      %s192 = scalar_select %p191, %s188, 1
      %s193 = smul.addr %s190, 2
      %s194 = sadd.s32 %s192, %s193
      %s195 = smul.addr %s194, 8
      %s196 = scalar_lea.vmem %s0, %s195
      %s197 = smul.u32 16, %s18
      %s198 = smul.u32 2, %s19
      %s199 = smul.u32 16, %s18
      %p200 = scmp.lt.s32.totalorder %s199, 31
      %s201 = scalar_select %p200, %s199, 31
      %s202 = smul.addr %s201, 8
      %s203 = scalar_lea.vmem %s3, %s202
      %s204 = smul.u32 16, %s18
      %p205 = scmp.eq.s32.totalorder %s19, 0
      // Predicated region
      $region33: #{jknet_forward.7} parent=31 // pred_check
        %p206 = pneg %p205
      $region34: #{jknet_forward.7} parent=31 // pred_check_branch
        %208 = sbr.rel (%p206) target = $region36
      $region35: #{jknet_forward.7} parent=31 // pred_region
        %209 = vst [vmem:[#allocation2] sm:$0xff] 0.0
        %210 = vst [vmem:[#allocation2 + $0x8] sm:$0xff] 0.0
        %211 = vst [vmem:[#allocation2 + $0x10] sm:$0xff] 0.0
        %212 = vst [vmem:[#allocation2 + $0x18] sm:$0xff] 0.0
        %213 = vst [vmem:[#allocation2 + $0x20] sm:$0xff] 0.0
        %214 = vst [vmem:[#allocation2 + $0x28] sm:$0xff] 0.0
        %215 = vst [vmem:[#allocation2 + $0x30] sm:$0xff] 0.0
        %216 = vst [vmem:[#allocation2 + $0x38] sm:$0xff] 0.0
        %217 = vst [vmem:[#allocation2 + $0x40] sm:$0xff] 0.0
        %218 = vst [vmem:[#allocation2 + $0x48] sm:$0xff] 0.0
        %219 = vst [vmem:[#allocation2 + $0x50] sm:$0xff] 0.0
        %220 = vst [vmem:[#allocation2 + $0x58] sm:$0xff] 0.0
        %221 = vst [vmem:[#allocation2 + $0x60] sm:$0xff] 0.0
        %222 = vst [vmem:[#allocation2 + $0x68] sm:$0xff] 0.0
        %223 = vst [vmem:[#allocation2 + $0x70] sm:$0xff] 0.0
        %224 = vst [vmem:[#allocation2 + $0x78] sm:$0xff] 0.0
      $region36: #{jknet_forward.7} parent=31 // pred_fallthru
        _
      %s225 = smul.u32 %s19, 256
      %s226 = scalar_lea.vmem %s1, %s225
      %v227 = vld [vmem:[%s226] sm:$0xff]
      %v228 = vld [vmem:[%s226 + $0x8] sm:$0xff]
      %v229 = vld [vmem:[%s226 + $0x10] sm:$0xff]
      %v230 = vld [vmem:[%s226 + $0x18] sm:$0xff]
      %v231 = vld [vmem:[%s226 + $0x20] sm:$0xff]
      %v232 = vld [vmem:[%s226 + $0x28] sm:$0xff]
      %v233 = vld [vmem:[%s226 + $0x30] sm:$0xff]
      %v234 = vld [vmem:[%s226 + $0x38] sm:$0xff]
      %v235 = vld [vmem:[%s226 + $0x40] sm:$0xff]
      %v236 = vld [vmem:[%s226 + $0x48] sm:$0xff]
      %v237 = vld [vmem:[%s226 + $0x50] sm:$0xff]
      %v238 = vld [vmem:[%s226 + $0x58] sm:$0xff]
      %v239 = vld [vmem:[%s226 + $0x60] sm:$0xff]
      %v240 = vld [vmem:[%s226 + $0x68] sm:$0xff]
      %v241 = vld [vmem:[%s226 + $0x70] sm:$0xff]
      %v242 = vld [vmem:[%s226 + $0x78] sm:$0xff]
      %v243 = vld [vmem:[%s226 + $0x80] sm:$0xff]
      %v244 = vld [vmem:[%s226 + $0x88] sm:$0xff]
      %v245 = vld [vmem:[%s226 + $0x90] sm:$0xff]
      %v246 = vld [vmem:[%s226 + $0x98] sm:$0xff]
      %v247 = vld [vmem:[%s226 + $0xa0] sm:$0xff]
      %v248 = vld [vmem:[%s226 + $0xa8] sm:$0xff]
      %v249 = vld [vmem:[%s226 + $0xb0] sm:$0xff]
      %v250 = vld [vmem:[%s226 + $0xb8] sm:$0xff]
      %v251 = vld [vmem:[%s226 + $0xc0] sm:$0xff]
      %v252 = vld [vmem:[%s226 + $0xc8] sm:$0xff]
      %v253 = vld [vmem:[%s226 + $0xd0] sm:$0xff]
      %v254 = vld [vmem:[%s226 + $0xd8] sm:$0xff]
      %v255 = vld [vmem:[%s226 + $0xe0] sm:$0xff]
      %v256 = vld [vmem:[%s226 + $0xe8] sm:$0xff]
      %v257 = vld [vmem:[%s226 + $0xf0] sm:$0xff]
      %v258 = vld [vmem:[%s226 + $0xf8] sm:$0xff]
      %v259 = vld [vmem:[%s196] sm:$0xff]
      %v260 = vld [vmem:[%s196 + $0x8] sm:$0xff]
      %v261 = vld [vmem:[%s196 + $0x10] sm:$0xff]
      %v262 = vld [vmem:[%s196 + $0x18] sm:$0xff]
      %v263 = vld [vmem:[%s196 + $0x20] sm:$0xff]
      %v264 = vld [vmem:[%s196 + $0x28] sm:$0xff]
      %v265 = vld [vmem:[%s196 + $0x30] sm:$0xff]
      %v266 = vld [vmem:[%s196 + $0x38] sm:$0xff]
      %v267 = vld [vmem:[%s196 + $0x40] sm:$0xff]
      %v268 = vld [vmem:[%s196 + $0x48] sm:$0xff]
      %v269 = vld [vmem:[%s196 + $0x50] sm:$0xff]
      %v270 = vld [vmem:[%s196 + $0x58] sm:$0xff]
      %v271 = vld [vmem:[%s196 + $0x60] sm:$0xff]
      %v272 = vld [vmem:[%s196 + $0x68] sm:$0xff]
      %v273 = vld [vmem:[%s196 + $0x70] sm:$0xff]
      %v274 = vld [vmem:[%s196 + $0x78] sm:$0xff]
      %v275 = vld [vmem:[%s196 + $0x80] sm:$0xff]
      %v276 = vld [vmem:[%s196 + $0x88] sm:$0xff]
      %v277 = vld [vmem:[%s196 + $0x90] sm:$0xff]
      %v278 = vld [vmem:[%s196 + $0x98] sm:$0xff]
      %v279 = vld [vmem:[%s196 + $0xa0] sm:$0xff]
      %v280 = vld [vmem:[%s196 + $0xa8] sm:$0xff]
      %v281 = vld [vmem:[%s196 + $0xb0] sm:$0xff]
      %v282 = vld [vmem:[%s196 + $0xb8] sm:$0xff]
      %v283 = vld [vmem:[%s196 + $0xc0] sm:$0xff]
      %v284 = vld [vmem:[%s196 + $0xc8] sm:$0xff]
      %v285 = vld [vmem:[%s196 + $0xd0] sm:$0xff]
      %v286 = vld [vmem:[%s196 + $0xd8] sm:$0xff]
      %v287 = vld [vmem:[%s196 + $0xe0] sm:$0xff]
      %v288 = vld [vmem:[%s196 + $0xe8] sm:$0xff]
      %v289 = vld [vmem:[%s196 + $0xf0] sm:$0xff]
      %v290 = vld [vmem:[%s196 + $0xf8] sm:$0xff]
      %v291 = vld [vmem:[#allocation2] sm:$0xff]
      %v292 = vld [vmem:[#allocation2 + $0x8] sm:$0xff]
      %v293 = vld [vmem:[#allocation2 + $0x10] sm:$0xff]
      %v294 = vld [vmem:[#allocation2 + $0x18] sm:$0xff]
      %v295 = vld [vmem:[#allocation2 + $0x20] sm:$0xff]
      %v296 = vld [vmem:[#allocation2 + $0x28] sm:$0xff]
      %v297 = vld [vmem:[#allocation2 + $0x30] sm:$0xff]
      %v298 = vld [vmem:[#allocation2 + $0x38] sm:$0xff]
      %v299 = vld [vmem:[#allocation2 + $0x40] sm:$0xff]
      %v300 = vld [vmem:[#allocation2 + $0x48] sm:$0xff]
      %v301 = vld [vmem:[#allocation2 + $0x50] sm:$0xff]
      %v302 = vld [vmem:[#allocation2 + $0x58] sm:$0xff]
      %v303 = vld [vmem:[#allocation2 + $0x60] sm:$0xff]
      %v304 = vld [vmem:[#allocation2 + $0x68] sm:$0xff]
      %v305 = vld [vmem:[#allocation2 + $0x70] sm:$0xff]
      %v306 = vld [vmem:[#allocation2 + $0x78] sm:$0xff]
      %307 = vmatpush.msra.mxu0 %v242
      %308 = vmatpush.msra.mxu0 %v241
      %309 = vmatpush.msra.mxu0 %v240
      %310 = vmatpush.msra.mxu0 %v239
      %311 = vmatpush.msra.mxu0 %v238
      %312 = vmatpush.msra.mxu0 %v237
      %313 = vmatpush.msra.mxu0 %v236
      %314 = vmatpush.msra.mxu0 %v235
      %315 = vmatpush.msra.mxu0 %v234
      %316 = vmatpush.msra.mxu0 %v233
      %317 = vmatpush.msra.mxu0 %v232
      %318 = vmatpush.msra.mxu0 %v231
      %319 = vmatpush.msra.mxu0 %v230
      %320 = vmatpush.msra.mxu0 %v229
      %321 = vmatpush.msra.mxu0 %v228
      %322 = vmatpush.msra.mxu0 %v227
      %323 = vmatmul.f32.gmra.mxu0 %v259
      %v324 = vpop.f32.mrf.mxu0
      %v325 = vadd.f32 0.0, %v324
      %326 = vmatmul.f32.gmra.mxu0 %v261
      %v327 = vpop.f32.mrf.mxu0
      %v328 = vadd.f32 0.0, %v327
      %329 = vmatmul.f32.gmra.mxu0 %v263
      %v330 = vpop.f32.mrf.mxu0
      %v331 = vadd.f32 0.0, %v330
      %332 = vmatmul.f32.gmra.mxu0 %v265
      %v333 = vpop.f32.mrf.mxu0
      %v334 = vadd.f32 0.0, %v333
      %335 = vmatmul.f32.gmra.mxu0 %v267
      %v336 = vpop.f32.mrf.mxu0
      %v337 = vadd.f32 0.0, %v336
      %338 = vmatmul.f32.gmra.mxu0 %v269
      %v339 = vpop.f32.mrf.mxu0
      %v340 = vadd.f32 0.0, %v339
      %341 = vmatmul.f32.gmra.mxu0 %v271
      %v342 = vpop.f32.mrf.mxu0
      %v343 = vadd.f32 0.0, %v342
      %344 = vmatmul.f32.gmra.mxu0 %v273
      %v345 = vpop.f32.mrf.mxu0
      %v346 = vadd.f32 0.0, %v345
      %347 = vmatmul.f32.gmra.mxu0 %v275
      %v348 = vpop.f32.mrf.mxu0
      %v349 = vadd.f32 0.0, %v348
      %350 = vmatmul.f32.gmra.mxu0 %v277
      %v351 = vpop.f32.mrf.mxu0
      %v352 = vadd.f32 0.0, %v351
      %353 = vmatmul.f32.gmra.mxu0 %v279
      %v354 = vpop.f32.mrf.mxu0
      %v355 = vadd.f32 0.0, %v354
      %356 = vmatmul.f32.gmra.mxu0 %v281
      %v357 = vpop.f32.mrf.mxu0
      %v358 = vadd.f32 0.0, %v357
      %359 = vmatmul.f32.gmra.mxu0 %v283
      %v360 = vpop.f32.mrf.mxu0
      %v361 = vadd.f32 0.0, %v360
      %362 = vmatmul.f32.gmra.mxu0 %v285
      %v363 = vpop.f32.mrf.mxu0
      %v364 = vadd.f32 0.0, %v363
      %365 = vmatmul.f32.gmra.mxu0 %v287
      %v366 = vpop.f32.mrf.mxu0
      %v367 = vadd.f32 0.0, %v366
      %368 = vmatmul.f32.gmra.mxu0 %v289
      %v369 = vpop.f32.mrf.mxu0
      %v370 = vadd.f32 0.0, %v369
      %371 = vdwg.mxu0
      %372 = vmatpush.msra.mxu0 %v258
      %373 = vmatpush.msra.mxu0 %v257
      %374 = vmatpush.msra.mxu0 %v256
      %375 = vmatpush.msra.mxu0 %v255
      %376 = vmatpush.msra.mxu0 %v254
      %377 = vmatpush.msra.mxu0 %v253
      %378 = vmatpush.msra.mxu0 %v252
      %379 = vmatpush.msra.mxu0 %v251
      %380 = vmatpush.msra.mxu0 %v250
      %381 = vmatpush.msra.mxu0 %v249
      %382 = vmatpush.msra.mxu0 %v248
      %383 = vmatpush.msra.mxu0 %v247
      %384 = vmatpush.msra.mxu0 %v246
      %385 = vmatpush.msra.mxu0 %v245
      %386 = vmatpush.msra.mxu0 %v244
      %387 = vmatpush.msra.mxu0 %v243
      %388 = vmatmul.f32.gmra.mxu0 %v260
      %v389 = vpop.f32.mrf.mxu0
      %v390 = vadd.f32 %v325, %v389
      %391 = vmatmul.f32.gmra.mxu0 %v262
      %v392 = vpop.f32.mrf.mxu0
      %v393 = vadd.f32 %v328, %v392
      %394 = vmatmul.f32.gmra.mxu0 %v264
      %v395 = vpop.f32.mrf.mxu0
      %v396 = vadd.f32 %v331, %v395
      %397 = vmatmul.f32.gmra.mxu0 %v266
      %v398 = vpop.f32.mrf.mxu0
      %v399 = vadd.f32 %v334, %v398
      %400 = vmatmul.f32.gmra.mxu0 %v268
      %v401 = vpop.f32.mrf.mxu0
      %v402 = vadd.f32 %v337, %v401
      %403 = vmatmul.f32.gmra.mxu0 %v270
      %v404 = vpop.f32.mrf.mxu0
      %v405 = vadd.f32 %v340, %v404
      %406 = vmatmul.f32.gmra.mxu0 %v272
      %v407 = vpop.f32.mrf.mxu0
      %v408 = vadd.f32 %v343, %v407
      %409 = vmatmul.f32.gmra.mxu0 %v274
      %v410 = vpop.f32.mrf.mxu0
      %v411 = vadd.f32 %v346, %v410
      %412 = vmatmul.f32.gmra.mxu0 %v276
      %v413 = vpop.f32.mrf.mxu0
      %v414 = vadd.f32 %v349, %v413
      %415 = vmatmul.f32.gmra.mxu0 %v278
      %v416 = vpop.f32.mrf.mxu0
      %v417 = vadd.f32 %v352, %v416
      %418 = vmatmul.f32.gmra.mxu0 %v280
      %v419 = vpop.f32.mrf.mxu0
      %v420 = vadd.f32 %v355, %v419
      %421 = vmatmul.f32.gmra.mxu0 %v282
      %v422 = vpop.f32.mrf.mxu0
      %v423 = vadd.f32 %v358, %v422
      %424 = vmatmul.f32.gmra.mxu0 %v284
      %v425 = vpop.f32.mrf.mxu0
      %v426 = vadd.f32 %v361, %v425
      %427 = vmatmul.f32.gmra.mxu0 %v286
      %v428 = vpop.f32.mrf.mxu0
      %v429 = vadd.f32 %v364, %v428
      %430 = vmatmul.f32.gmra.mxu0 %v288
      %v431 = vpop.f32.mrf.mxu0
      %v432 = vadd.f32 %v367, %v431
      %433 = vmatmul.f32.gmra.mxu0 %v290
      %v434 = vpop.f32.mrf.mxu0
      %v435 = vadd.f32 %v370, %v434
      %436 = vdwg.mxu0
      %v437 = vadd.f32 %v291, %v390
      %v438 = vadd.f32 %v292, %v393
      %v439 = vadd.f32 %v293, %v396
      %v440 = vadd.f32 %v294, %v399
      %v441 = vadd.f32 %v295, %v402
      %v442 = vadd.f32 %v296, %v405
      %v443 = vadd.f32 %v297, %v408
      %v444 = vadd.f32 %v298, %v411
      %v445 = vadd.f32 %v299, %v414
      %v446 = vadd.f32 %v300, %v417
      %v447 = vadd.f32 %v301, %v420
      %v448 = vadd.f32 %v302, %v423
      %v449 = vadd.f32 %v303, %v426
      %v450 = vadd.f32 %v304, %v429
      %v451 = vadd.f32 %v305, %v432
      %v452 = vadd.f32 %v306, %v435
      %453 = vst [vmem:[#allocation2] sm:$0xff] %v437
      %454 = vst [vmem:[#allocation2 + $0x8] sm:$0xff] %v438
      %455 = vst [vmem:[#allocation2 + $0x10] sm:$0xff] %v439
      %456 = vst [vmem:[#allocation2 + $0x18] sm:$0xff] %v440
      %457 = vst [vmem:[#allocation2 + $0x20] sm:$0xff] %v441
      %458 = vst [vmem:[#allocation2 + $0x28] sm:$0xff] %v442
      %459 = vst [vmem:[#allocation2 + $0x30] sm:$0xff] %v443
      %460 = vst [vmem:[#allocation2 + $0x38] sm:$0xff] %v444
      %461 = vst [vmem:[#allocation2 + $0x40] sm:$0xff] %v445
      %462 = vst [vmem:[#allocation2 + $0x48] sm:$0xff] %v446
      %463 = vst [vmem:[#allocation2 + $0x50] sm:$0xff] %v447
      %464 = vst [vmem:[#allocation2 + $0x58] sm:$0xff] %v448
      %465 = vst [vmem:[#allocation2 + $0x60] sm:$0xff] %v449
      %466 = vst [vmem:[#allocation2 + $0x68] sm:$0xff] %v450
      %467 = vst [vmem:[#allocation2 + $0x70] sm:$0xff] %v451
      %468 = vst [vmem:[#allocation2 + $0x78] sm:$0xff] %v452
      // Predicated region
      $region37: #{jknet_forward.7} parent=31 // pred_check
        %p469 = pneg %p205
      $region38: #{jknet_forward.7} parent=31 // pred_check_branch
        %471 = sbr.rel (%p469) target = $region40
      $region39: #{jknet_forward.7} parent=31 // pred_region
        %v472 = vld [vmem:[#allocation2] sm:$0xff]
        %v473 = vld [vmem:[#allocation2 + $0x8] sm:$0xff]
        %v474 = vld [vmem:[#allocation2 + $0x10] sm:$0xff]
        %v475 = vld [vmem:[#allocation2 + $0x18] sm:$0xff]
        %v476 = vld [vmem:[#allocation2 + $0x20] sm:$0xff]
        %v477 = vld [vmem:[#allocation2 + $0x28] sm:$0xff]
        %v478 = vld [vmem:[#allocation2 + $0x30] sm:$0xff]
        %v479 = vld [vmem:[#allocation2 + $0x38] sm:$0xff]
        %v480 = vld [vmem:[#allocation2 + $0x40] sm:$0xff]
        %v481 = vld [vmem:[#allocation2 + $0x48] sm:$0xff]
        %v482 = vld [vmem:[#allocation2 + $0x50] sm:$0xff]
        %v483 = vld [vmem:[#allocation2 + $0x58] sm:$0xff]
        %v484 = vld [vmem:[#allocation2 + $0x60] sm:$0xff]
        %v485 = vld [vmem:[#allocation2 + $0x68] sm:$0xff]
        %v486 = vld [vmem:[#allocation2 + $0x70] sm:$0xff]
        %v487 = vld [vmem:[#allocation2 + $0x78] sm:$0xff]
        %v488 = vld [vmem:[%s2] sm:$0x1]
        %v490 = vperm.slane %v488, 0
        %v492 = vadd.f32 %v472, %v490
        %v493 = vadd.f32 %v473, %v490
        %v494 = vadd.f32 %v474, %v490
        %v495 = vadd.f32 %v475, %v490
        %v496 = vadd.f32 %v476, %v490
        %v497 = vadd.f32 %v477, %v490
        %v498 = vadd.f32 %v478, %v490
        %v499 = vadd.f32 %v479, %v490
        %v500 = vadd.f32 %v480, %v490
        %v501 = vadd.f32 %v481, %v490
        %v502 = vadd.f32 %v482, %v490
        %v503 = vadd.f32 %v483, %v490
        %v504 = vadd.f32 %v484, %v490
        %v505 = vadd.f32 %v485, %v490
        %v506 = vadd.f32 %v486, %v490
        %v507 = vadd.f32 %v487, %v490
        %508 = vst [vmem:[%s203] sm:$0xff] %v492
        %509 = vst [vmem:[%s203 + $0x8] sm:$0xff] %v493
        %510 = vst [vmem:[%s203 + $0x10] sm:$0xff] %v494
        %511 = vst [vmem:[%s203 + $0x18] sm:$0xff] %v495
        %512 = vst [vmem:[%s203 + $0x20] sm:$0xff] %v496
        %513 = vst [vmem:[%s203 + $0x28] sm:$0xff] %v497
        %514 = vst [vmem:[%s203 + $0x30] sm:$0xff] %v498
        %515 = vst [vmem:[%s203 + $0x38] sm:$0xff] %v499
        %516 = vst [vmem:[%s203 + $0x40] sm:$0xff] %v500
        %517 = vst [vmem:[%s203 + $0x48] sm:$0xff] %v501
        %518 = vst [vmem:[%s203 + $0x50] sm:$0xff] %v502
        %519 = vst [vmem:[%s203 + $0x58] sm:$0xff] %v503
        %520 = vst [vmem:[%s203 + $0x60] sm:$0xff] %v504
        %521 = vst [vmem:[%s203 + $0x68] sm:$0xff] %v505
        %522 = vst [vmem:[%s203 + $0x70] sm:$0xff] %v506
        %523 = vst [vmem:[%s203 + $0x78] sm:$0xff] %v507
      $region40: #{jknet_forward.7} parent=31 // pred_fallthru
        _
      %s524 = smul.u32 16, %s18
      %p525 = scmp.lt.s32.totalorder %s524, 31
      %s526 = scalar_select %p525, %s524, 31
      %s527 = smul.addr %s526, 8
      %s528 = scalar_lea.vmem %s3, %s527
      // Predicated region
      $region41: #{jknet_forward.7} parent=31 // pred_check
        %p529 = pneg %p114
      $region42: #{jknet_forward.7} parent=31 // pred_check_branch
        %531 = sbr.rel (%p529) target = $region44
      $region43: #{jknet_forward.7} parent=31 // pred_region
        %s532 = smul.u32 16, %s18
      $region44: #{jknet_forward.7} parent=31 // pred_fallthru
        _
    $region32: #{jknet_forward.7} parent=5 // pred_fallthru
      _
    %p533 = scmp.le.s32.totalorder 2, %s9
    // Predicated region
    $region45: #{jknet_forward.7} parent=5 // pred_check
      %p534 = pneg %p533
    $region46: #{jknet_forward.7} parent=5 // pred_check_branch
      %536 = sbr.rel (%p534) target = $region48
    $region47: #{jknet_forward.7} parent=5 // pred_region
      %s537 = ssub.s32 %s9, 2
      // Predicated region
      $region49: #{jknet_forward.7} parent=47 // pred_check
        %p538 = pneg %p120
      $region50: #{jknet_forward.7} parent=47 // pred_check_branch
        %540 = sbr.rel (%p538) target = $region52
      $region51: #{jknet_forward.7} parent=47 // pred_region
        %s541 = smul.u32 16, %s20
        %p542 = scmp.lt.s32.totalorder %s541, 31
        %s543 = scalar_select %p542, %s541, 31
        %s544 = smul.addr %s543, 8
        %s545 = scalar_lea.vmem %s3, %s544
      $region52: #{jknet_forward.7} parent=47 // pred_fallthru
        _
    $region48: #{jknet_forward.7} parent=5 // pred_fallthru
      _
  $region6: #{jknet_forward.7} parent=0 // loop_footer
    %s13 = sadd.s32 1, %s9
  $region7: #{jknet_forward.7} parent=0 // loop_footer_branch
    %8 = sbr.rel target = $region3
  $region8: #{jknet_forward.7} parent=0 // loop_exit
    _

</llo_original>
